<compile_context>
chip_gen: v7x
topology: tpu7x:2x2x1
jax: 0.10.0
libtpu: 0.0.40
codegen_flags: <defaults>
</compile_context>

<pallas_src>
import functools
import math

import jax
import jax.numpy as jnp
from jax import lax
from jax.experimental import pallas as pl
from jax.experimental.pallas import tpu as pltpu

_MASK_NEG = -9e15    # matches torch's -9000000000000000.0 "no edge" fill
_PAD_NEG = -1.8e16   # strictly lower: padded key columns never win the softmax


def _round_up(x, m):
    return ((x + m - 1) // m) * m


def _local_aggregator_kernel(hq_ref, hk_ref, adj_ref, w_ref, out_ref,
                             m_sc, l_sc, acc_sc, qw_sc, *, alpha):
    # hq_ref:  (TQ, Dp) f32 VMEM   query-row block (resident across the kv axis)
    # hk_ref:  (TK, Dp) f32 VMEM   key/value block (column D holds the 1.0 bias lane)
    # adj_ref: (TQ, TK) int8 VMEM  edge-type tile (-1 marks padded rows/columns)
    # w_ref:   (8, Dp)  f32 VMEM   rows 0..3 = a_0..a_3 weights, column D = biases
    # out_ref: (TQ, Dp) f32 VMEM   output block (written on the last kv step)
    # qw_sc:   (4*TQ, Dp) f32 VMEM per-row-block cache of the four hq*w_k slabs
    kv = pl.program_id(1)
    tq = hq_ref.shape[0]

    @pl.when(kv == 0)
    def _():
        m_sc[...] = jnp.full(m_sc.shape, -jnp.inf, dtype=jnp.float32)
        l_sc[...] = jnp.zeros(l_sc.shape, dtype=jnp.float32)
        acc_sc[...] = jnp.zeros(acc_sc.shape, dtype=jnp.float32)
        # Hoisted qw build: hq and w are resident across the kv axis, so the four
        # (TQ, Dp) elementwise products are computed once per row block.
        hq = hq_ref[...]
        w = w_ref[...]
        for k in range(4):
            qw_sc[k * tq:(k + 1) * tq, :] = hq * w[k:k + 1, :]

    hk = hk_ref[...]                       # (TK, Dp)
    adj = adj_ref[...].astype(jnp.int32)   # int8 HBM/VMEM stream, unpacked once

    # Fused score matmul (splash-attention NT dim numbers): one MXU push produces
    # all four pre-activation score planes; the bias is already folded in via the
    # 1.0 lane column of hk and the b_k column of w (hence of qw).
    s4 = lax.dot_general(qw_sc[...], hk, (((1,), (1,)), ((), ())),
                         preferred_element_type=jnp.float32,
                         precision=lax.Precision.HIGHEST)       # (4*TQ, TK)

    # Select the raw (pre-activation) score plane by edge type, activate ONCE,
    # then write the mask fills after the activation (matches PyTorch exactly:
    # mask constants are never passed through the LeakyReLU there either).
    raw = s4[0:tq, :]
    raw = jnp.where(adj == 2, s4[tq:2 * tq, :], raw)
    raw = jnp.where(adj == 3, s4[2 * tq:3 * tq, :], raw)
    raw = jnp.where(adj == 4, s4[3 * tq:4 * tq, :], raw)
    if 0.0 <= alpha <= 1.0:
        e = jnp.maximum(raw, alpha * raw)            # LeakyReLU, cheap VPU form
    else:
        e = jnp.where(raw >= 0, raw, alpha * raw)    # general fallback
    fill = jnp.where(adj < 0, jnp.float32(_PAD_NEG), jnp.float32(_MASK_NEG))
    logits = jnp.where(adj > 0, e, fill)

    # Online softmax over the key axis.
    m_prev = m_sc[...]
    m_new = jnp.maximum(m_prev, jnp.max(logits, axis=-1, keepdims=True))
    corr = jnp.exp(m_prev - m_new)
    p = jnp.exp(logits - m_new)
    l_sc[...] = corr * l_sc[...] + jnp.sum(p, axis=-1, keepdims=True)
    acc_sc[...] = corr * acc_sc[...] + jnp.dot(
        p, hk, preferred_element_type=jnp.float32, precision=lax.Precision.HIGHEST)
    m_sc[...] = m_new

    @pl.when(kv == pl.num_programs(1) - 1)
    def _():
        # Deferred normalization: N*D divides instead of N*N.
        out_ref[...] = (acc_sc[...] / l_sc[...]).astype(out_ref.dtype)


def local_aggregator(hidden, adj, w, b, *, alpha=0.2, block_q=512, block_k=512):
    """hidden: (N, D) f32, adj: (N, N) int (values 0..4), w: (4, D) f32, b: (4,) f32."""
    N, D = hidden.shape
    assert adj.shape == (N, N)

    # +1 lane reserved for the bias column (free when D % 128 != 0, e.g. D=32->128).
    Dp = _round_up(D + 1, 128)

    # Pad N UP to the preferred tile instead of shrinking tiles to divide N.
    n128 = _round_up(max(N, 1), 128)
    tq = min(_round_up(block_q, 128), n128)
    tk = min(_round_up(block_k, 128), n128)
    Np = _round_up(n128, math.lcm(tq, tk))
    # Note (v7x): for best megacore utilization pick block_q so Np // tq is an
    # even number >= 2; with small demo N there is only one row block anyway.

    # h padded to (Np, Dp); column D carries the bias 1.0 for real rows only.
    h_p = jnp.zeros((Np, Dp), jnp.float32)
    h_p = h_p.at[:N, :D].set(hidden.astype(jnp.float32))
    h_p = h_p.at[:N, D].set(1.0)

    # w rows 0..3 = a_0..a_3 weights, column D = biases (rows 4..7 pad for sublanes).
    w_p = jnp.zeros((8, Dp), jnp.float32)
    w_p = w_p.at[:4, :D].set(w.astype(jnp.float32))
    w_p = w_p.at[:4, D].set(b.astype(jnp.float32))

    # adj as int8 (values 0..4 fit); pad with -1 so padded rows/cols are inert.
    # TODO(synk): carry adj as int8 upstream to avoid this O(N^2) conversion pass.
    adj8 = adj if adj.dtype == jnp.int8 else adj.astype(jnp.int8)
    adj_p = adj8 if Np == N else jnp.pad(adj8, ((0, Np - N), (0, Np - N)),
                                         constant_values=-1)

    grid = (Np // tq, Np // tk)
    kernel = functools.partial(_local_aggregator_kernel, alpha=float(alpha))

    out_p = pl.pallas_call(
        kernel,
        out_shape=jax.ShapeDtypeStruct((Np, Dp), jnp.float32),
        grid_spec=pltpu.PrefetchScalarGridSpec(
            num_scalar_prefetch=0,
            grid=grid,
            in_specs=[
                pl.BlockSpec((tq, Dp), lambda i, k: (i, 0)),   # hq (row block)
                pl.BlockSpec((tk, Dp), lambda i, k: (k, 0)),   # hk (key block)
                pl.BlockSpec((tq, tk), lambda i, k: (i, k)),   # adj tile (int8)
                pl.BlockSpec((8, Dp), lambda i, k: (0, 0)),    # w (+bias) resident
            ],
            out_specs=pl.BlockSpec((tq, Dp), lambda i, k: (i, 0)),
            scratch_shapes=[
                pltpu.VMEM((tq, 1), jnp.float32),       # m (running max)
                pltpu.VMEM((tq, 1), jnp.float32),       # l (running denom)
                pltpu.VMEM((tq, Dp), jnp.float32),      # acc (unnormalized out)
                pltpu.VMEM((4 * tq, Dp), jnp.float32),  # qw cache (per row block)
            ],
        ),
        compiler_params=pltpu.CompilerParams(
            dimension_semantics=("parallel", "arbitrary"),
            vmem_limit_bytes=48 * 1024 * 1024),
    )(h_p, h_p, adj_p, w_p)

    return out_p[:N, :D].astype(hidden.dtype)


def local_aggregator_ref(hidden, adj, w, b, *, alpha=0.2):
    """Pure-JAX reference mirroring the PyTorch forward exactly."""
    h = hidden.astype(jnp.float32)
    a_input = h[:, None, :] * h[None, :, :]                  # (N, N, D)
    logits = jnp.full(adj.shape, -9e15, dtype=jnp.float32)
    for k in range(4):
        e = jnp.einsum("ijd,d->ij", a_input, w[k], precision="highest") + b[k]
        e = jnp.where(e >= 0, e, alpha * e)
        logits = jnp.where(adj == (k + 1), e, logits)
    attn = jax.nn.softmax(logits, axis=-1)
    return jnp.matmul(attn, h, precision="highest")


if __name__ == "__main__":
    N, D = 10, 32          # small shapes: N nodes, hidden dim D (exercise padding)
    leaky_alpha = 0.2

    key = jax.random.PRNGKey(0)
    k_h, k_adj, k_w, k_b = jax.random.split(key, 4)

    hidden = jax.random.normal(k_h, (N, D), dtype=jnp.float32)
    adj = jax.random.randint(k_adj, (N, N), 0, 5, dtype=jnp.int32)
    adj = adj.at[0, :].set(0)       # row with no edges -> uniform-attention path
    adj = adj.astype(jnp.int8)      # adjacency carried as int8 (kernel's native stream)

    # Deterministic parameter init (nn.Linear(dim, 1) x4): weights (4, D), biases (4,)
    bound = 1.0 / math.sqrt(D)
    w = jax.random.uniform(k_w, (4, D), jnp.float32, -bound, bound)
    b = jax.random.uniform(k_b, (4,), jnp.float32, -bound, bound)

    out = local_aggregator(hidden, adj, w, b, alpha=leaky_alpha)
    out = jax.block_until_ready(out)

    ref = local_aggregator_ref(hidden, adj, w, b, alpha=leaky_alpha)
    assert out.shape == (N, D)
    assert jnp.allclose(out, ref, atol=1e-5, rtol=1e-5), "mismatch vs reference"

    # TODO(synk): self.dropout is declared in __init__ but never applied in forward,
    # so it is intentionally omitted here (mask_item is likewise unused).
    print("KERNEL_OK")
</pallas_src>

<mosaic_0001>
module attributes {stable_mosaic.version = 11 : i64} {
  func.func @_local_aggregator_kernel(%arg0: i32, %arg1: i32, %arg2: memref<128x128xf32, #tpu.memory_space<vmem>>, %arg3: memref<128x128xf32, #tpu.memory_space<vmem>>, %arg4: memref<128x128xi8, #tpu.memory_space<vmem>>, %arg5: memref<8x128xf32, #tpu.memory_space<vmem>>, %arg6: memref<128x128xf32, #tpu.memory_space<vmem>>, %arg7: memref<128x1xf32, #tpu.memory_space<vmem>>, %arg8: memref<128x1xf32, #tpu.memory_space<vmem>>, %arg9: memref<128x128xf32, #tpu.memory_space<vmem>>, %arg10: memref<512x128xf32, #tpu.memory_space<vmem>>) attributes {dimension_semantics = [#tpu.dimension_semantics<parallel>, #tpu.dimension_semantics<arbitrary>], iteration_bounds = array<i64: 1, 1>, scalar_prefetch = 0 : i64, scratch_operands = 4 : i64, tpu.core_type = #tpu.core_type<tc>, window_params = [{transform_indices = @transform_0, window_bounds = array<i64: 128, 128>}, {transform_indices = @transform_1, window_bounds = array<i64: 128, 128>}, {transform_indices = @transform_2, window_bounds = array<i64: 128, 128>}, {pipeline_mode = #tpu.pipeline_mode<synchronous>, transform_indices = @transform_3, window_bounds = array<i64: 8, 128>}, {transform_indices = @transform_4, window_bounds = array<i64: 128, 128>}]} {
    %c0_i32 = arith.constant 0 : i32
    %0 = arith.cmpi eq, %arg1, %c0_i32 : i32
    %1 = arith.extui %0 : i1 to i32
    %c0_i32_0 = arith.constant 0 : i32
    %2 = arith.cmpi ne, %1, %c0_i32_0 : i32
    scf.if %2 {
      %cst_28 = arith.constant 0xFF800000 : f32
      %57 = vector.broadcast %cst_28 : f32 to vector<128x1xf32>
      %c0_29 = arith.constant 0 : index
      %c0_30 = arith.constant 0 : index
      %58 = vector.load %arg7[%c0_29, %c0_30] : memref<128x1xf32, #tpu.memory_space<vmem>>, vector<128x1xf32>
      tpu.vector_store %arg7[%c0_29, %c0_30], %57 {strides = array<i32>} : memref<128x1xf32, #tpu.memory_space<vmem>>, vector<128x1xf32>,
      %cst_31 = arith.constant 0.000000e+00 : f32
      %59 = vector.broadcast %cst_31 : f32 to vector<128x1xf32>
      %c0_32 = arith.constant 0 : index
      %c0_33 = arith.constant 0 : index
      %60 = vector.load %arg8[%c0_32, %c0_33] : memref<128x1xf32, #tpu.memory_space<vmem>>, vector<128x1xf32>
      tpu.vector_store %arg8[%c0_32, %c0_33], %59 {strides = array<i32>} : memref<128x1xf32, #tpu.memory_space<vmem>>, vector<128x1xf32>,
      %cst_34 = arith.constant 0.000000e+00 : f32
      %61 = vector.broadcast %cst_34 : f32 to vector<128x128xf32>
      %c0_35 = arith.constant 0 : index
      %c0_36 = arith.constant 0 : index
      %62 = vector.load %arg9[%c0_35, %c0_36] : memref<128x128xf32, #tpu.memory_space<vmem>>, vector<128x128xf32>
      tpu.vector_store %arg9[%c0_35, %c0_36], %61 {strides = array<i32>} : memref<128x128xf32, #tpu.memory_space<vmem>>, vector<128x128xf32>,
      %c0_37 = arith.constant 0 : index
      %c0_38 = arith.constant 0 : index
      %63 = vector.load %arg2[%c0_37, %c0_38] : memref<128x128xf32, #tpu.memory_space<vmem>>, vector<128x128xf32>
      %c0_39 = arith.constant 0 : index
      %c0_40 = arith.constant 0 : index
      %64 = vector.load %arg5[%c0_39, %c0_40] : memref<8x128xf32, #tpu.memory_space<vmem>>, vector<8x128xf32>
      %65 = vector.extract_strided_slice %64 {offsets = [0, 0], sizes = [1, 128], strides = [1, 1]} : vector<8x128xf32> to vector<1x128xf32>
      %66 = vector.broadcast %65 : vector<1x128xf32> to vector<128x128xf32>
      %67 = arith.mulf %63, %66 : vector<128x128xf32>
      %c0_41 = arith.constant 0 : index
      %c0_42 = arith.constant 0 : index
      %68 = vector.load %arg10[%c0_41, %c0_42] : memref<512x128xf32, #tpu.memory_space<vmem>>, vector<128x128xf32>
      tpu.vector_store %arg10[%c0_41, %c0_42], %67 {strides = array<i32>} : memref<512x128xf32, #tpu.memory_space<vmem>>, vector<128x128xf32>,
      %69 = vector.extract_strided_slice %64 {offsets = [1, 0], sizes = [1, 128], strides = [1, 1]} : vector<8x128xf32> to vector<1x128xf32>
      %70 = vector.broadcast %69 : vector<1x128xf32> to vector<128x128xf32>
      %71 = arith.mulf %63, %70 : vector<128x128xf32>
      %c128 = arith.constant 128 : index
      %c0_43 = arith.constant 0 : index
      %72 = vector.load %arg10[%c128, %c0_43] : memref<512x128xf32, #tpu.memory_space<vmem>>, vector<128x128xf32>
      tpu.vector_store %arg10[%c128, %c0_43], %71 {strides = array<i32>} : memref<512x128xf32, #tpu.memory_space<vmem>>, vector<128x128xf32>,
      %73 = vector.extract_strided_slice %64 {offsets = [2, 0], sizes = [1, 128], strides = [1, 1]} : vector<8x128xf32> to vector<1x128xf32>
      %74 = vector.broadcast %73 : vector<1x128xf32> to vector<128x128xf32>
      %75 = arith.mulf %63, %74 : vector<128x128xf32>
      %c256 = arith.constant 256 : index
      %c0_44 = arith.constant 0 : index
      %76 = vector.load %arg10[%c256, %c0_44] : memref<512x128xf32, #tpu.memory_space<vmem>>, vector<128x128xf32>
      tpu.vector_store %arg10[%c256, %c0_44], %75 {strides = array<i32>} : memref<512x128xf32, #tpu.memory_space<vmem>>, vector<128x128xf32>,
      %77 = vector.extract_strided_slice %64 {offsets = [3, 0], sizes = [1, 128], strides = [1, 1]} : vector<8x128xf32> to vector<1x128xf32>
      %78 = vector.broadcast %77 : vector<1x128xf32> to vector<128x128xf32>
      %79 = arith.mulf %63, %78 : vector<128x128xf32>
      %c384 = arith.constant 384 : index
      %c0_45 = arith.constant 0 : index
      %80 = vector.load %arg10[%c384, %c0_45] : memref<512x128xf32, #tpu.memory_space<vmem>>, vector<128x128xf32>
      tpu.vector_store %arg10[%c384, %c0_45], %79 {strides = array<i32>} : memref<512x128xf32, #tpu.memory_space<vmem>>, vector<128x128xf32>,
    } else {
    }
    %c0 = arith.constant 0 : index
    %c0_1 = arith.constant 0 : index
    %3 = vector.load %arg3[%c0, %c0_1] : memref<128x128xf32, #tpu.memory_space<vmem>>, vector<128x128xf32>
    %c0_2 = arith.constant 0 : index
    %c0_3 = arith.constant 0 : index
    %4 = vector.load %arg4[%c0_2, %c0_3] : memref<128x128xi8, #tpu.memory_space<vmem>>, vector<128x128xi8>
    %5 = arith.extsi %4 : vector<128x128xi8> to vector<128x128xi32>
    %c0_4 = arith.constant 0 : index
    %c0_5 = arith.constant 0 : index
    %6 = vector.load %arg10[%c0_4, %c0_5] : memref<512x128xf32, #tpu.memory_space<vmem>>, vector<512x128xf32>
    %cst = arith.constant dense<0.000000e+00> : vector<512x128xf32>
    %7 = tpu.matmul %6, %3, %cst {dimension_numbers = #tpu.dot_dimension_numbers<[1], [1], [0], [0], [0, 0, 1, 0], [], []>, precision = #tpu.contract_precision<fp32>} : vector<512x128xf32>, vector<128x128xf32>, vector<512x128xf32> -> vector<512x128xf32>
    %8 = vector.extract_strided_slice %7 {offsets = [0, 0], sizes = [128, 128], strides = [1, 1]} : vector<512x128xf32> to vector<128x128xf32>
    %c2_i32 = arith.constant 2 : i32
    %9 = vector.broadcast %c2_i32 : i32 to vector<128x128xi32>
    %10 = arith.cmpi eq, %5, %9 : vector<128x128xi32>
    %11 = vector.extract_strided_slice %7 {offsets = [128, 0], sizes = [128, 128], strides = [1, 1]} : vector<512x128xf32> to vector<128x128xf32>
    %12 = arith.select %10, %11, %8 : vector<128x128xi1>, vector<128x128xf32>
    %c3_i32 = arith.constant 3 : i32
    %13 = vector.broadcast %c3_i32 : i32 to vector<128x128xi32>
    %14 = arith.cmpi eq, %5, %13 : vector<128x128xi32>
    %15 = vector.extract_strided_slice %7 {offsets = [256, 0], sizes = [128, 128], strides = [1, 1]} : vector<512x128xf32> to vector<128x128xf32>
    %16 = arith.select %14, %15, %12 : vector<128x128xi1>, vector<128x128xf32>
    %c4_i32 = arith.constant 4 : i32
    %17 = vector.broadcast %c4_i32 : i32 to vector<128x128xi32>
    %18 = arith.cmpi eq, %5, %17 : vector<128x128xi32>
    %19 = vector.extract_strided_slice %7 {offsets = [384, 0], sizes = [128, 128], strides = [1, 1]} : vector<512x128xf32> to vector<128x128xf32>
    %20 = arith.select %18, %19, %16 : vector<128x128xi1>, vector<128x128xf32>
    %cst_6 = arith.constant 2.000000e-01 : f32
    %21 = vector.broadcast %cst_6 : f32 to vector<128x128xf32>
    %22 = arith.mulf %21, %20 : vector<128x128xf32>
    %23 = arith.maximumf %20, %22 : vector<128x128xf32>
    %c0_i32_7 = arith.constant 0 : i32
    %24 = vector.broadcast %c0_i32_7 : i32 to vector<128x128xi32>
    %25 = arith.cmpi slt, %5, %24 : vector<128x128xi32>
    %cst_8 = arith.constant -1.800000e+16 : f32
    %cst_9 = arith.constant -9.000000e+15 : f32
    %26 = vector.broadcast %cst_8 : f32 to vector<128x128xf32>
    %27 = vector.broadcast %cst_9 : f32 to vector<128x128xf32>
    %28 = arith.select %25, %26, %27 : vector<128x128xi1>, vector<128x128xf32>
    %c0_i32_10 = arith.constant 0 : i32
    %29 = vector.broadcast %c0_i32_10 : i32 to vector<128x128xi32>
    %30 = arith.cmpi sgt, %5, %29 : vector<128x128xi32>
    %31 = arith.select %30, %23, %28 : vector<128x128xi1>, vector<128x128xf32>
    %c0_11 = arith.constant 0 : index
    %c0_12 = arith.constant 0 : index
    %32 = vector.load %arg7[%c0_11, %c0_12] : memref<128x1xf32, #tpu.memory_space<vmem>>, vector<128x1xf32>
    %cst_13 = arith.constant dense<0xFF800000> : vector<128xf32>
    %33 = vector.multi_reduction <maximumf>, %31, %cst_13 [1] : vector<128x128xf32> to vector<128xf32>
    %34 = vector.shape_cast %33 : vector<128xf32> to vector<128x1xf32>
    %35 = arith.maximumf %32, %34 : vector<128x1xf32>
    %36 = arith.subf %32, %35 : vector<128x1xf32>
    %37 = math.exp %36 : vector<128x1xf32>
    %38 = vector.broadcast %35 : vector<128x1xf32> to vector<128x128xf32>
    %39 = arith.subf %31, %38 : vector<128x128xf32>
    %40 = math.exp %39 : vector<128x128xf32>
    %c0_14 = arith.constant 0 : index
    %c0_15 = arith.constant 0 : index
    %41 = vector.load %arg8[%c0_14, %c0_15] : memref<128x1xf32, #tpu.memory_space<vmem>>, vector<128x1xf32>
    %42 = arith.mulf %37, %41 : vector<128x1xf32>
    %cst_16 = arith.constant dense<0.000000e+00> : vector<128xf32>
    %43 = vector.multi_reduction <add>, %40, %cst_16 [1] : vector<128x128xf32> to vector<128xf32>
    %44 = vector.shape_cast %43 : vector<128xf32> to vector<128x1xf32>
    %45 = arith.addf %42, %44 : vector<128x1xf32>
    %c0_17 = arith.constant 0 : index
    %c0_18 = arith.constant 0 : index
    %46 = vector.load %arg8[%c0_17, %c0_18] : memref<128x1xf32, #tpu.memory_space<vmem>>, vector<128x1xf32>
    tpu.vector_store %arg8[%c0_17, %c0_18], %45 {strides = array<i32>} : memref<128x1xf32, #tpu.memory_space<vmem>>, vector<128x1xf32>,
    %c0_19 = arith.constant 0 : index
    %c0_20 = arith.constant 0 : index
    %47 = vector.load %arg9[%c0_19, %c0_20] : memref<128x128xf32, #tpu.memory_space<vmem>>, vector<128x128xf32>
    %48 = vector.broadcast %37 : vector<128x1xf32> to vector<128x128xf32>
    %49 = arith.mulf %48, %47 : vector<128x128xf32>
    %cst_21 = arith.constant dense<0.000000e+00> : vector<128x128xf32>
    %50 = tpu.matmul %40, %3, %cst_21 {dimension_numbers = #tpu.dot_dimension_numbers<[1], [0], [0], [1], [0, 0, 1, 1], [], []>, precision = #tpu.contract_precision<fp32>} : vector<128x128xf32>, vector<128x128xf32>, vector<128x128xf32> -> vector<128x128xf32>
    %51 = arith.addf %49, %50 : vector<128x128xf32>
    %c0_22 = arith.constant 0 : index
    %c0_23 = arith.constant 0 : index
    %52 = vector.load %arg9[%c0_22, %c0_23] : memref<128x128xf32, #tpu.memory_space<vmem>>, vector<128x128xf32>
    tpu.vector_store %arg9[%c0_22, %c0_23], %51 {strides = array<i32>} : memref<128x128xf32, #tpu.memory_space<vmem>>, vector<128x128xf32>,
    %c0_24 = arith.constant 0 : index
    %c0_25 = arith.constant 0 : index
    %53 = vector.load %arg7[%c0_24, %c0_25] : memref<128x1xf32, #tpu.memory_space<vmem>>, vector<128x1xf32>
    tpu.vector_store %arg7[%c0_24, %c0_25], %35 {strides = array<i32>} : memref<128x1xf32, #tpu.memory_space<vmem>>, vector<128x1xf32>,
    %c0_i32_26 = arith.constant 0 : i32
    %54 = arith.cmpi eq, %arg1, %c0_i32_26 : i32
    %55 = arith.extui %54 : i1 to i32
    %c0_i32_27 = arith.constant 0 : i32
    %56 = arith.cmpi ne, %55, %c0_i32_27 : i32
    scf.if %56 {
      %c0_28 = arith.constant 0 : index
      %c0_29 = arith.constant 0 : index
      %57 = vector.load %arg9[%c0_28, %c0_29] : memref<128x128xf32, #tpu.memory_space<vmem>>, vector<128x128xf32>
      %c0_30 = arith.constant 0 : index
      %c0_31 = arith.constant 0 : index
      %58 = vector.load %arg8[%c0_30, %c0_31] : memref<128x1xf32, #tpu.memory_space<vmem>>, vector<128x1xf32>
      %59 = vector.broadcast %58 : vector<128x1xf32> to vector<128x128xf32>
      %60 = arith.divf %57, %59 : vector<128x128xf32>
      %c0_32 = arith.constant 0 : index
      %c0_33 = arith.constant 0 : index
      %61 = vector.load %arg6[%c0_32, %c0_33] : memref<128x128xf32, #tpu.memory_space<vmem>>, vector<128x128xf32>
      tpu.vector_store %arg6[%c0_32, %c0_33], %60 {strides = array<i32>} : memref<128x128xf32, #tpu.memory_space<vmem>>, vector<128x128xf32>,
    } else {
    }
    return
  }
  func.func @transform_0(%arg0: i32, %arg1: i32) -> (i32, i32) {
    %c0_i32 = arith.constant 0 : i32
    %c0_i32_0 = arith.constant 0 : i32
    return %arg0, %c0_i32 : i32, i32
  }
  func.func @transform_1(%arg0: i32, %arg1: i32) -> (i32, i32) {
    %c0_i32 = arith.constant 0 : i32
    %c0_i32_0 = arith.constant 0 : i32
    return %arg1, %c0_i32 : i32, i32
  }
  func.func @transform_2(%arg0: i32, %arg1: i32) -> (i32, i32) {
    %c0_i32 = arith.constant 0 : i32
    return %arg0, %arg1 : i32, i32
  }
  func.func @transform_3(%arg0: i32, %arg1: i32) -> (i32, i32) {
    %c0_i32 = arith.constant 0 : i32
    %c0_i32_0 = arith.constant 0 : i32
    %c0_i32_1 = arith.constant 0 : i32
    return %c0_i32, %c0_i32_0 : i32, i32
  }
  func.func @transform_4(%arg0: i32, %arg1: i32) -> (i32, i32) {
    %c0_i32 = arith.constant 0 : i32
    %c0_i32_0 = arith.constant 0 : i32
    return %arg0, %c0_i32 : i32, i32
  }
}

</mosaic_0001>

<llo_original>
// kernel: tpu_custom_call.1
$region0: #{tpu_custom_call.1}
  #allocation0 [shape = 'u32[]', space=smem, size = 0x4, offset = 0x4, fixed_abs, tag = 'smem constant byte address 0x4 - core index']
  #allocation1 [shape = 'u32[144,128]{1,0:T(1,128)}', space=vmem, size = 0x12000, scoped, tag = 'internal scratch']
  #allocation2 [shape = 'f32[128,1]{1,0:T(8,128)}', space=vmem, size = 0x10000, scoped, tag = 'scratch operand']
  #allocation3 [shape = 'f32[128,1]{1,0:T(8,128)}', space=vmem, size = 0x10000, scoped, tag = 'scratch operand']
  #allocation4 [shape = 'f32[128,128]{1,0:T(8,128)}', space=vmem, size = 0x10000, scoped, tag = 'scratch operand']
  #allocation5 [shape = 'f32[512,128]{1,0:T(8,128)}', space=vmem, size = 0x40000, scoped, tag = 'scratch operand']
  %s0 = inlined_call_operand.hbm [shape: f32[128,128], index: 0, kind: input, shape index: {}]
  %s1 = inlined_call_operand.hbm [shape: f32[128,128], index: 1, kind: input, shape index: {}]
  %s2 = inlined_call_operand.hbm [shape: s8[128,128], index: 2, kind: input, shape index: {}]
  %s3 = inlined_call_operand.vmem [shape: f32[8,128], index: 3, kind: input, shape index: {}]
  %s4 = inlined_call_operand.hbm [shape: f32[128,128], index: 4, kind: output, shape index: {}]
  %s5 = sld [smem:[#allocation0]]
  $region46: #{tpu_custom_call.1} parent=0
    _
  %s7 = ssub.s32 1, %s5
  %s8 = scalar_select 0, %s7, %s5
  $region1: #{tpu_custom_call.1} parent=0
    #allocation6 [shape = 'u8[65536]{0}', space=vmem, size = 0x10000, scoped, tag = 'input window, operand 0, single buffered']
    #allocation7 [shape = 's32[1]{0}', space=sflag, size = 0x4, scoped, tag = 'scoped memory for tpu_custom_call.1']
    #allocation8 [shape = 's32[1]{0}', space=sflag, size = 0x4, scoped, tag = 'scoped memory for tpu_custom_call.1']
    #allocation9 [shape = 'u8[65536]{0}', space=vmem, size = 0x10000, scoped, tag = 'input window, operand 1, single buffered']
    #allocation10 [shape = 's32[1]{0}', space=sflag, size = 0x4, scoped, tag = 'scoped memory for tpu_custom_call.1']
    #allocation11 [shape = 'u8[16384]{0}', space=vmem, size = 0x4000, scoped, tag = 'input window, operand 2, single buffered']
    #allocation12 [shape = 'u8[65536]{0}', space=vmem, size = 0x10000, scoped, tag = 'output window, operand 0, single buffered']
    %9 = vsyncpa [#allocation7], 0
    %10 = vsyncpa [#allocation10], 0
    %11 = vsyncpa [#allocation8], 0
    // Predicated region
    $region2: #{tpu_custom_call.1} parent=1 // pred_check
      _
    $region3: #{tpu_custom_call.1} parent=1 // pred_check_branch
      %13 = sbr.rel (0) target = $region5
    $region4: #{tpu_custom_call.1} parent=1 // pred_region
      %s15 = ssub.s32 2048, 2048
      %16 = vsyncadd [#allocation7], %s15
      %s17 = sshll.u32 [#allocation6], 4
      %s18 = int_to_ptr.vmem [resolvable:$true] %s17
      %23 = dma.hbm_to_vmem [thread:$0]  %s0, 2048, %s18, [#allocation7], 128, 128, 8
    $region5: #{tpu_custom_call.1} parent=1 // pred_fallthru
      _
    // Predicated region
    $region6: #{tpu_custom_call.1} parent=1 // pred_check
      _
    $region7: #{tpu_custom_call.1} parent=1 // pred_check_branch
      %25 = sbr.rel (0) target = $region9
    $region8: #{tpu_custom_call.1} parent=1 // pred_region
      %s27 = ssub.s32 2048, 2048
      %28 = vsyncadd [#allocation10], %s27
      %s29 = sshll.u32 [#allocation9], 4
      %s30 = int_to_ptr.vmem [resolvable:$true] %s29
      %35 = dma.hbm_to_vmem [thread:$0]  %s1, 2048, %s30, [#allocation10], 128, 128, 8
    $region9: #{tpu_custom_call.1} parent=1 // pred_fallthru
      _
    // Predicated region
    $region10: #{tpu_custom_call.1} parent=1 // pred_check
      _
    $region11: #{tpu_custom_call.1} parent=1 // pred_check_branch
      %37 = sbr.rel (0) target = $region13
    $region12: #{tpu_custom_call.1} parent=1 // pred_region
      %s39 = ssub.s32 512, 512
      %40 = vsyncadd [#allocation10], %s39
      %s41 = sshll.u32 [#allocation11], 4
      %s42 = int_to_ptr.vmem [resolvable:$true] %s41
      %47 = dma.hbm_to_vmem [thread:$0]  %s2, 512, %s42, [#allocation10], 128, 128, 8
    $region13: #{tpu_custom_call.1} parent=1 // pred_fallthru
      _
    // Predicated region
    $region14: #{tpu_custom_call.1} parent=1 // pred_check
      _
    $region15: #{tpu_custom_call.1} parent=1 // pred_check_branch
      %49 = sbr.rel (0) target = $region17
    $region16: #{tpu_custom_call.1} parent=1 // pred_region
      _
    $region17: #{tpu_custom_call.1} parent=1 // pred_fallthru
      _
    // Predicated region
    $region18: #{tpu_custom_call.1} parent=1 // pred_check
      _
    $region19: #{tpu_custom_call.1} parent=1 // pred_check_branch
      %51 = sbr.rel (0) target = $region21
    $region20: #{tpu_custom_call.1} parent=1 // pred_region
      %52 = dma.done [#allocation7], 2048
    $region21: #{tpu_custom_call.1} parent=1 // pred_fallthru
      _
    // Predicated region
    $region22: #{tpu_custom_call.1} parent=1 // pred_check
      _
    $region23: #{tpu_custom_call.1} parent=1 // pred_check_branch
      %54 = sbr.rel (0) target = $region25
    $region24: #{tpu_custom_call.1} parent=1 // pred_region
      %55 = dma.done [#allocation10], 2048
    $region25: #{tpu_custom_call.1} parent=1 // pred_fallthru
      _
    // Predicated region
    $region26: #{tpu_custom_call.1} parent=1 // pred_check
      _
    $region27: #{tpu_custom_call.1} parent=1 // pred_check_branch
      %57 = sbr.rel (0) target = $region29
    $region28: #{tpu_custom_call.1} parent=1 // pred_region
      %58 = dma.done [#allocation10], 512
    $region29: #{tpu_custom_call.1} parent=1 // pred_fallthru
      _
    %p59 = scmp.eq.s32.totalorder 0, 0
    // Predicated region
    $region30: #{tpu_custom_call.1} parent=1 // pred_check
      %p60 = pneg %p59
    $region31: #{tpu_custom_call.1} parent=1 // pred_check_branch
      %62 = sbr.rel (%p60) target = $region33
    $region32: #{tpu_custom_call.1} parent=1 // pred_region
      %vm63 = vcmask 7168
      %64 = vst.msk [vmem:[#allocation2] sm:$0xff] %vm63, -inf
      %65 = vst.msk [vmem:[#allocation2 + $0x8] sm:$0xff] %vm63, -inf
      %66 = vst.msk [vmem:[#allocation2 + $0x10] sm:$0xff] %vm63, -inf
      %67 = vst.msk [vmem:[#allocation2 + $0x18] sm:$0xff] %vm63, -inf
      %68 = vst.msk [vmem:[#allocation2 + $0x20] sm:$0xff] %vm63, -inf
      %69 = vst.msk [vmem:[#allocation2 + $0x28] sm:$0xff] %vm63, -inf
      %70 = vst.msk [vmem:[#allocation2 + $0x30] sm:$0xff] %vm63, -inf
      %71 = vst.msk [vmem:[#allocation2 + $0x38] sm:$0xff] %vm63, -inf
      %72 = vst.msk [vmem:[#allocation2 + $0x40] sm:$0xff] %vm63, -inf
      %73 = vst.msk [vmem:[#allocation2 + $0x48] sm:$0xff] %vm63, -inf
      %74 = vst.msk [vmem:[#allocation2 + $0x50] sm:$0xff] %vm63, -inf
      %75 = vst.msk [vmem:[#allocation2 + $0x58] sm:$0xff] %vm63, -inf
      %76 = vst.msk [vmem:[#allocation2 + $0x60] sm:$0xff] %vm63, -inf
      %77 = vst.msk [vmem:[#allocation2 + $0x68] sm:$0xff] %vm63, -inf
      %78 = vst.msk [vmem:[#allocation2 + $0x70] sm:$0xff] %vm63, -inf
      %79 = vst.msk [vmem:[#allocation2 + $0x78] sm:$0xff] %vm63, -inf
      %80 = vst.msk [vmem:[#allocation3] sm:$0xff] %vm63, 0.0
      %81 = vst.msk [vmem:[#allocation3 + $0x8] sm:$0xff] %vm63, 0.0
      %82 = vst.msk [vmem:[#allocation3 + $0x10] sm:$0xff] %vm63, 0.0
      %83 = vst.msk [vmem:[#allocation3 + $0x18] sm:$0xff] %vm63, 0.0
      %84 = vst.msk [vmem:[#allocation3 + $0x20] sm:$0xff] %vm63, 0.0
      %85 = vst.msk [vmem:[#allocation3 + $0x28] sm:$0xff] %vm63, 0.0
      %86 = vst.msk [vmem:[#allocation3 + $0x30] sm:$0xff] %vm63, 0.0
      %87 = vst.msk [vmem:[#allocation3 + $0x38] sm:$0xff] %vm63, 0.0
      %88 = vst.msk [vmem:[#allocation3 + $0x40] sm:$0xff] %vm63, 0.0
      %89 = vst.msk [vmem:[#allocation3 + $0x48] sm:$0xff] %vm63, 0.0
      %90 = vst.msk [vmem:[#allocation3 + $0x50] sm:$0xff] %vm63, 0.0
      %91 = vst.msk [vmem:[#allocation3 + $0x58] sm:$0xff] %vm63, 0.0
      %92 = vst.msk [vmem:[#allocation3 + $0x60] sm:$0xff] %vm63, 0.0
      %93 = vst.msk [vmem:[#allocation3 + $0x68] sm:$0xff] %vm63, 0.0
      %94 = vst.msk [vmem:[#allocation3 + $0x70] sm:$0xff] %vm63, 0.0
      %95 = vst.msk [vmem:[#allocation3 + $0x78] sm:$0xff] %vm63, 0.0
      %96 = vst [vmem:[#allocation4] sm:$0xff] 0.0
      %97 = vst [vmem:[#allocation4 + $0x8] sm:$0xff] 0.0
      %98 = vst [vmem:[#allocation4 + $0x10] sm:$0xff] 0.0
      %99 = vst [vmem:[#allocation4 + $0x18] sm:$0xff] 0.0
      %100 = vst [vmem:[#allocation4 + $0x20] sm:$0xff] 0.0
      %101 = vst [vmem:[#allocation4 + $0x28] sm:$0xff] 0.0
      %102 = vst [vmem:[#allocation4 + $0x30] sm:$0xff] 0.0
      %103 = vst [vmem:[#allocation4 + $0x38] sm:$0xff] 0.0
      %104 = vst [vmem:[#allocation4 + $0x40] sm:$0xff] 0.0
      %105 = vst [vmem:[#allocation4 + $0x48] sm:$0xff] 0.0
      %106 = vst [vmem:[#allocation4 + $0x50] sm:$0xff] 0.0
      %107 = vst [vmem:[#allocation4 + $0x58] sm:$0xff] 0.0
      %108 = vst [vmem:[#allocation4 + $0x60] sm:$0xff] 0.0
      %109 = vst [vmem:[#allocation4 + $0x68] sm:$0xff] 0.0
      %110 = vst [vmem:[#allocation4 + $0x70] sm:$0xff] 0.0
      %111 = vst [vmem:[#allocation4 + $0x78] sm:$0xff] 0.0
      %v112 = vld [vmem:[#allocation6] sm:$0xff]
      %v113 = vld [vmem:[#allocation6 + $0x8] sm:$0xff]
      %v114 = vld [vmem:[#allocation6 + $0x10] sm:$0xff]
      %v115 = vld [vmem:[#allocation6 + $0x18] sm:$0xff]
      %v116 = vld [vmem:[#allocation6 + $0x20] sm:$0xff]
      %v117 = vld [vmem:[#allocation6 + $0x28] sm:$0xff]
      %v118 = vld [vmem:[#allocation6 + $0x30] sm:$0xff]
      %v119 = vld [vmem:[#allocation6 + $0x38] sm:$0xff]
      %v120 = vld [vmem:[#allocation6 + $0x40] sm:$0xff]
      %v121 = vld [vmem:[#allocation6 + $0x48] sm:$0xff]
      %v122 = vld [vmem:[#allocation6 + $0x50] sm:$0xff]
      %v123 = vld [vmem:[#allocation6 + $0x58] sm:$0xff]
      %v124 = vld [vmem:[#allocation6 + $0x60] sm:$0xff]
      %v125 = vld [vmem:[#allocation6 + $0x68] sm:$0xff]
      %v126 = vld [vmem:[#allocation6 + $0x70] sm:$0xff]
      %v127 = vld [vmem:[#allocation6 + $0x78] sm:$0xff]
      %v128 = vld [vmem:[%s3] sm:$0xff]
      %v129 = vlaneseq
      %v130 = vshrl.u32 %v129, 7
      %v131 = vsub.s32 0, %v130
      %v132 = vrot.slane %v128, %v131
      %v133 = vmul.f32 %v112, %v132
      %v134 = vmul.f32 %v113, %v132
      %v135 = vmul.f32 %v114, %v132
      %v136 = vmul.f32 %v115, %v132
      %v137 = vmul.f32 %v116, %v132
      %v138 = vmul.f32 %v117, %v132
      %v139 = vmul.f32 %v118, %v132
      %v140 = vmul.f32 %v119, %v132
      %v141 = vmul.f32 %v120, %v132
      %v142 = vmul.f32 %v121, %v132
      %v143 = vmul.f32 %v122, %v132
      %v144 = vmul.f32 %v123, %v132
      %v145 = vmul.f32 %v124, %v132
      %v146 = vmul.f32 %v125, %v132
      %v147 = vmul.f32 %v126, %v132
      %v148 = vmul.f32 %v127, %v132
      %149 = vst [vmem:[#allocation5] sm:$0xff] %v133
      %150 = vst [vmem:[#allocation5 + $0x8] sm:$0xff] %v134
      %151 = vst [vmem:[#allocation5 + $0x10] sm:$0xff] %v135
      %152 = vst [vmem:[#allocation5 + $0x18] sm:$0xff] %v136
      %153 = vst [vmem:[#allocation5 + $0x20] sm:$0xff] %v137
      %154 = vst [vmem:[#allocation5 + $0x28] sm:$0xff] %v138
      %155 = vst [vmem:[#allocation5 + $0x30] sm:$0xff] %v139
      %156 = vst [vmem:[#allocation5 + $0x38] sm:$0xff] %v140
      %157 = vst [vmem:[#allocation5 + $0x40] sm:$0xff] %v141
      %158 = vst [vmem:[#allocation5 + $0x48] sm:$0xff] %v142
      %159 = vst [vmem:[#allocation5 + $0x50] sm:$0xff] %v143
      %160 = vst [vmem:[#allocation5 + $0x58] sm:$0xff] %v144
      %161 = vst [vmem:[#allocation5 + $0x60] sm:$0xff] %v145
      %162 = vst [vmem:[#allocation5 + $0x68] sm:$0xff] %v146
      %163 = vst [vmem:[#allocation5 + $0x70] sm:$0xff] %v147
      %164 = vst [vmem:[#allocation5 + $0x78] sm:$0xff] %v148
      %v165 = vlaneseq
      %v166 = vshrl.u32 %v165, 7
      %v167 = vsub.s32 1, %v166
      %v168 = vrot.slane %v128, %v167
      %v169 = vmul.f32 %v112, %v168
      %v170 = vmul.f32 %v113, %v168
      %v171 = vmul.f32 %v114, %v168
      %v172 = vmul.f32 %v115, %v168
      %v173 = vmul.f32 %v116, %v168
      %v174 = vmul.f32 %v117, %v168
      %v175 = vmul.f32 %v118, %v168
      %v176 = vmul.f32 %v119, %v168
      %v177 = vmul.f32 %v120, %v168
      %v178 = vmul.f32 %v121, %v168
      %v179 = vmul.f32 %v122, %v168
      %v180 = vmul.f32 %v123, %v168
      %v181 = vmul.f32 %v124, %v168
      %v182 = vmul.f32 %v125, %v168
      %v183 = vmul.f32 %v126, %v168
      %v184 = vmul.f32 %v127, %v168
      %185 = vst [vmem:[#allocation5 + $0x80] sm:$0xff] %v169
      %186 = vst [vmem:[#allocation5 + $0x88] sm:$0xff] %v170
      %187 = vst [vmem:[#allocation5 + $0x90] sm:$0xff] %v171
      %188 = vst [vmem:[#allocation5 + $0x98] sm:$0xff] %v172
      %189 = vst [vmem:[#allocation5 + $0xa0] sm:$0xff] %v173
      %190 = vst [vmem:[#allocation5 + $0xa8] sm:$0xff] %v174
      %191 = vst [vmem:[#allocation5 + $0xb0] sm:$0xff] %v175
      %192 = vst [vmem:[#allocation5 + $0xb8] sm:$0xff] %v176
      %193 = vst [vmem:[#allocation5 + $0xc0] sm:$0xff] %v177
      %194 = vst [vmem:[#allocation5 + $0xc8] sm:$0xff] %v178
      %195 = vst [vmem:[#allocation5 + $0xd0] sm:$0xff] %v179
      %196 = vst [vmem:[#allocation5 + $0xd8] sm:$0xff] %v180
      %197 = vst [vmem:[#allocation5 + $0xe0] sm:$0xff] %v181
      %198 = vst [vmem:[#allocation5 + $0xe8] sm:$0xff] %v182
      %199 = vst [vmem:[#allocation5 + $0xf0] sm:$0xff] %v183
      %200 = vst [vmem:[#allocation5 + $0xf8] sm:$0xff] %v184
      %v201 = vlaneseq
      %v202 = vshrl.u32 %v201, 7
      %v203 = vsub.s32 2, %v202
      %v204 = vrot.slane %v128, %v203
      %v205 = vmul.f32 %v112, %v204
      %v206 = vmul.f32 %v113, %v204
      %v207 = vmul.f32 %v114, %v204
      %v208 = vmul.f32 %v115, %v204
      %v209 = vmul.f32 %v116, %v204
      %v210 = vmul.f32 %v117, %v204
      %v211 = vmul.f32 %v118, %v204
      %v212 = vmul.f32 %v119, %v204
      %v213 = vmul.f32 %v120, %v204
      %v214 = vmul.f32 %v121, %v204
      %v215 = vmul.f32 %v122, %v204
      %v216 = vmul.f32 %v123, %v204
      %v217 = vmul.f32 %v124, %v204
      %v218 = vmul.f32 %v125, %v204
      %v219 = vmul.f32 %v126, %v204
      %v220 = vmul.f32 %v127, %v204
      %221 = vst [vmem:[#allocation5 + $0x100] sm:$0xff] %v205
      %222 = vst [vmem:[#allocation5 + $0x108] sm:$0xff] %v206
      %223 = vst [vmem:[#allocation5 + $0x110] sm:$0xff] %v207
      %224 = vst [vmem:[#allocation5 + $0x118] sm:$0xff] %v208
      %225 = vst [vmem:[#allocation5 + $0x120] sm:$0xff] %v209
      %226 = vst [vmem:[#allocation5 + $0x128] sm:$0xff] %v210
      %227 = vst [vmem:[#allocation5 + $0x130] sm:$0xff] %v211
      %228 = vst [vmem:[#allocation5 + $0x138] sm:$0xff] %v212
      %229 = vst [vmem:[#allocation5 + $0x140] sm:$0xff] %v213
      %230 = vst [vmem:[#allocation5 + $0x148] sm:$0xff] %v214
      %231 = vst [vmem:[#allocation5 + $0x150] sm:$0xff] %v215
      %232 = vst [vmem:[#allocation5 + $0x158] sm:$0xff] %v216
      %233 = vst [vmem:[#allocation5 + $0x160] sm:$0xff] %v217
      %234 = vst [vmem:[#allocation5 + $0x168] sm:$0xff] %v218
      %235 = vst [vmem:[#allocation5 + $0x170] sm:$0xff] %v219
      %236 = vst [vmem:[#allocation5 + $0x178] sm:$0xff] %v220
      %v237 = vlaneseq
      %v238 = vshrl.u32 %v237, 7
      %v239 = vsub.s32 3, %v238
      %v240 = vrot.slane %v128, %v239
      %v241 = vmul.f32 %v112, %v240
      %v242 = vmul.f32 %v113, %v240
      %v243 = vmul.f32 %v114, %v240
      %v244 = vmul.f32 %v115, %v240
      %v245 = vmul.f32 %v116, %v240
      %v246 = vmul.f32 %v117, %v240
      %v247 = vmul.f32 %v118, %v240
      %v248 = vmul.f32 %v119, %v240
      %v249 = vmul.f32 %v120, %v240
      %v250 = vmul.f32 %v121, %v240
      %v251 = vmul.f32 %v122, %v240
      %v252 = vmul.f32 %v123, %v240
      %v253 = vmul.f32 %v124, %v240
      %v254 = vmul.f32 %v125, %v240
      %v255 = vmul.f32 %v126, %v240
      %v256 = vmul.f32 %v127, %v240
      %257 = vst [vmem:[#allocation5 + $0x180] sm:$0xff] %v241
      %258 = vst [vmem:[#allocation5 + $0x188] sm:$0xff] %v242
      %259 = vst [vmem:[#allocation5 + $0x190] sm:$0xff] %v243
      %260 = vst [vmem:[#allocation5 + $0x198] sm:$0xff] %v244
      %261 = vst [vmem:[#allocation5 + $0x1a0] sm:$0xff] %v245
      %262 = vst [vmem:[#allocation5 + $0x1a8] sm:$0xff] %v246
      %263 = vst [vmem:[#allocation5 + $0x1b0] sm:$0xff] %v247
      %264 = vst [vmem:[#allocation5 + $0x1b8] sm:$0xff] %v248
      %265 = vst [vmem:[#allocation5 + $0x1c0] sm:$0xff] %v249
      %266 = vst [vmem:[#allocation5 + $0x1c8] sm:$0xff] %v250
      %267 = vst [vmem:[#allocation5 + $0x1d0] sm:$0xff] %v251
      %268 = vst [vmem:[#allocation5 + $0x1d8] sm:$0xff] %v252
      %269 = vst [vmem:[#allocation5 + $0x1e0] sm:$0xff] %v253
      %270 = vst [vmem:[#allocation5 + $0x1e8] sm:$0xff] %v254
      %271 = vst [vmem:[#allocation5 + $0x1f0] sm:$0xff] %v255
      %272 = vst [vmem:[#allocation5 + $0x1f8] sm:$0xff] %v256
    $region33: #{tpu_custom_call.1} parent=1 // pred_fallthru
      _
    %v273 = vld [vmem:[#allocation9] sm:$0xff]
    %v274 = vld [vmem:[#allocation9 + $0x8] sm:$0xff]
    %v275 = vld [vmem:[#allocation9 + $0x10] sm:$0xff]
    %v276 = vld [vmem:[#allocation9 + $0x18] sm:$0xff]
    %v277 = vld [vmem:[#allocation9 + $0x20] sm:$0xff]
    %v278 = vld [vmem:[#allocation9 + $0x28] sm:$0xff]
    %v279 = vld [vmem:[#allocation9 + $0x30] sm:$0xff]
    %v280 = vld [vmem:[#allocation9 + $0x38] sm:$0xff]
    %v281 = vld [vmem:[#allocation9 + $0x40] sm:$0xff]
    %v282 = vld [vmem:[#allocation9 + $0x48] sm:$0xff]
    %v283 = vld [vmem:[#allocation9 + $0x50] sm:$0xff]
    %v284 = vld [vmem:[#allocation9 + $0x58] sm:$0xff]
    %v285 = vld [vmem:[#allocation9 + $0x60] sm:$0xff]
    %v286 = vld [vmem:[#allocation9 + $0x68] sm:$0xff]
    %v287 = vld [vmem:[#allocation9 + $0x70] sm:$0xff]
    %v288 = vld [vmem:[#allocation9 + $0x78] sm:$0xff]
    %v289 = vld [vmem:[#allocation11] sm:$0xff]
    %v290 = vld [vmem:[#allocation11 + $0x8] sm:$0xff]
    %v291 = vld [vmem:[#allocation11 + $0x10] sm:$0xff]
    %v292 = vld [vmem:[#allocation11 + $0x18] sm:$0xff]
    %v293 = vunpack.c.0.s8 %v289
    %v294 = vunpack.c.1.s8 %v289
    %v295 = vunpack.c.2.s8 %v289
    %v296 = vunpack.c.3.s8 %v289
    %v297 = vunpack.c.0.s8 %v290
    %v298 = vunpack.c.1.s8 %v290
    %v299 = vunpack.c.2.s8 %v290
    %v300 = vunpack.c.3.s8 %v290
    %v301 = vunpack.c.0.s8 %v291
    %v302 = vunpack.c.1.s8 %v291
    %v303 = vunpack.c.2.s8 %v291
    %v304 = vunpack.c.3.s8 %v291
    %v305 = vunpack.c.0.s8 %v292
    %v306 = vunpack.c.1.s8 %v292
    %v307 = vunpack.c.2.s8 %v292
    %v308 = vunpack.c.3.s8 %v292
    %v309 = vld [vmem:[#allocation5] sm:$0xff]
    %v310 = vld [vmem:[#allocation5 + $0x8] sm:$0xff]
    %v311 = vld [vmem:[#allocation5 + $0x10] sm:$0xff]
    %v312 = vld [vmem:[#allocation5 + $0x18] sm:$0xff]
    %v313 = vld [vmem:[#allocation5 + $0x20] sm:$0xff]
    %v314 = vld [vmem:[#allocation5 + $0x28] sm:$0xff]
    %v315 = vld [vmem:[#allocation5 + $0x30] sm:$0xff]
    %v316 = vld [vmem:[#allocation5 + $0x38] sm:$0xff]
    %v317 = vld [vmem:[#allocation5 + $0x40] sm:$0xff]
    %v318 = vld [vmem:[#allocation5 + $0x48] sm:$0xff]
    %v319 = vld [vmem:[#allocation5 + $0x50] sm:$0xff]
    %v320 = vld [vmem:[#allocation5 + $0x58] sm:$0xff]
    %v321 = vld [vmem:[#allocation5 + $0x60] sm:$0xff]
    %v322 = vld [vmem:[#allocation5 + $0x68] sm:$0xff]
    %v323 = vld [vmem:[#allocation5 + $0x70] sm:$0xff]
    %v324 = vld [vmem:[#allocation5 + $0x78] sm:$0xff]
    %v325 = vld [vmem:[#allocation5 + $0x80] sm:$0xff]
    %v326 = vld [vmem:[#allocation5 + $0x88] sm:$0xff]
    %v327 = vld [vmem:[#allocation5 + $0x90] sm:$0xff]
    %v328 = vld [vmem:[#allocation5 + $0x98] sm:$0xff]
    %v329 = vld [vmem:[#allocation5 + $0xa0] sm:$0xff]
    %v330 = vld [vmem:[#allocation5 + $0xa8] sm:$0xff]
    %v331 = vld [vmem:[#allocation5 + $0xb0] sm:$0xff]
    %v332 = vld [vmem:[#allocation5 + $0xb8] sm:$0xff]
    %v333 = vld [vmem:[#allocation5 + $0xc0] sm:$0xff]
    %v334 = vld [vmem:[#allocation5 + $0xc8] sm:$0xff]
    %v335 = vld [vmem:[#allocation5 + $0xd0] sm:$0xff]
    %v336 = vld [vmem:[#allocation5 + $0xd8] sm:$0xff]
    %v337 = vld [vmem:[#allocation5 + $0xe0] sm:$0xff]
    %v338 = vld [vmem:[#allocation5 + $0xe8] sm:$0xff]
    %v339 = vld [vmem:[#allocation5 + $0xf0] sm:$0xff]
    %v340 = vld [vmem:[#allocation5 + $0xf8] sm:$0xff]
    %v341 = vld [vmem:[#allocation5 + $0x100] sm:$0xff]
    %v342 = vld [vmem:[#allocation5 + $0x108] sm:$0xff]
    %v343 = vld [vmem:[#allocation5 + $0x110] sm:$0xff]
    %v344 = vld [vmem:[#allocation5 + $0x118] sm:$0xff]
    %v345 = vld [vmem:[#allocation5 + $0x120] sm:$0xff]
    %v346 = vld [vmem:[#allocation5 + $0x128] sm:$0xff]
    %v347 = vld [vmem:[#allocation5 + $0x130] sm:$0xff]
    %v348 = vld [vmem:[#allocation5 + $0x138] sm:$0xff]
    %v349 = vld [vmem:[#allocation5 + $0x140] sm:$0xff]
    %v350 = vld [vmem:[#allocation5 + $0x148] sm:$0xff]
    %v351 = vld [vmem:[#allocation5 + $0x150] sm:$0xff]
    %v352 = vld [vmem:[#allocation5 + $0x158] sm:$0xff]
    %v353 = vld [vmem:[#allocation5 + $0x160] sm:$0xff]
    %v354 = vld [vmem:[#allocation5 + $0x168] sm:$0xff]
    %v355 = vld [vmem:[#allocation5 + $0x170] sm:$0xff]
    %v356 = vld [vmem:[#allocation5 + $0x178] sm:$0xff]
    %v357 = vld [vmem:[#allocation5 + $0x180] sm:$0xff]
    %v358 = vld [vmem:[#allocation5 + $0x188] sm:$0xff]
    %v359 = vld [vmem:[#allocation5 + $0x190] sm:$0xff]
    %v360 = vld [vmem:[#allocation5 + $0x198] sm:$0xff]
    %v361 = vld [vmem:[#allocation5 + $0x1a0] sm:$0xff]
    %v362 = vld [vmem:[#allocation5 + $0x1a8] sm:$0xff]
    %v363 = vld [vmem:[#allocation5 + $0x1b0] sm:$0xff]
    %v364 = vld [vmem:[#allocation5 + $0x1b8] sm:$0xff]
    %v365 = vld [vmem:[#allocation5 + $0x1c0] sm:$0xff]
    %v366 = vld [vmem:[#allocation5 + $0x1c8] sm:$0xff]
    %v367 = vld [vmem:[#allocation5 + $0x1d0] sm:$0xff]
    %v368 = vld [vmem:[#allocation5 + $0x1d8] sm:$0xff]
    %v369 = vld [vmem:[#allocation5 + $0x1e0] sm:$0xff]
    %v370 = vld [vmem:[#allocation5 + $0x1e8] sm:$0xff]
    %v371 = vld [vmem:[#allocation5 + $0x1f0] sm:$0xff]
    %v372 = vld [vmem:[#allocation5 + $0x1f8] sm:$0xff]
    %373 = vmatprep.subr.mxu0 0.0
    %v374 = vand.u32 %v273, 4294901760
    %375 = vmatpush1.xpose.msra.mxu0 %v374
    %376 = vmatprep.subr.mxu0 0.0
    %v377 = vand.u32 %v274, 4294901760
    %378 = vmatpush1.xpose.msra.mxu0 %v377
    %379 = vmatprep.subr.mxu0 0.0
    %v380 = vand.u32 %v275, 4294901760
    %381 = vmatpush1.xpose.msra.mxu0 %v380
    %382 = vmatprep.subr.mxu0 0.0
    %v383 = vand.u32 %v276, 4294901760
    %384 = vmatpush1.xpose.msra.mxu0 %v383
    %385 = vmatprep.subr.mxu0 0.0
    %v386 = vand.u32 %v277, 4294901760
    %387 = vmatpush1.xpose.msra.mxu0 %v386
    %388 = vmatprep.subr.mxu0 0.0
    %v389 = vand.u32 %v278, 4294901760
    %390 = vmatpush1.xpose.msra.mxu0 %v389
    %391 = vmatprep.subr.mxu0 0.0
    %v392 = vand.u32 %v279, 4294901760
    %393 = vmatpush1.xpose.msra.mxu0 %v392
    %394 = vmatprep.subr.mxu0 0.0
    %v395 = vand.u32 %v280, 4294901760
    %396 = vmatpush1.xpose.msra.mxu0 %v395
    %397 = vmatprep.subr.mxu0 0.0
    %v398 = vand.u32 %v281, 4294901760
    %399 = vmatpush1.xpose.msra.mxu0 %v398
    %400 = vmatprep.subr.mxu0 0.0
    %v401 = vand.u32 %v282, 4294901760
    %402 = vmatpush1.xpose.msra.mxu0 %v401
    %403 = vmatprep.subr.mxu0 0.0
    %v404 = vand.u32 %v283, 4294901760
    %405 = vmatpush1.xpose.msra.mxu0 %v404
    %406 = vmatprep.subr.mxu0 0.0
    %v407 = vand.u32 %v284, 4294901760
    %408 = vmatpush1.xpose.msra.mxu0 %v407
    %409 = vmatprep.subr.mxu0 0.0
    %v410 = vand.u32 %v285, 4294901760
    %411 = vmatpush1.xpose.msra.mxu0 %v410
    %412 = vmatprep.subr.mxu0 0.0
    %v413 = vand.u32 %v286, 4294901760
    %414 = vmatpush1.xpose.msra.mxu0 %v413
    %415 = vmatprep.subr.mxu0 0.0
    %v416 = vand.u32 %v287, 4294901760
    %417 = vmatpush1.xpose.msra.mxu0 %v416
    %418 = vmatprep.subr.mxu0 0.0
    %v419 = vand.u32 %v288, 4294901760
    %420 = vmatpush1.xpose.msra.mxu0 %v419
    %421 = vmatprep.subr.mxu0 0.0
    %422 = vmatpush1.xpose.msra.mxu0 0.0
    %423 = vmatprep.subr.mxu0 0.0
    %424 = vmatpush1.xpose.msra.mxu0 0.0
    %425 = vmatprep.subr.mxu0 0.0
    %426 = vmatpush1.xpose.msra.mxu0 0.0
    %427 = vmatprep.subr.mxu0 0.0
    %428 = vmatpush1.xpose.msra.mxu0 0.0
    %429 = vmatprep.subr.mxu0 0.0
    %430 = vmatpush1.xpose.msra.mxu0 0.0
    %431 = vmatprep.subr.mxu0 0.0
    %432 = vmatpush1.xpose.msra.mxu0 0.0
    %433 = vmatprep.subr.mxu0 0.0
    %434 = vmatpush1.xpose.msra.mxu0 0.0
    %435 = vmatprep.subr.mxu0 0.0
    %436 = vmatpush1.xpose.msra.mxu0 0.0
    %437 = vmatprep.subr.mxu0 0.0
    %438 = vmatpush1.xpose.msra.mxu0 0.0
    %439 = vmatprep.subr.mxu0 0.0
    %440 = vmatpush1.xpose.msra.mxu0 0.0
    %441 = vmatprep.subr.mxu0 0.0
    %442 = vmatpush1.xpose.msra.mxu0 0.0
    %443 = vmatprep.subr.mxu0 0.0
    %444 = vmatpush1.xpose.msra.mxu0 0.0
    %445 = vmatprep.subr.mxu0 0.0
    %446 = vmatpush1.xpose.msra.mxu0 0.0
    %447 = vmatprep.subr.mxu0 0.0
    %448 = vmatpush1.xpose.msra.mxu0 0.0
    %449 = vmatprep.subr.mxu0 0.0
    %450 = vmatpush1.xpose.msra.mxu0 0.0
    %451 = vmatprep.subr.mxu0 0.0
    %452 = vmatpush1.xpose.msra.mxu0 0.0
    %453 = vmatprep.mubr.f32.mxu0 0.0
    %v454 = vand.u32 %v309, 4294901760
    %v455 = vsub.f32 %v309, %v454
    %v456 = vand.u32 %v455, 4294901760
    %v457 = vsub.f32 %v455, %v456
    %v458 = vand.u32 %v457, 4294901760
    %459 = vmatmul.mubr.f32.gmra.mrb[0].mxu0 %v458
    %v460 = vpop.f32.mrb[0].mxu0
    %v461 = vadd.f32 0.0, %v460
    %v462 = vpop.f32.mrb[0].mxu0
    %463 = vmatprep.mubr.f32.mxu0 0.0
    %v464 = vand.u32 %v310, 4294901760
    %v465 = vsub.f32 %v310, %v464
    %v466 = vand.u32 %v465, 4294901760
    %v467 = vsub.f32 %v465, %v466
    %v468 = vand.u32 %v467, 4294901760
    %469 = vmatmul.mubr.f32.gmra.mrb[0].mxu0 %v468
    %v470 = vpop.f32.mrb[0].mxu0
    %v471 = vadd.f32 0.0, %v470
    %v472 = vpop.f32.mrb[0].mxu0
    %473 = vmatprep.mubr.f32.mxu0 0.0
    %v474 = vand.u32 %v311, 4294901760
    %v475 = vsub.f32 %v311, %v474
    %v476 = vand.u32 %v475, 4294901760
    %v477 = vsub.f32 %v475, %v476
    %v478 = vand.u32 %v477, 4294901760
    %479 = vmatmul.mubr.f32.gmra.mrb[0].mxu0 %v478
    %v480 = vpop.f32.mrb[0].mxu0
    %v481 = vadd.f32 0.0, %v480
    %v482 = vpop.f32.mrb[0].mxu0
    %483 = vmatprep.mubr.f32.mxu0 0.0
    %v484 = vand.u32 %v312, 4294901760
    %v485 = vsub.f32 %v312, %v484
    %v486 = vand.u32 %v485, 4294901760
    %v487 = vsub.f32 %v485, %v486
    %v488 = vand.u32 %v487, 4294901760
    %489 = vmatmul.mubr.f32.gmra.mrb[0].mxu0 %v488
    %v490 = vpop.f32.mrb[0].mxu0
    %v491 = vadd.f32 0.0, %v490
    %v492 = vpop.f32.mrb[0].mxu0
    %493 = vmatprep.mubr.f32.mxu0 0.0
    %v494 = vand.u32 %v313, 4294901760
    %v495 = vsub.f32 %v313, %v494
    %v496 = vand.u32 %v495, 4294901760
    %v497 = vsub.f32 %v495, %v496
    %v498 = vand.u32 %v497, 4294901760
    %499 = vmatmul.mubr.f32.gmra.mrb[0].mxu0 %v498
    %v500 = vpop.f32.mrb[0].mxu0
    %v501 = vadd.f32 0.0, %v500
    %v502 = vpop.f32.mrb[0].mxu0
    %503 = vmatprep.mubr.f32.mxu0 0.0
    %v504 = vand.u32 %v314, 4294901760
    %v505 = vsub.f32 %v314, %v504
    %v506 = vand.u32 %v505, 4294901760
    %v507 = vsub.f32 %v505, %v506
    %v508 = vand.u32 %v507, 4294901760
    %509 = vmatmul.mubr.f32.gmra.mrb[0].mxu0 %v508
    %v510 = vpop.f32.mrb[0].mxu0
    %v511 = vadd.f32 0.0, %v510
    %v512 = vpop.f32.mrb[0].mxu0
    %513 = vmatprep.mubr.f32.mxu0 0.0
    %v514 = vand.u32 %v315, 4294901760
    %v515 = vsub.f32 %v315, %v514
    %v516 = vand.u32 %v515, 4294901760
    %v517 = vsub.f32 %v515, %v516
    %v518 = vand.u32 %v517, 4294901760
    %519 = vmatmul.mubr.f32.gmra.mrb[0].mxu0 %v518
    %v520 = vpop.f32.mrb[0].mxu0
    %v521 = vadd.f32 0.0, %v520
    %v522 = vpop.f32.mrb[0].mxu0
    %523 = vmatprep.mubr.f32.mxu0 0.0
    %v524 = vand.u32 %v316, 4294901760
    %v525 = vsub.f32 %v316, %v524
    %v526 = vand.u32 %v525, 4294901760
    %v527 = vsub.f32 %v525, %v526
    %v528 = vand.u32 %v527, 4294901760
    %529 = vmatmul.mubr.f32.gmra.mrb[0].mxu0 %v528
    %v530 = vpop.f32.mrb[0].mxu0
    %v531 = vadd.f32 0.0, %v530
    %v532 = vpop.f32.mrb[0].mxu0
    %533 = vmatprep.mubr.f32.mxu0 0.0
    %v534 = vand.u32 %v317, 4294901760
    %v535 = vsub.f32 %v317, %v534
    %v536 = vand.u32 %v535, 4294901760
    %v537 = vsub.f32 %v535, %v536
    %v538 = vand.u32 %v537, 4294901760
    %539 = vmatmul.mubr.f32.gmra.mrb[0].mxu0 %v538
    %v540 = vpop.f32.mrb[0].mxu0
    %v541 = vadd.f32 0.0, %v540
    %v542 = vpop.f32.mrb[0].mxu0
    %543 = vmatprep.mubr.f32.mxu0 0.0
    %v544 = vand.u32 %v318, 4294901760
    %v545 = vsub.f32 %v318, %v544
    %v546 = vand.u32 %v545, 4294901760
    %v547 = vsub.f32 %v545, %v546
    %v548 = vand.u32 %v547, 4294901760
    %549 = vmatmul.mubr.f32.gmra.mrb[0].mxu0 %v548
    %v550 = vpop.f32.mrb[0].mxu0
    %v551 = vadd.f32 0.0, %v550
    %v552 = vpop.f32.mrb[0].mxu0
    %553 = vmatprep.mubr.f32.mxu0 0.0
    %v554 = vand.u32 %v319, 4294901760
    %v555 = vsub.f32 %v319, %v554
    %v556 = vand.u32 %v555, 4294901760
    %v557 = vsub.f32 %v555, %v556
    %v558 = vand.u32 %v557, 4294901760
    %559 = vmatmul.mubr.f32.gmra.mrb[0].mxu0 %v558
    %v560 = vpop.f32.mrb[0].mxu0
    %v561 = vadd.f32 0.0, %v560
    %v562 = vpop.f32.mrb[0].mxu0
    %563 = vmatprep.mubr.f32.mxu0 0.0
    %v564 = vand.u32 %v320, 4294901760
    %v565 = vsub.f32 %v320, %v564
    %v566 = vand.u32 %v565, 4294901760
    %v567 = vsub.f32 %v565, %v566
    %v568 = vand.u32 %v567, 4294901760
    %569 = vmatmul.mubr.f32.gmra.mrb[0].mxu0 %v568
    %v570 = vpop.f32.mrb[0].mxu0
    %v571 = vadd.f32 0.0, %v570
    %v572 = vpop.f32.mrb[0].mxu0
    %573 = vmatprep.mubr.f32.mxu0 0.0
    %v574 = vand.u32 %v321, 4294901760
    %v575 = vsub.f32 %v321, %v574
    %v576 = vand.u32 %v575, 4294901760
    %v577 = vsub.f32 %v575, %v576
    %v578 = vand.u32 %v577, 4294901760
    %579 = vmatmul.mubr.f32.gmra.mrb[0].mxu0 %v578
    %v580 = vpop.f32.mrb[0].mxu0
    %v581 = vadd.f32 0.0, %v580
    %v582 = vpop.f32.mrb[0].mxu0
    %583 = vmatprep.mubr.f32.mxu0 0.0
    %v584 = vand.u32 %v322, 4294901760
    %v585 = vsub.f32 %v322, %v584
    %v586 = vand.u32 %v585, 4294901760
    %v587 = vsub.f32 %v585, %v586
    %v588 = vand.u32 %v587, 4294901760
    %589 = vmatmul.mubr.f32.gmra.mrb[0].mxu0 %v588
    %v590 = vpop.f32.mrb[0].mxu0
    %v591 = vadd.f32 0.0, %v590
    %v592 = vpop.f32.mrb[0].mxu0
    %593 = vmatprep.mubr.f32.mxu0 0.0
    %v594 = vand.u32 %v323, 4294901760
    %v595 = vsub.f32 %v323, %v594
    %v596 = vand.u32 %v595, 4294901760
    %v597 = vsub.f32 %v595, %v596
    %v598 = vand.u32 %v597, 4294901760
    %599 = vmatmul.mubr.f32.gmra.mrb[0].mxu0 %v598
    %v600 = vpop.f32.mrb[0].mxu0
    %v601 = vadd.f32 0.0, %v600
    %v602 = vpop.f32.mrb[0].mxu0
    %603 = vmatprep.mubr.f32.mxu0 0.0
    %v604 = vand.u32 %v324, 4294901760
    %v605 = vsub.f32 %v324, %v604
    %v606 = vand.u32 %v605, 4294901760
    %v607 = vsub.f32 %v605, %v606
    %v608 = vand.u32 %v607, 4294901760
    %609 = vmatmul.mubr.f32.gmra.mrb[0].mxu0 %v608
    %v610 = vpop.f32.mrb[0].mxu0
    %v611 = vadd.f32 0.0, %v610
    %v612 = vpop.f32.mrb[0].mxu0
    %613 = vmatprep.mubr.f32.mxu0 0.0
    %v614 = vand.u32 %v325, 4294901760
    %v615 = vsub.f32 %v325, %v614
    %v616 = vand.u32 %v615, 4294901760
    %v617 = vsub.f32 %v615, %v616
    %v618 = vand.u32 %v617, 4294901760
    %619 = vmatmul.mubr.f32.gmra.mrb[0].mxu0 %v618
    %v620 = vpop.f32.mrb[0].mxu0
    %v621 = vadd.f32 0.0, %v620
    %v622 = vpop.f32.mrb[0].mxu0
    %623 = vmatprep.mubr.f32.mxu0 0.0
    %v624 = vand.u32 %v326, 4294901760
    %v625 = vsub.f32 %v326, %v624
    %v626 = vand.u32 %v625, 4294901760
    %v627 = vsub.f32 %v625, %v626
    %v628 = vand.u32 %v627, 4294901760
    %629 = vmatmul.mubr.f32.gmra.mrb[0].mxu0 %v628
    %v630 = vpop.f32.mrb[0].mxu0
    %v631 = vadd.f32 0.0, %v630
    %v632 = vpop.f32.mrb[0].mxu0
    %633 = vmatprep.mubr.f32.mxu0 0.0
    %v634 = vand.u32 %v327, 4294901760
    %v635 = vsub.f32 %v327, %v634
    %v636 = vand.u32 %v635, 4294901760
    %v637 = vsub.f32 %v635, %v636
    %v638 = vand.u32 %v637, 4294901760
    %639 = vmatmul.mubr.f32.gmra.mrb[0].mxu0 %v638
    %v640 = vpop.f32.mrb[0].mxu0
    %v641 = vadd.f32 0.0, %v640
    %v642 = vpop.f32.mrb[0].mxu0
    %643 = vmatprep.mubr.f32.mxu0 0.0
    %v644 = vand.u32 %v328, 4294901760
    %v645 = vsub.f32 %v328, %v644
    %v646 = vand.u32 %v645, 4294901760
    %v647 = vsub.f32 %v645, %v646
    %v648 = vand.u32 %v647, 4294901760
    %649 = vmatmul.mubr.f32.gmra.mrb[0].mxu0 %v648
    %v650 = vpop.f32.mrb[0].mxu0
    %v651 = vadd.f32 0.0, %v650
    %v652 = vpop.f32.mrb[0].mxu0
    %653 = vmatprep.mubr.f32.mxu0 0.0
    %v654 = vand.u32 %v329, 4294901760
    %v655 = vsub.f32 %v329, %v654
    %v656 = vand.u32 %v655, 4294901760
    %v657 = vsub.f32 %v655, %v656
    %v658 = vand.u32 %v657, 4294901760
    %659 = vmatmul.mubr.f32.gmra.mrb[0].mxu0 %v658
    %v660 = vpop.f32.mrb[0].mxu0
    %v661 = vadd.f32 0.0, %v660
    %v662 = vpop.f32.mrb[0].mxu0
    %663 = vmatprep.mubr.f32.mxu0 0.0
    %v664 = vand.u32 %v330, 4294901760
    %v665 = vsub.f32 %v330, %v664
    %v666 = vand.u32 %v665, 4294901760
    %v667 = vsub.f32 %v665, %v666
    %v668 = vand.u32 %v667, 4294901760
    %669 = vmatmul.mubr.f32.gmra.mrb[0].mxu0 %v668
    %v670 = vpop.f32.mrb[0].mxu0
    %v671 = vadd.f32 0.0, %v670
    %v672 = vpop.f32.mrb[0].mxu0
    %673 = vmatprep.mubr.f32.mxu0 0.0
    %v674 = vand.u32 %v331, 4294901760
    %v675 = vsub.f32 %v331, %v674
    %v676 = vand.u32 %v675, 4294901760
    %v677 = vsub.f32 %v675, %v676
    %v678 = vand.u32 %v677, 4294901760
    %679 = vmatmul.mubr.f32.gmra.mrb[0].mxu0 %v678
    %v680 = vpop.f32.mrb[0].mxu0
    %v681 = vadd.f32 0.0, %v680
    %v682 = vpop.f32.mrb[0].mxu0
    %683 = vmatprep.mubr.f32.mxu0 0.0
    %v684 = vand.u32 %v332, 4294901760
    %v685 = vsub.f32 %v332, %v684
    %v686 = vand.u32 %v685, 4294901760
    %v687 = vsub.f32 %v685, %v686
    %v688 = vand.u32 %v687, 4294901760
    %689 = vmatmul.mubr.f32.gmra.mrb[0].mxu0 %v688
    %v690 = vpop.f32.mrb[0].mxu0
    %v691 = vadd.f32 0.0, %v690
    %v692 = vpop.f32.mrb[0].mxu0
    %693 = vmatprep.mubr.f32.mxu0 0.0
    %v694 = vand.u32 %v333, 4294901760
    %v695 = vsub.f32 %v333, %v694
    %v696 = vand.u32 %v695, 4294901760
    %v697 = vsub.f32 %v695, %v696
    %v698 = vand.u32 %v697, 4294901760
    %699 = vmatmul.mubr.f32.gmra.mrb[0].mxu0 %v698
    %v700 = vpop.f32.mrb[0].mxu0
    %v701 = vadd.f32 0.0, %v700
    %v702 = vpop.f32.mrb[0].mxu0
    %703 = vmatprep.mubr.f32.mxu0 0.0
    %v704 = vand.u32 %v334, 4294901760
    %v705 = vsub.f32 %v334, %v704
    %v706 = vand.u32 %v705, 4294901760
    %v707 = vsub.f32 %v705, %v706
    %v708 = vand.u32 %v707, 4294901760
    %709 = vmatmul.mubr.f32.gmra.mrb[0].mxu0 %v708
    %v710 = vpop.f32.mrb[0].mxu0
    %v711 = vadd.f32 0.0, %v710
    %v712 = vpop.f32.mrb[0].mxu0
    %713 = vmatprep.mubr.f32.mxu0 0.0
    %v714 = vand.u32 %v335, 4294901760
    %v715 = vsub.f32 %v335, %v714
    %v716 = vand.u32 %v715, 4294901760
    %v717 = vsub.f32 %v715, %v716
    %v718 = vand.u32 %v717, 4294901760
    %719 = vmatmul.mubr.f32.gmra.mrb[0].mxu0 %v718
    %v720 = vpop.f32.mrb[0].mxu0
    %v721 = vadd.f32 0.0, %v720
    %v722 = vpop.f32.mrb[0].mxu0
    %723 = vmatprep.mubr.f32.mxu0 0.0
    %v724 = vand.u32 %v336, 4294901760
    %v725 = vsub.f32 %v336, %v724
    %v726 = vand.u32 %v725, 4294901760
    %v727 = vsub.f32 %v725, %v726
    %v728 = vand.u32 %v727, 4294901760
    %729 = vmatmul.mubr.f32.gmra.mrb[0].mxu0 %v728
    %v730 = vpop.f32.mrb[0].mxu0
    %v731 = vadd.f32 0.0, %v730
    %v732 = vpop.f32.mrb[0].mxu0
    %733 = vmatprep.mubr.f32.mxu0 0.0
    %v734 = vand.u32 %v337, 4294901760
    %v735 = vsub.f32 %v337, %v734
    %v736 = vand.u32 %v735, 4294901760
    %v737 = vsub.f32 %v735, %v736
    %v738 = vand.u32 %v737, 4294901760
    %739 = vmatmul.mubr.f32.gmra.mrb[0].mxu0 %v738
    %v740 = vpop.f32.mrb[0].mxu0
    %v741 = vadd.f32 0.0, %v740
    %v742 = vpop.f32.mrb[0].mxu0
    %743 = vmatprep.mubr.f32.mxu0 0.0
    %v744 = vand.u32 %v338, 4294901760
    %v745 = vsub.f32 %v338, %v744
    %v746 = vand.u32 %v745, 4294901760
    %v747 = vsub.f32 %v745, %v746
    %v748 = vand.u32 %v747, 4294901760
    %749 = vmatmul.mubr.f32.gmra.mrb[0].mxu0 %v748
    %v750 = vpop.f32.mrb[0].mxu0
    %v751 = vadd.f32 0.0, %v750
    %v752 = vpop.f32.mrb[0].mxu0
    %753 = vmatprep.mubr.f32.mxu0 0.0
    %v754 = vand.u32 %v339, 4294901760
    %v755 = vsub.f32 %v339, %v754
    %v756 = vand.u32 %v755, 4294901760
    %v757 = vsub.f32 %v755, %v756
    %v758 = vand.u32 %v757, 4294901760
    %759 = vmatmul.mubr.f32.gmra.mrb[0].mxu0 %v758
    %v760 = vpop.f32.mrb[0].mxu0
    %v761 = vadd.f32 0.0, %v760
    %v762 = vpop.f32.mrb[0].mxu0
    %763 = vmatprep.mubr.f32.mxu0 0.0
    %v764 = vand.u32 %v340, 4294901760
    %v765 = vsub.f32 %v340, %v764
    %v766 = vand.u32 %v765, 4294901760
    %v767 = vsub.f32 %v765, %v766
    %v768 = vand.u32 %v767, 4294901760
    %769 = vmatmul.mubr.f32.gmra.mrb[0].mxu0 %v768
    %v770 = vpop.f32.mrb[0].mxu0
    %v771 = vadd.f32 0.0, %v770
    %v772 = vpop.f32.mrb[0].mxu0
    %773 = vmatprep.mubr.f32.mxu0 0.0
    %v774 = vand.u32 %v341, 4294901760
    %v775 = vsub.f32 %v341, %v774
    %v776 = vand.u32 %v775, 4294901760
    %v777 = vsub.f32 %v775, %v776
    %v778 = vand.u32 %v777, 4294901760
    %779 = vmatmul.mubr.f32.gmra.mrb[0].mxu0 %v778
    %v780 = vpop.f32.mrb[0].mxu0
    %v781 = vadd.f32 0.0, %v780
    %v782 = vpop.f32.mrb[0].mxu0
    %783 = vmatprep.mubr.f32.mxu0 0.0
    %v784 = vand.u32 %v342, 4294901760
    %v785 = vsub.f32 %v342, %v784
    %v786 = vand.u32 %v785, 4294901760
    %v787 = vsub.f32 %v785, %v786
    %v788 = vand.u32 %v787, 4294901760
    %789 = vmatmul.mubr.f32.gmra.mrb[0].mxu0 %v788
    %v790 = vpop.f32.mrb[0].mxu0
    %v791 = vadd.f32 0.0, %v790
    %v792 = vpop.f32.mrb[0].mxu0
    %793 = vmatprep.mubr.f32.mxu0 0.0
    %v794 = vand.u32 %v343, 4294901760
    %v795 = vsub.f32 %v343, %v794
    %v796 = vand.u32 %v795, 4294901760
    %v797 = vsub.f32 %v795, %v796
    %v798 = vand.u32 %v797, 4294901760
    %799 = vmatmul.mubr.f32.gmra.mrb[0].mxu0 %v798
    %v800 = vpop.f32.mrb[0].mxu0
    %v801 = vadd.f32 0.0, %v800
    %v802 = vpop.f32.mrb[0].mxu0
    %803 = vmatprep.mubr.f32.mxu0 0.0
    %v804 = vand.u32 %v344, 4294901760
    %v805 = vsub.f32 %v344, %v804
    %v806 = vand.u32 %v805, 4294901760
    %v807 = vsub.f32 %v805, %v806
    %v808 = vand.u32 %v807, 4294901760
    %809 = vmatmul.mubr.f32.gmra.mrb[0].mxu0 %v808
    %v810 = vpop.f32.mrb[0].mxu0
    %v811 = vadd.f32 0.0, %v810
    %v812 = vpop.f32.mrb[0].mxu0
    %813 = vmatprep.mubr.f32.mxu0 0.0
    %v814 = vand.u32 %v345, 4294901760
    %v815 = vsub.f32 %v345, %v814
    %v816 = vand.u32 %v815, 4294901760
    %v817 = vsub.f32 %v815, %v816
    %v818 = vand.u32 %v817, 4294901760
    %819 = vmatmul.mubr.f32.gmra.mrb[0].mxu0 %v818
    %v820 = vpop.f32.mrb[0].mxu0
    %v821 = vadd.f32 0.0, %v820
    %v822 = vpop.f32.mrb[0].mxu0
    %823 = vmatprep.mubr.f32.mxu0 0.0
    %v824 = vand.u32 %v346, 4294901760
    %v825 = vsub.f32 %v346, %v824
    %v826 = vand.u32 %v825, 4294901760
    %v827 = vsub.f32 %v825, %v826
    %v828 = vand.u32 %v827, 4294901760
    %829 = vmatmul.mubr.f32.gmra.mrb[0].mxu0 %v828
    %v830 = vpop.f32.mrb[0].mxu0
    %v831 = vadd.f32 0.0, %v830
    %v832 = vpop.f32.mrb[0].mxu0
    %833 = vmatprep.mubr.f32.mxu0 0.0
    %v834 = vand.u32 %v347, 4294901760
    %v835 = vsub.f32 %v347, %v834
    %v836 = vand.u32 %v835, 4294901760
    %v837 = vsub.f32 %v835, %v836
    %v838 = vand.u32 %v837, 4294901760
    %839 = vmatmul.mubr.f32.gmra.mrb[0].mxu0 %v838
    %v840 = vpop.f32.mrb[0].mxu0
    %v841 = vadd.f32 0.0, %v840
    %v842 = vpop.f32.mrb[0].mxu0
    %843 = vmatprep.mubr.f32.mxu0 0.0
    %v844 = vand.u32 %v348, 4294901760
    %v845 = vsub.f32 %v348, %v844
    %v846 = vand.u32 %v845, 4294901760
    %v847 = vsub.f32 %v845, %v846
    %v848 = vand.u32 %v847, 4294901760
    %849 = vmatmul.mubr.f32.gmra.mrb[0].mxu0 %v848
    %v850 = vpop.f32.mrb[0].mxu0
    %v851 = vadd.f32 0.0, %v850
    %v852 = vpop.f32.mrb[0].mxu0
    %853 = vmatprep.mubr.f32.mxu0 0.0
    %v854 = vand.u32 %v349, 4294901760
    %v855 = vsub.f32 %v349, %v854
    %v856 = vand.u32 %v855, 4294901760
    %v857 = vsub.f32 %v855, %v856
    %v858 = vand.u32 %v857, 4294901760
    %859 = vmatmul.mubr.f32.gmra.mrb[0].mxu0 %v858
    %v860 = vpop.f32.mrb[0].mxu0
    %v861 = vadd.f32 0.0, %v860
    %v862 = vpop.f32.mrb[0].mxu0
    %863 = vmatprep.mubr.f32.mxu0 0.0
    %v864 = vand.u32 %v350, 4294901760
    %v865 = vsub.f32 %v350, %v864
    %v866 = vand.u32 %v865, 4294901760
    %v867 = vsub.f32 %v865, %v866
    %v868 = vand.u32 %v867, 4294901760
    %869 = vmatmul.mubr.f32.gmra.mrb[0].mxu0 %v868
    %v870 = vpop.f32.mrb[0].mxu0
    %v871 = vadd.f32 0.0, %v870
    %v872 = vpop.f32.mrb[0].mxu0
    %873 = vmatprep.mubr.f32.mxu0 0.0
    %v874 = vand.u32 %v351, 4294901760
    %v875 = vsub.f32 %v351, %v874
    %v876 = vand.u32 %v875, 4294901760
    %v877 = vsub.f32 %v875, %v876
    %v878 = vand.u32 %v877, 4294901760
    %879 = vmatmul.mubr.f32.gmra.mrb[0].mxu0 %v878
    %v880 = vpop.f32.mrb[0].mxu0
    %v881 = vadd.f32 0.0, %v880
    %v882 = vpop.f32.mrb[0].mxu0
    %883 = vmatprep.mubr.f32.mxu0 0.0
    %v884 = vand.u32 %v352, 4294901760
    %v885 = vsub.f32 %v352, %v884
    %v886 = vand.u32 %v885, 4294901760
    %v887 = vsub.f32 %v885, %v886
    %v888 = vand.u32 %v887, 4294901760
    %889 = vmatmul.mubr.f32.gmra.mrb[0].mxu0 %v888
    %v890 = vpop.f32.mrb[0].mxu0
    %v891 = vadd.f32 0.0, %v890
    %v892 = vpop.f32.mrb[0].mxu0
    %893 = vmatprep.mubr.f32.mxu0 0.0
    %v894 = vand.u32 %v353, 4294901760
    %v895 = vsub.f32 %v353, %v894
    %v896 = vand.u32 %v895, 4294901760
    %v897 = vsub.f32 %v895, %v896
    %v898 = vand.u32 %v897, 4294901760
    %899 = vmatmul.mubr.f32.gmra.mrb[0].mxu0 %v898
    %v900 = vpop.f32.mrb[0].mxu0
    %v901 = vadd.f32 0.0, %v900
    %v902 = vpop.f32.mrb[0].mxu0
    %903 = vmatprep.mubr.f32.mxu0 0.0
    %v904 = vand.u32 %v354, 4294901760
    %v905 = vsub.f32 %v354, %v904
    %v906 = vand.u32 %v905, 4294901760
    %v907 = vsub.f32 %v905, %v906
    %v908 = vand.u32 %v907, 4294901760
    %909 = vmatmul.mubr.f32.gmra.mrb[0].mxu0 %v908
    %v910 = vpop.f32.mrb[0].mxu0
    %v911 = vadd.f32 0.0, %v910
    %v912 = vpop.f32.mrb[0].mxu0
    %913 = vmatprep.mubr.f32.mxu0 0.0
    %v914 = vand.u32 %v355, 4294901760
    %v915 = vsub.f32 %v355, %v914
    %v916 = vand.u32 %v915, 4294901760
    %v917 = vsub.f32 %v915, %v916
    %v918 = vand.u32 %v917, 4294901760
    %919 = vmatmul.mubr.f32.gmra.mrb[0].mxu0 %v918
    %v920 = vpop.f32.mrb[0].mxu0
    %v921 = vadd.f32 0.0, %v920
    %v922 = vpop.f32.mrb[0].mxu0
    %923 = vmatprep.mubr.f32.mxu0 0.0
    %v924 = vand.u32 %v356, 4294901760
    %v925 = vsub.f32 %v356, %v924
    %v926 = vand.u32 %v925, 4294901760
    %v927 = vsub.f32 %v925, %v926
    %v928 = vand.u32 %v927, 4294901760
    %929 = vmatmul.mubr.f32.gmra.mrb[0].mxu0 %v928
    %v930 = vpop.f32.mrb[0].mxu0
    %v931 = vadd.f32 0.0, %v930
    %v932 = vpop.f32.mrb[0].mxu0
    %933 = vmatprep.mubr.f32.mxu0 0.0
    %v934 = vand.u32 %v357, 4294901760
    %v935 = vsub.f32 %v357, %v934
    %v936 = vand.u32 %v935, 4294901760
    %v937 = vsub.f32 %v935, %v936
    %v938 = vand.u32 %v937, 4294901760
    %939 = vmatmul.mubr.f32.gmra.mrb[0].mxu0 %v938
    %v940 = vpop.f32.mrb[0].mxu0
    %v941 = vadd.f32 0.0, %v940
    %v942 = vpop.f32.mrb[0].mxu0
    %943 = vmatprep.mubr.f32.mxu0 0.0
    %v944 = vand.u32 %v358, 4294901760
    %v945 = vsub.f32 %v358, %v944
    %v946 = vand.u32 %v945, 4294901760
    %v947 = vsub.f32 %v945, %v946
    %v948 = vand.u32 %v947, 4294901760
    %949 = vmatmul.mubr.f32.gmra.mrb[0].mxu0 %v948
    %v950 = vpop.f32.mrb[0].mxu0
    %v951 = vadd.f32 0.0, %v950
    %v952 = vpop.f32.mrb[0].mxu0
    %953 = vmatprep.mubr.f32.mxu0 0.0
    %v954 = vand.u32 %v359, 4294901760
    %v955 = vsub.f32 %v359, %v954
    %v956 = vand.u32 %v955, 4294901760
    %v957 = vsub.f32 %v955, %v956
    %v958 = vand.u32 %v957, 4294901760
    %959 = vmatmul.mubr.f32.gmra.mrb[0].mxu0 %v958
    %v960 = vpop.f32.mrb[0].mxu0
    %v961 = vadd.f32 0.0, %v960
    %v962 = vpop.f32.mrb[0].mxu0
    %963 = vmatprep.mubr.f32.mxu0 0.0
    %v964 = vand.u32 %v360, 4294901760
    %v965 = vsub.f32 %v360, %v964
    %v966 = vand.u32 %v965, 4294901760
    %v967 = vsub.f32 %v965, %v966
    %v968 = vand.u32 %v967, 4294901760
    %969 = vmatmul.mubr.f32.gmra.mrb[0].mxu0 %v968
    %v970 = vpop.f32.mrb[0].mxu0
    %v971 = vadd.f32 0.0, %v970
    %v972 = vpop.f32.mrb[0].mxu0
    %973 = vmatprep.mubr.f32.mxu0 0.0
    %v974 = vand.u32 %v361, 4294901760
    %v975 = vsub.f32 %v361, %v974
    %v976 = vand.u32 %v975, 4294901760
    %v977 = vsub.f32 %v975, %v976
    %v978 = vand.u32 %v977, 4294901760
    %979 = vmatmul.mubr.f32.gmra.mrb[0].mxu0 %v978
    %v980 = vpop.f32.mrb[0].mxu0
    %v981 = vadd.f32 0.0, %v980
    %v982 = vpop.f32.mrb[0].mxu0
    %983 = vmatprep.mubr.f32.mxu0 0.0
    %v984 = vand.u32 %v362, 4294901760
    %v985 = vsub.f32 %v362, %v984
    %v986 = vand.u32 %v985, 4294901760
    %v987 = vsub.f32 %v985, %v986
    %v988 = vand.u32 %v987, 4294901760
    %989 = vmatmul.mubr.f32.gmra.mrb[0].mxu0 %v988
    %v990 = vpop.f32.mrb[0].mxu0
    %v991 = vadd.f32 0.0, %v990
    %v992 = vpop.f32.mrb[0].mxu0
    %993 = vmatprep.mubr.f32.mxu0 0.0
    %v994 = vand.u32 %v363, 4294901760
    %v995 = vsub.f32 %v363, %v994
    %v996 = vand.u32 %v995, 4294901760
    %v997 = vsub.f32 %v995, %v996
    %v998 = vand.u32 %v997, 4294901760
    %999 = vmatmul.mubr.f32.gmra.mrb[0].mxu0 %v998
    %v1000 = vpop.f32.mrb[0].mxu0
    %v1001 = vadd.f32 0.0, %v1000
    %v1002 = vpop.f32.mrb[0].mxu0
    %1003 = vmatprep.mubr.f32.mxu0 0.0
    %v1004 = vand.u32 %v364, 4294901760
    %v1005 = vsub.f32 %v364, %v1004
    %v1006 = vand.u32 %v1005, 4294901760
    %v1007 = vsub.f32 %v1005, %v1006
    %v1008 = vand.u32 %v1007, 4294901760
    %1009 = vmatmul.mubr.f32.gmra.mrb[0].mxu0 %v1008
    %v1010 = vpop.f32.mrb[0].mxu0
    %v1011 = vadd.f32 0.0, %v1010
    %v1012 = vpop.f32.mrb[0].mxu0
    %1013 = vmatprep.mubr.f32.mxu0 0.0
    %v1014 = vand.u32 %v365, 4294901760
    %v1015 = vsub.f32 %v365, %v1014
    %v1016 = vand.u32 %v1015, 4294901760
    %v1017 = vsub.f32 %v1015, %v1016
    %v1018 = vand.u32 %v1017, 4294901760
    %1019 = vmatmul.mubr.f32.gmra.mrb[0].mxu0 %v1018
    %v1020 = vpop.f32.mrb[0].mxu0
    %v1021 = vadd.f32 0.0, %v1020
    %v1022 = vpop.f32.mrb[0].mxu0
    %1023 = vmatprep.mubr.f32.mxu0 0.0
    %v1024 = vand.u32 %v366, 4294901760
    %v1025 = vsub.f32 %v366, %v1024
    %v1026 = vand.u32 %v1025, 4294901760
    %v1027 = vsub.f32 %v1025, %v1026
    %v1028 = vand.u32 %v1027, 4294901760
    %1029 = vmatmul.mubr.f32.gmra.mrb[0].mxu0 %v1028
    %v1030 = vpop.f32.mrb[0].mxu0
    %v1031 = vadd.f32 0.0, %v1030
    %v1032 = vpop.f32.mrb[0].mxu0
    %1033 = vmatprep.mubr.f32.mxu0 0.0
    %v1034 = vand.u32 %v367, 4294901760
    %v1035 = vsub.f32 %v367, %v1034
    %v1036 = vand.u32 %v1035, 4294901760
    %v1037 = vsub.f32 %v1035, %v1036
    %v1038 = vand.u32 %v1037, 4294901760
    %1039 = vmatmul.mubr.f32.gmra.mrb[0].mxu0 %v1038
    %v1040 = vpop.f32.mrb[0].mxu0
    %v1041 = vadd.f32 0.0, %v1040
    %v1042 = vpop.f32.mrb[0].mxu0
    %1043 = vmatprep.mubr.f32.mxu0 0.0
    %v1044 = vand.u32 %v368, 4294901760
    %v1045 = vsub.f32 %v368, %v1044
    %v1046 = vand.u32 %v1045, 4294901760
    %v1047 = vsub.f32 %v1045, %v1046
    %v1048 = vand.u32 %v1047, 4294901760
    %1049 = vmatmul.mubr.f32.gmra.mrb[0].mxu0 %v1048
    %v1050 = vpop.f32.mrb[0].mxu0
    %v1051 = vadd.f32 0.0, %v1050
    %v1052 = vpop.f32.mrb[0].mxu0
    %1053 = vmatprep.mubr.f32.mxu0 0.0
    %v1054 = vand.u32 %v369, 4294901760
    %v1055 = vsub.f32 %v369, %v1054
    %v1056 = vand.u32 %v1055, 4294901760
    %v1057 = vsub.f32 %v1055, %v1056
    %v1058 = vand.u32 %v1057, 4294901760
    %1059 = vmatmul.mubr.f32.gmra.mrb[0].mxu0 %v1058
    %v1060 = vpop.f32.mrb[0].mxu0
    %v1061 = vadd.f32 0.0, %v1060
    %v1062 = vpop.f32.mrb[0].mxu0
    %1063 = vmatprep.mubr.f32.mxu0 0.0
    %v1064 = vand.u32 %v370, 4294901760
    %v1065 = vsub.f32 %v370, %v1064
    %v1066 = vand.u32 %v1065, 4294901760
    %v1067 = vsub.f32 %v1065, %v1066
    %v1068 = vand.u32 %v1067, 4294901760
    %1069 = vmatmul.mubr.f32.gmra.mrb[0].mxu0 %v1068
    %v1070 = vpop.f32.mrb[0].mxu0
    %v1071 = vadd.f32 0.0, %v1070
    %v1072 = vpop.f32.mrb[0].mxu0
    %1073 = vmatprep.mubr.f32.mxu0 0.0
    %v1074 = vand.u32 %v371, 4294901760
    %v1075 = vsub.f32 %v371, %v1074
    %v1076 = vand.u32 %v1075, 4294901760
    %v1077 = vsub.f32 %v1075, %v1076
    %v1078 = vand.u32 %v1077, 4294901760
    %1079 = vmatmul.mubr.f32.gmra.mrb[0].mxu0 %v1078
    %v1080 = vpop.f32.mrb[0].mxu0
    %v1081 = vadd.f32 0.0, %v1080
    %v1082 = vpop.f32.mrb[0].mxu0
    %1083 = vmatprep.mubr.f32.mxu0 0.0
    %v1084 = vand.u32 %v372, 4294901760
    %v1085 = vsub.f32 %v372, %v1084
    %v1086 = vand.u32 %v1085, 4294901760
    %v1087 = vsub.f32 %v1085, %v1086
    %v1088 = vand.u32 %v1087, 4294901760
    %1089 = vmatmul.mubr.f32.gmra.mrb[0].mxu0 %v1088
    %v1090 = vpop.f32.mrb[0].mxu0
    %v1091 = vadd.f32 0.0, %v1090
    %v1092 = vpop.f32.mrb[0].mxu0
    %1093 = vdwg.mxu0
    %1094 = vmatprep.subr.mxu0 0.0
    %v1095 = vand.u32 %v273, 4294901760
    %v1096 = vsub.f32 %v273, %v1095
    %v1097 = vand.u32 %v1096, 4294901760
    %v1098 = vsub.f32 %v1096, %v1097
    %v1099 = vand.u32 %v1098, 4294901760
    %1100 = vmatpush1.xpose.msra.mxu0 %v1099
    %1101 = vmatprep.subr.mxu0 0.0
    %v1102 = vand.u32 %v274, 4294901760
    %v1103 = vsub.f32 %v274, %v1102
    %v1104 = vand.u32 %v1103, 4294901760
    %v1105 = vsub.f32 %v1103, %v1104
    %v1106 = vand.u32 %v1105, 4294901760
    %1107 = vmatpush1.xpose.msra.mxu0 %v1106
    %1108 = vmatprep.subr.mxu0 0.0
    %v1109 = vand.u32 %v275, 4294901760
    %v1110 = vsub.f32 %v275, %v1109
    %v1111 = vand.u32 %v1110, 4294901760
    %v1112 = vsub.f32 %v1110, %v1111
    %v1113 = vand.u32 %v1112, 4294901760
    %1114 = vmatpush1.xpose.msra.mxu0 %v1113
    %1115 = vmatprep.subr.mxu0 0.0
    %v1116 = vand.u32 %v276, 4294901760
    %v1117 = vsub.f32 %v276, %v1116
    %v1118 = vand.u32 %v1117, 4294901760
    %v1119 = vsub.f32 %v1117, %v1118
    %v1120 = vand.u32 %v1119, 4294901760
    %1121 = vmatpush1.xpose.msra.mxu0 %v1120
    %1122 = vmatprep.subr.mxu0 0.0
    %v1123 = vand.u32 %v277, 4294901760
    %v1124 = vsub.f32 %v277, %v1123
    %v1125 = vand.u32 %v1124, 4294901760
    %v1126 = vsub.f32 %v1124, %v1125
    %v1127 = vand.u32 %v1126, 4294901760
    %1128 = vmatpush1.xpose.msra.mxu0 %v1127
    %1129 = vmatprep.subr.mxu0 0.0
    %v1130 = vand.u32 %v278, 4294901760
    %v1131 = vsub.f32 %v278, %v1130
    %v1132 = vand.u32 %v1131, 4294901760
    %v1133 = vsub.f32 %v1131, %v1132
    %v1134 = vand.u32 %v1133, 4294901760
    %1135 = vmatpush1.xpose.msra.mxu0 %v1134
    %1136 = vmatprep.subr.mxu0 0.0
    %v1137 = vand.u32 %v279, 4294901760
    %v1138 = vsub.f32 %v279, %v1137
    %v1139 = vand.u32 %v1138, 4294901760
    %v1140 = vsub.f32 %v1138, %v1139
    %v1141 = vand.u32 %v1140, 4294901760
    %1142 = vmatpush1.xpose.msra.mxu0 %v1141
    %1143 = vmatprep.subr.mxu0 0.0
    %v1144 = vand.u32 %v280, 4294901760
    %v1145 = vsub.f32 %v280, %v1144
    %v1146 = vand.u32 %v1145, 4294901760
    %v1147 = vsub.f32 %v1145, %v1146
    %v1148 = vand.u32 %v1147, 4294901760
    %1149 = vmatpush1.xpose.msra.mxu0 %v1148
    %1150 = vmatprep.subr.mxu0 0.0
    %v1151 = vand.u32 %v281, 4294901760
    %v1152 = vsub.f32 %v281, %v1151
    %v1153 = vand.u32 %v1152, 4294901760
    %v1154 = vsub.f32 %v1152, %v1153
    %v1155 = vand.u32 %v1154, 4294901760
    %1156 = vmatpush1.xpose.msra.mxu0 %v1155
    %1157 = vmatprep.subr.mxu0 0.0
    %v1158 = vand.u32 %v282, 4294901760
    %v1159 = vsub.f32 %v282, %v1158
    %v1160 = vand.u32 %v1159, 4294901760
    %v1161 = vsub.f32 %v1159, %v1160
    %v1162 = vand.u32 %v1161, 4294901760
    %1163 = vmatpush1.xpose.msra.mxu0 %v1162
    %1164 = vmatprep.subr.mxu0 0.0
    %v1165 = vand.u32 %v283, 4294901760
    %v1166 = vsub.f32 %v283, %v1165
    %v1167 = vand.u32 %v1166, 4294901760
    %v1168 = vsub.f32 %v1166, %v1167
    %v1169 = vand.u32 %v1168, 4294901760
    %1170 = vmatpush1.xpose.msra.mxu0 %v1169
    %1171 = vmatprep.subr.mxu0 0.0
    %v1172 = vand.u32 %v284, 4294901760
    %v1173 = vsub.f32 %v284, %v1172
    %v1174 = vand.u32 %v1173, 4294901760
    %v1175 = vsub.f32 %v1173, %v1174
    %v1176 = vand.u32 %v1175, 4294901760
    %1177 = vmatpush1.xpose.msra.mxu0 %v1176
    %1178 = vmatprep.subr.mxu0 0.0
    %v1179 = vand.u32 %v285, 4294901760
    %v1180 = vsub.f32 %v285, %v1179
    %v1181 = vand.u32 %v1180, 4294901760
    %v1182 = vsub.f32 %v1180, %v1181
    %v1183 = vand.u32 %v1182, 4294901760
    %1184 = vmatpush1.xpose.msra.mxu0 %v1183
    %1185 = vmatprep.subr.mxu0 0.0
    %v1186 = vand.u32 %v286, 4294901760
    %v1187 = vsub.f32 %v286, %v1186
    %v1188 = vand.u32 %v1187, 4294901760
    %v1189 = vsub.f32 %v1187, %v1188
    %v1190 = vand.u32 %v1189, 4294901760
    %1191 = vmatpush1.xpose.msra.mxu0 %v1190
    %1192 = vmatprep.subr.mxu0 0.0
    %v1193 = vand.u32 %v287, 4294901760
    %v1194 = vsub.f32 %v287, %v1193
    %v1195 = vand.u32 %v1194, 4294901760
    %v1196 = vsub.f32 %v1194, %v1195
    %v1197 = vand.u32 %v1196, 4294901760
    %1198 = vmatpush1.xpose.msra.mxu0 %v1197
    %1199 = vmatprep.subr.mxu0 0.0
    %v1200 = vand.u32 %v288, 4294901760
    %v1201 = vsub.f32 %v288, %v1200
    %v1202 = vand.u32 %v1201, 4294901760
    %v1203 = vsub.f32 %v1201, %v1202
    %v1204 = vand.u32 %v1203, 4294901760
    %1205 = vmatpush1.xpose.msra.mxu0 %v1204
    %1206 = vmatprep.subr.mxu0 0.0
    %1207 = vmatpush1.xpose.msra.mxu0 0.0
    %1208 = vmatprep.subr.mxu0 0.0
    %1209 = vmatpush1.xpose.msra.mxu0 0.0
    %1210 = vmatprep.subr.mxu0 0.0
    %1211 = vmatpush1.xpose.msra.mxu0 0.0
    %1212 = vmatprep.subr.mxu0 0.0
    %1213 = vmatpush1.xpose.msra.mxu0 0.0
    %1214 = vmatprep.subr.mxu0 0.0
    %1215 = vmatpush1.xpose.msra.mxu0 0.0
    %1216 = vmatprep.subr.mxu0 0.0
    %1217 = vmatpush1.xpose.msra.mxu0 0.0
    %1218 = vmatprep.subr.mxu0 0.0
    %1219 = vmatpush1.xpose.msra.mxu0 0.0
    %1220 = vmatprep.subr.mxu0 0.0
    %1221 = vmatpush1.xpose.msra.mxu0 0.0
    %1222 = vmatprep.subr.mxu0 0.0
    %1223 = vmatpush1.xpose.msra.mxu0 0.0
    %1224 = vmatprep.subr.mxu0 0.0
    %1225 = vmatpush1.xpose.msra.mxu0 0.0
    %1226 = vmatprep.subr.mxu0 0.0
    %1227 = vmatpush1.xpose.msra.mxu0 0.0
    %1228 = vmatprep.subr.mxu0 0.0
    %1229 = vmatpush1.xpose.msra.mxu0 0.0
    %1230 = vmatprep.subr.mxu0 0.0
    %1231 = vmatpush1.xpose.msra.mxu0 0.0
    %1232 = vmatprep.subr.mxu0 0.0
    %1233 = vmatpush1.xpose.msra.mxu0 0.0
    %1234 = vmatprep.subr.mxu0 0.0
    %1235 = vmatpush1.xpose.msra.mxu0 0.0
    %1236 = vmatprep.subr.mxu0 0.0
    %1237 = vmatpush1.xpose.msra.mxu0 0.0
    %1238 = vmatprep.mubr.f32.mxu0 0.0
    %v1239 = vand.u32 %v309, 4294901760
    %1240 = vmatmul.mubr.f32.gmra.mrb[0].mxu0 %v1239
    %v1241 = vpop.f32.mrb[0].mxu0
    %v1242 = vadd.f32 %v461, %v1241
    %v1243 = vpop.f32.mrb[0].mxu0
    %1244 = vmatprep.mubr.f32.mxu0 0.0
    %v1245 = vand.u32 %v310, 4294901760
    %1246 = vmatmul.mubr.f32.gmra.mrb[0].mxu0 %v1245
    %v1247 = vpop.f32.mrb[0].mxu0
    %v1248 = vadd.f32 %v471, %v1247
    %v1249 = vpop.f32.mrb[0].mxu0
    %1250 = vmatprep.mubr.f32.mxu0 0.0
    %v1251 = vand.u32 %v311, 4294901760
    %1252 = vmatmul.mubr.f32.gmra.mrb[0].mxu0 %v1251
    %v1253 = vpop.f32.mrb[0].mxu0
    %v1254 = vadd.f32 %v481, %v1253
    %v1255 = vpop.f32.mrb[0].mxu0
    %1256 = vmatprep.mubr.f32.mxu0 0.0
    %v1257 = vand.u32 %v312, 4294901760
    %1258 = vmatmul.mubr.f32.gmra.mrb[0].mxu0 %v1257
    %v1259 = vpop.f32.mrb[0].mxu0
    %v1260 = vadd.f32 %v491, %v1259
    %v1261 = vpop.f32.mrb[0].mxu0
    %1262 = vmatprep.mubr.f32.mxu0 0.0
    %v1263 = vand.u32 %v313, 4294901760
    %1264 = vmatmul.mubr.f32.gmra.mrb[0].mxu0 %v1263
    %v1265 = vpop.f32.mrb[0].mxu0
    %v1266 = vadd.f32 %v501, %v1265
    %v1267 = vpop.f32.mrb[0].mxu0
    %1268 = vmatprep.mubr.f32.mxu0 0.0
    %v1269 = vand.u32 %v314, 4294901760
    %1270 = vmatmul.mubr.f32.gmra.mrb[0].mxu0 %v1269
    %v1271 = vpop.f32.mrb[0].mxu0
    %v1272 = vadd.f32 %v511, %v1271
    %v1273 = vpop.f32.mrb[0].mxu0
    %1274 = vmatprep.mubr.f32.mxu0 0.0
    %v1275 = vand.u32 %v315, 4294901760
    %1276 = vmatmul.mubr.f32.gmra.mrb[0].mxu0 %v1275
    %v1277 = vpop.f32.mrb[0].mxu0
    %v1278 = vadd.f32 %v521, %v1277
    %v1279 = vpop.f32.mrb[0].mxu0
    %1280 = vmatprep.mubr.f32.mxu0 0.0
    %v1281 = vand.u32 %v316, 4294901760
    %1282 = vmatmul.mubr.f32.gmra.mrb[0].mxu0 %v1281
    %v1283 = vpop.f32.mrb[0].mxu0
    %v1284 = vadd.f32 %v531, %v1283
    %v1285 = vpop.f32.mrb[0].mxu0
    %1286 = vmatprep.mubr.f32.mxu0 0.0
    %v1287 = vand.u32 %v317, 4294901760
    %1288 = vmatmul.mubr.f32.gmra.mrb[0].mxu0 %v1287
    %v1289 = vpop.f32.mrb[0].mxu0
    %v1290 = vadd.f32 %v541, %v1289
    %v1291 = vpop.f32.mrb[0].mxu0
    %1292 = vmatprep.mubr.f32.mxu0 0.0
    %v1293 = vand.u32 %v318, 4294901760
    %1294 = vmatmul.mubr.f32.gmra.mrb[0].mxu0 %v1293
    %v1295 = vpop.f32.mrb[0].mxu0
    %v1296 = vadd.f32 %v551, %v1295
    %v1297 = vpop.f32.mrb[0].mxu0
    %1298 = vmatprep.mubr.f32.mxu0 0.0
    %v1299 = vand.u32 %v319, 4294901760
    %1300 = vmatmul.mubr.f32.gmra.mrb[0].mxu0 %v1299
    %v1301 = vpop.f32.mrb[0].mxu0
    %v1302 = vadd.f32 %v561, %v1301
    %v1303 = vpop.f32.mrb[0].mxu0
    %1304 = vmatprep.mubr.f32.mxu0 0.0
    %v1305 = vand.u32 %v320, 4294901760
    %1306 = vmatmul.mubr.f32.gmra.mrb[0].mxu0 %v1305
    %v1307 = vpop.f32.mrb[0].mxu0
    %v1308 = vadd.f32 %v571, %v1307
    %v1309 = vpop.f32.mrb[0].mxu0
    %1310 = vmatprep.mubr.f32.mxu0 0.0
    %v1311 = vand.u32 %v321, 4294901760
    %1312 = vmatmul.mubr.f32.gmra.mrb[0].mxu0 %v1311
    %v1313 = vpop.f32.mrb[0].mxu0
    %v1314 = vadd.f32 %v581, %v1313
    %v1315 = vpop.f32.mrb[0].mxu0
    %1316 = vmatprep.mubr.f32.mxu0 0.0
    %v1317 = vand.u32 %v322, 4294901760
    %1318 = vmatmul.mubr.f32.gmra.mrb[0].mxu0 %v1317
    %v1319 = vpop.f32.mrb[0].mxu0
    %v1320 = vadd.f32 %v591, %v1319
    %v1321 = vpop.f32.mrb[0].mxu0
    %1322 = vmatprep.mubr.f32.mxu0 0.0
    %v1323 = vand.u32 %v323, 4294901760
    %1324 = vmatmul.mubr.f32.gmra.mrb[0].mxu0 %v1323
    %v1325 = vpop.f32.mrb[0].mxu0
    %v1326 = vadd.f32 %v601, %v1325
    %v1327 = vpop.f32.mrb[0].mxu0
    %1328 = vmatprep.mubr.f32.mxu0 0.0
    %v1329 = vand.u32 %v324, 4294901760
    %1330 = vmatmul.mubr.f32.gmra.mrb[0].mxu0 %v1329
    %v1331 = vpop.f32.mrb[0].mxu0
    %v1332 = vadd.f32 %v611, %v1331
    %v1333 = vpop.f32.mrb[0].mxu0
    %1334 = vmatprep.mubr.f32.mxu0 0.0
    %v1335 = vand.u32 %v325, 4294901760
    %1336 = vmatmul.mubr.f32.gmra.mrb[0].mxu0 %v1335
    %v1337 = vpop.f32.mrb[0].mxu0
    %v1338 = vadd.f32 %v621, %v1337
    %v1339 = vpop.f32.mrb[0].mxu0
    %1340 = vmatprep.mubr.f32.mxu0 0.0
    %v1341 = vand.u32 %v326, 4294901760
    %1342 = vmatmul.mubr.f32.gmra.mrb[0].mxu0 %v1341
    %v1343 = vpop.f32.mrb[0].mxu0
    %v1344 = vadd.f32 %v631, %v1343
    %v1345 = vpop.f32.mrb[0].mxu0
    %1346 = vmatprep.mubr.f32.mxu0 0.0
    %v1347 = vand.u32 %v327, 4294901760
    %1348 = vmatmul.mubr.f32.gmra.mrb[0].mxu0 %v1347
    %v1349 = vpop.f32.mrb[0].mxu0
    %v1350 = vadd.f32 %v641, %v1349
    %v1351 = vpop.f32.mrb[0].mxu0
    %1352 = vmatprep.mubr.f32.mxu0 0.0
    %v1353 = vand.u32 %v328, 4294901760
    %1354 = vmatmul.mubr.f32.gmra.mrb[0].mxu0 %v1353
    %v1355 = vpop.f32.mrb[0].mxu0
    %v1356 = vadd.f32 %v651, %v1355
    %v1357 = vpop.f32.mrb[0].mxu0
    %1358 = vmatprep.mubr.f32.mxu0 0.0
    %v1359 = vand.u32 %v329, 4294901760
    %1360 = vmatmul.mubr.f32.gmra.mrb[0].mxu0 %v1359
    %v1361 = vpop.f32.mrb[0].mxu0
    %v1362 = vadd.f32 %v661, %v1361
    %v1363 = vpop.f32.mrb[0].mxu0
    %1364 = vmatprep.mubr.f32.mxu0 0.0
    %v1365 = vand.u32 %v330, 4294901760
    %1366 = vmatmul.mubr.f32.gmra.mrb[0].mxu0 %v1365
    %v1367 = vpop.f32.mrb[0].mxu0
    %v1368 = vadd.f32 %v671, %v1367
    %v1369 = vpop.f32.mrb[0].mxu0
    %1370 = vmatprep.mubr.f32.mxu0 0.0
    %v1371 = vand.u32 %v331, 4294901760
    %1372 = vmatmul.mubr.f32.gmra.mrb[0].mxu0 %v1371
    %v1373 = vpop.f32.mrb[0].mxu0
    %v1374 = vadd.f32 %v681, %v1373
    %v1375 = vpop.f32.mrb[0].mxu0
    %1376 = vmatprep.mubr.f32.mxu0 0.0
    %v1377 = vand.u32 %v332, 4294901760
    %1378 = vmatmul.mubr.f32.gmra.mrb[0].mxu0 %v1377
    %v1379 = vpop.f32.mrb[0].mxu0
    %v1380 = vadd.f32 %v691, %v1379
    %v1381 = vpop.f32.mrb[0].mxu0
    %1382 = vmatprep.mubr.f32.mxu0 0.0
    %v1383 = vand.u32 %v333, 4294901760
    %1384 = vmatmul.mubr.f32.gmra.mrb[0].mxu0 %v1383
    %v1385 = vpop.f32.mrb[0].mxu0
    %v1386 = vadd.f32 %v701, %v1385
    %v1387 = vpop.f32.mrb[0].mxu0
    %1388 = vmatprep.mubr.f32.mxu0 0.0
    %v1389 = vand.u32 %v334, 4294901760
    %1390 = vmatmul.mubr.f32.gmra.mrb[0].mxu0 %v1389
    %v1391 = vpop.f32.mrb[0].mxu0
    %v1392 = vadd.f32 %v711, %v1391
    %v1393 = vpop.f32.mrb[0].mxu0
    %1394 = vmatprep.mubr.f32.mxu0 0.0
    %v1395 = vand.u32 %v335, 4294901760
    %1396 = vmatmul.mubr.f32.gmra.mrb[0].mxu0 %v1395
    %v1397 = vpop.f32.mrb[0].mxu0
    %v1398 = vadd.f32 %v721, %v1397
    %v1399 = vpop.f32.mrb[0].mxu0
    %1400 = vmatprep.mubr.f32.mxu0 0.0
    %v1401 = vand.u32 %v336, 4294901760
    %1402 = vmatmul.mubr.f32.gmra.mrb[0].mxu0 %v1401
    %v1403 = vpop.f32.mrb[0].mxu0
    %v1404 = vadd.f32 %v731, %v1403
    %v1405 = vpop.f32.mrb[0].mxu0
    %1406 = vmatprep.mubr.f32.mxu0 0.0
    %v1407 = vand.u32 %v337, 4294901760
    %1408 = vmatmul.mubr.f32.gmra.mrb[0].mxu0 %v1407
    %v1409 = vpop.f32.mrb[0].mxu0
    %v1410 = vadd.f32 %v741, %v1409
    %v1411 = vpop.f32.mrb[0].mxu0
    %1412 = vmatprep.mubr.f32.mxu0 0.0
    %v1413 = vand.u32 %v338, 4294901760
    %1414 = vmatmul.mubr.f32.gmra.mrb[0].mxu0 %v1413
    %v1415 = vpop.f32.mrb[0].mxu0
    %v1416 = vadd.f32 %v751, %v1415
    %v1417 = vpop.f32.mrb[0].mxu0
    %1418 = vmatprep.mubr.f32.mxu0 0.0
    %v1419 = vand.u32 %v339, 4294901760
    %1420 = vmatmul.mubr.f32.gmra.mrb[0].mxu0 %v1419
    %v1421 = vpop.f32.mrb[0].mxu0
    %v1422 = vadd.f32 %v761, %v1421
    %v1423 = vpop.f32.mrb[0].mxu0
    %1424 = vmatprep.mubr.f32.mxu0 0.0
    %v1425 = vand.u32 %v340, 4294901760
    %1426 = vmatmul.mubr.f32.gmra.mrb[0].mxu0 %v1425
    %v1427 = vpop.f32.mrb[0].mxu0
    %v1428 = vadd.f32 %v771, %v1427
    %v1429 = vpop.f32.mrb[0].mxu0
    %1430 = vmatprep.mubr.f32.mxu0 0.0
    %v1431 = vand.u32 %v341, 4294901760
    %1432 = vmatmul.mubr.f32.gmra.mrb[0].mxu0 %v1431
    %v1433 = vpop.f32.mrb[0].mxu0
    %v1434 = vadd.f32 %v781, %v1433
    %v1435 = vpop.f32.mrb[0].mxu0
    %1436 = vmatprep.mubr.f32.mxu0 0.0
    %v1437 = vand.u32 %v342, 4294901760
    %1438 = vmatmul.mubr.f32.gmra.mrb[0].mxu0 %v1437
    %v1439 = vpop.f32.mrb[0].mxu0
    %v1440 = vadd.f32 %v791, %v1439
    %v1441 = vpop.f32.mrb[0].mxu0
    %1442 = vmatprep.mubr.f32.mxu0 0.0
    %v1443 = vand.u32 %v343, 4294901760
    %1444 = vmatmul.mubr.f32.gmra.mrb[0].mxu0 %v1443
    %v1445 = vpop.f32.mrb[0].mxu0
    %v1446 = vadd.f32 %v801, %v1445
    %v1447 = vpop.f32.mrb[0].mxu0
    %1448 = vmatprep.mubr.f32.mxu0 0.0
    %v1449 = vand.u32 %v344, 4294901760
    %1450 = vmatmul.mubr.f32.gmra.mrb[0].mxu0 %v1449
    %v1451 = vpop.f32.mrb[0].mxu0
    %v1452 = vadd.f32 %v811, %v1451
    %v1453 = vpop.f32.mrb[0].mxu0
    %1454 = vmatprep.mubr.f32.mxu0 0.0
    %v1455 = vand.u32 %v345, 4294901760
    %1456 = vmatmul.mubr.f32.gmra.mrb[0].mxu0 %v1455
    %v1457 = vpop.f32.mrb[0].mxu0
    %v1458 = vadd.f32 %v821, %v1457
    %v1459 = vpop.f32.mrb[0].mxu0
    %1460 = vmatprep.mubr.f32.mxu0 0.0
    %v1461 = vand.u32 %v346, 4294901760
    %1462 = vmatmul.mubr.f32.gmra.mrb[0].mxu0 %v1461
    %v1463 = vpop.f32.mrb[0].mxu0
    %v1464 = vadd.f32 %v831, %v1463
    %v1465 = vpop.f32.mrb[0].mxu0
    %1466 = vmatprep.mubr.f32.mxu0 0.0
    %v1467 = vand.u32 %v347, 4294901760
    %1468 = vmatmul.mubr.f32.gmra.mrb[0].mxu0 %v1467
    %v1469 = vpop.f32.mrb[0].mxu0
    %v1470 = vadd.f32 %v841, %v1469
    %v1471 = vpop.f32.mrb[0].mxu0
    %1472 = vmatprep.mubr.f32.mxu0 0.0
    %v1473 = vand.u32 %v348, 4294901760
    %1474 = vmatmul.mubr.f32.gmra.mrb[0].mxu0 %v1473
    %v1475 = vpop.f32.mrb[0].mxu0
    %v1476 = vadd.f32 %v851, %v1475
    %v1477 = vpop.f32.mrb[0].mxu0
    %1478 = vmatprep.mubr.f32.mxu0 0.0
    %v1479 = vand.u32 %v349, 4294901760
    %1480 = vmatmul.mubr.f32.gmra.mrb[0].mxu0 %v1479
    %v1481 = vpop.f32.mrb[0].mxu0
    %v1482 = vadd.f32 %v861, %v1481
    %v1483 = vpop.f32.mrb[0].mxu0
    %1484 = vmatprep.mubr.f32.mxu0 0.0
    %v1485 = vand.u32 %v350, 4294901760
    %1486 = vmatmul.mubr.f32.gmra.mrb[0].mxu0 %v1485
    %v1487 = vpop.f32.mrb[0].mxu0
    %v1488 = vadd.f32 %v871, %v1487
    %v1489 = vpop.f32.mrb[0].mxu0
    %1490 = vmatprep.mubr.f32.mxu0 0.0
    %v1491 = vand.u32 %v351, 4294901760
    %1492 = vmatmul.mubr.f32.gmra.mrb[0].mxu0 %v1491
    %v1493 = vpop.f32.mrb[0].mxu0
    %v1494 = vadd.f32 %v881, %v1493
    %v1495 = vpop.f32.mrb[0].mxu0
    %1496 = vmatprep.mubr.f32.mxu0 0.0
    %v1497 = vand.u32 %v352, 4294901760
    %1498 = vmatmul.mubr.f32.gmra.mrb[0].mxu0 %v1497
    %v1499 = vpop.f32.mrb[0].mxu0
    %v1500 = vadd.f32 %v891, %v1499
    %v1501 = vpop.f32.mrb[0].mxu0
    %1502 = vmatprep.mubr.f32.mxu0 0.0
    %v1503 = vand.u32 %v353, 4294901760
    %1504 = vmatmul.mubr.f32.gmra.mrb[0].mxu0 %v1503
    %v1505 = vpop.f32.mrb[0].mxu0
    %v1506 = vadd.f32 %v901, %v1505
    %v1507 = vpop.f32.mrb[0].mxu0
    %1508 = vmatprep.mubr.f32.mxu0 0.0
    %v1509 = vand.u32 %v354, 4294901760
    %1510 = vmatmul.mubr.f32.gmra.mrb[0].mxu0 %v1509
    %v1511 = vpop.f32.mrb[0].mxu0
    %v1512 = vadd.f32 %v911, %v1511
    %v1513 = vpop.f32.mrb[0].mxu0
    %1514 = vmatprep.mubr.f32.mxu0 0.0
    %v1515 = vand.u32 %v355, 4294901760
    %1516 = vmatmul.mubr.f32.gmra.mrb[0].mxu0 %v1515
    %v1517 = vpop.f32.mrb[0].mxu0
    %v1518 = vadd.f32 %v921, %v1517
    %v1519 = vpop.f32.mrb[0].mxu0
    %1520 = vmatprep.mubr.f32.mxu0 0.0
    %v1521 = vand.u32 %v356, 4294901760
    %1522 = vmatmul.mubr.f32.gmra.mrb[0].mxu0 %v1521
    %v1523 = vpop.f32.mrb[0].mxu0
    %v1524 = vadd.f32 %v931, %v1523
    %v1525 = vpop.f32.mrb[0].mxu0
    %1526 = vmatprep.mubr.f32.mxu0 0.0
    %v1527 = vand.u32 %v357, 4294901760
    %1528 = vmatmul.mubr.f32.gmra.mrb[0].mxu0 %v1527
    %v1529 = vpop.f32.mrb[0].mxu0
    %v1530 = vadd.f32 %v941, %v1529
    %v1531 = vpop.f32.mrb[0].mxu0
    %1532 = vmatprep.mubr.f32.mxu0 0.0
    %v1533 = vand.u32 %v358, 4294901760
    %1534 = vmatmul.mubr.f32.gmra.mrb[0].mxu0 %v1533
    %v1535 = vpop.f32.mrb[0].mxu0
    %v1536 = vadd.f32 %v951, %v1535
    %v1537 = vpop.f32.mrb[0].mxu0
    %1538 = vmatprep.mubr.f32.mxu0 0.0
    %v1539 = vand.u32 %v359, 4294901760
    %1540 = vmatmul.mubr.f32.gmra.mrb[0].mxu0 %v1539
    %v1541 = vpop.f32.mrb[0].mxu0
    %v1542 = vadd.f32 %v961, %v1541
    %v1543 = vpop.f32.mrb[0].mxu0
    %1544 = vmatprep.mubr.f32.mxu0 0.0
    %v1545 = vand.u32 %v360, 4294901760
    %1546 = vmatmul.mubr.f32.gmra.mrb[0].mxu0 %v1545
    %v1547 = vpop.f32.mrb[0].mxu0
    %v1548 = vadd.f32 %v971, %v1547
    %v1549 = vpop.f32.mrb[0].mxu0
    %1550 = vmatprep.mubr.f32.mxu0 0.0
    %v1551 = vand.u32 %v361, 4294901760
    %1552 = vmatmul.mubr.f32.gmra.mrb[0].mxu0 %v1551
    %v1553 = vpop.f32.mrb[0].mxu0
    %v1554 = vadd.f32 %v981, %v1553
    %v1555 = vpop.f32.mrb[0].mxu0
    %1556 = vmatprep.mubr.f32.mxu0 0.0
    %v1557 = vand.u32 %v362, 4294901760
    %1558 = vmatmul.mubr.f32.gmra.mrb[0].mxu0 %v1557
    %v1559 = vpop.f32.mrb[0].mxu0
    %v1560 = vadd.f32 %v991, %v1559
    %v1561 = vpop.f32.mrb[0].mxu0
    %1562 = vmatprep.mubr.f32.mxu0 0.0
    %v1563 = vand.u32 %v363, 4294901760
    %1564 = vmatmul.mubr.f32.gmra.mrb[0].mxu0 %v1563
    %v1565 = vpop.f32.mrb[0].mxu0
    %v1566 = vadd.f32 %v1001, %v1565
    %v1567 = vpop.f32.mrb[0].mxu0
    %1568 = vmatprep.mubr.f32.mxu0 0.0
    %v1569 = vand.u32 %v364, 4294901760
    %1570 = vmatmul.mubr.f32.gmra.mrb[0].mxu0 %v1569
    %v1571 = vpop.f32.mrb[0].mxu0
    %v1572 = vadd.f32 %v1011, %v1571
    %v1573 = vpop.f32.mrb[0].mxu0
    %1574 = vmatprep.mubr.f32.mxu0 0.0
    %v1575 = vand.u32 %v365, 4294901760
    %1576 = vmatmul.mubr.f32.gmra.mrb[0].mxu0 %v1575
    %v1577 = vpop.f32.mrb[0].mxu0
    %v1578 = vadd.f32 %v1021, %v1577
    %v1579 = vpop.f32.mrb[0].mxu0
    %1580 = vmatprep.mubr.f32.mxu0 0.0
    %v1581 = vand.u32 %v366, 4294901760
    %1582 = vmatmul.mubr.f32.gmra.mrb[0].mxu0 %v1581
    %v1583 = vpop.f32.mrb[0].mxu0
    %v1584 = vadd.f32 %v1031, %v1583
    %v1585 = vpop.f32.mrb[0].mxu0
    %1586 = vmatprep.mubr.f32.mxu0 0.0
    %v1587 = vand.u32 %v367, 4294901760
    %1588 = vmatmul.mubr.f32.gmra.mrb[0].mxu0 %v1587
    %v1589 = vpop.f32.mrb[0].mxu0
    %v1590 = vadd.f32 %v1041, %v1589
    %v1591 = vpop.f32.mrb[0].mxu0
    %1592 = vmatprep.mubr.f32.mxu0 0.0
    %v1593 = vand.u32 %v368, 4294901760
    %1594 = vmatmul.mubr.f32.gmra.mrb[0].mxu0 %v1593
    %v1595 = vpop.f32.mrb[0].mxu0
    %v1596 = vadd.f32 %v1051, %v1595
    %v1597 = vpop.f32.mrb[0].mxu0
    %1598 = vmatprep.mubr.f32.mxu0 0.0
    %v1599 = vand.u32 %v369, 4294901760
    %1600 = vmatmul.mubr.f32.gmra.mrb[0].mxu0 %v1599
    %v1601 = vpop.f32.mrb[0].mxu0
    %v1602 = vadd.f32 %v1061, %v1601
    %v1603 = vpop.f32.mrb[0].mxu0
    %1604 = vmatprep.mubr.f32.mxu0 0.0
    %v1605 = vand.u32 %v370, 4294901760
    %1606 = vmatmul.mubr.f32.gmra.mrb[0].mxu0 %v1605
    %v1607 = vpop.f32.mrb[0].mxu0
    %v1608 = vadd.f32 %v1071, %v1607
    %v1609 = vpop.f32.mrb[0].mxu0
    %1610 = vmatprep.mubr.f32.mxu0 0.0
    %v1611 = vand.u32 %v371, 4294901760
    %1612 = vmatmul.mubr.f32.gmra.mrb[0].mxu0 %v1611
    %v1613 = vpop.f32.mrb[0].mxu0
    %v1614 = vadd.f32 %v1081, %v1613
    %v1615 = vpop.f32.mrb[0].mxu0
    %1616 = vmatprep.mubr.f32.mxu0 0.0
    %v1617 = vand.u32 %v372, 4294901760
    %1618 = vmatmul.mubr.f32.gmra.mrb[0].mxu0 %v1617
    %v1619 = vpop.f32.mrb[0].mxu0
    %v1620 = vadd.f32 %v1091, %v1619
    %v1621 = vpop.f32.mrb[0].mxu0
    %1622 = vdwg.mxu0
    %1623 = vmatprep.subr.mxu0 0.0
    %v1624 = vand.u32 %v273, 4294901760
    %v1625 = vsub.f32 %v273, %v1624
    %1626 = vmatpush1.xpose.msra.mxu0 %v1625
    %1627 = vmatprep.subr.mxu0 0.0
    %v1628 = vand.u32 %v274, 4294901760
    %v1629 = vsub.f32 %v274, %v1628
    %1630 = vmatpush1.xpose.msra.mxu0 %v1629
    %1631 = vmatprep.subr.mxu0 0.0
    %v1632 = vand.u32 %v275, 4294901760
    %v1633 = vsub.f32 %v275, %v1632
    %1634 = vmatpush1.xpose.msra.mxu0 %v1633
    %1635 = vmatprep.subr.mxu0 0.0
    %v1636 = vand.u32 %v276, 4294901760
    %v1637 = vsub.f32 %v276, %v1636
    %1638 = vmatpush1.xpose.msra.mxu0 %v1637
    %1639 = vmatprep.subr.mxu0 0.0
    %v1640 = vand.u32 %v277, 4294901760
    %v1641 = vsub.f32 %v277, %v1640
    %1642 = vmatpush1.xpose.msra.mxu0 %v1641
    %1643 = vmatprep.subr.mxu0 0.0
    %v1644 = vand.u32 %v278, 4294901760
    %v1645 = vsub.f32 %v278, %v1644
    %1646 = vmatpush1.xpose.msra.mxu0 %v1645
    %1647 = vmatprep.subr.mxu0 0.0
    %v1648 = vand.u32 %v279, 4294901760
    %v1649 = vsub.f32 %v279, %v1648
    %1650 = vmatpush1.xpose.msra.mxu0 %v1649
    %1651 = vmatprep.subr.mxu0 0.0
    %v1652 = vand.u32 %v280, 4294901760
    %v1653 = vsub.f32 %v280, %v1652
    %1654 = vmatpush1.xpose.msra.mxu0 %v1653
    %1655 = vmatprep.subr.mxu0 0.0
    %v1656 = vand.u32 %v281, 4294901760
    %v1657 = vsub.f32 %v281, %v1656
    %1658 = vmatpush1.xpose.msra.mxu0 %v1657
    %1659 = vmatprep.subr.mxu0 0.0
    %v1660 = vand.u32 %v282, 4294901760
    %v1661 = vsub.f32 %v282, %v1660
    %1662 = vmatpush1.xpose.msra.mxu0 %v1661
    %1663 = vmatprep.subr.mxu0 0.0
    %v1664 = vand.u32 %v283, 4294901760
    %v1665 = vsub.f32 %v283, %v1664
    %1666 = vmatpush1.xpose.msra.mxu0 %v1665
    %1667 = vmatprep.subr.mxu0 0.0
    %v1668 = vand.u32 %v284, 4294901760
    %v1669 = vsub.f32 %v284, %v1668
    %1670 = vmatpush1.xpose.msra.mxu0 %v1669
    %1671 = vmatprep.subr.mxu0 0.0
    %v1672 = vand.u32 %v285, 4294901760
    %v1673 = vsub.f32 %v285, %v1672
    %1674 = vmatpush1.xpose.msra.mxu0 %v1673
    %1675 = vmatprep.subr.mxu0 0.0
    %v1676 = vand.u32 %v286, 4294901760
    %v1677 = vsub.f32 %v286, %v1676
    %1678 = vmatpush1.xpose.msra.mxu0 %v1677
    %1679 = vmatprep.subr.mxu0 0.0
    %v1680 = vand.u32 %v287, 4294901760
    %v1681 = vsub.f32 %v287, %v1680
    %1682 = vmatpush1.xpose.msra.mxu0 %v1681
    %1683 = vmatprep.subr.mxu0 0.0
    %v1684 = vand.u32 %v288, 4294901760
    %v1685 = vsub.f32 %v288, %v1684
    %1686 = vmatpush1.xpose.msra.mxu0 %v1685
    %1687 = vmatprep.subr.mxu0 0.0
    %1688 = vmatpush1.xpose.msra.mxu0 0.0
    %1689 = vmatprep.subr.mxu0 0.0
    %1690 = vmatpush1.xpose.msra.mxu0 0.0
    %1691 = vmatprep.subr.mxu0 0.0
    %1692 = vmatpush1.xpose.msra.mxu0 0.0
    %1693 = vmatprep.subr.mxu0 0.0
    %1694 = vmatpush1.xpose.msra.mxu0 0.0
    %1695 = vmatprep.subr.mxu0 0.0
    %1696 = vmatpush1.xpose.msra.mxu0 0.0
    %1697 = vmatprep.subr.mxu0 0.0
    %1698 = vmatpush1.xpose.msra.mxu0 0.0
    %1699 = vmatprep.subr.mxu0 0.0
    %1700 = vmatpush1.xpose.msra.mxu0 0.0
    %1701 = vmatprep.subr.mxu0 0.0
    %1702 = vmatpush1.xpose.msra.mxu0 0.0
    %1703 = vmatprep.subr.mxu0 0.0
    %1704 = vmatpush1.xpose.msra.mxu0 0.0
    %1705 = vmatprep.subr.mxu0 0.0
    %1706 = vmatpush1.xpose.msra.mxu0 0.0
    %1707 = vmatprep.subr.mxu0 0.0
    %1708 = vmatpush1.xpose.msra.mxu0 0.0
    %1709 = vmatprep.subr.mxu0 0.0
    %1710 = vmatpush1.xpose.msra.mxu0 0.0
    %1711 = vmatprep.subr.mxu0 0.0
    %1712 = vmatpush1.xpose.msra.mxu0 0.0
    %1713 = vmatprep.subr.mxu0 0.0
    %1714 = vmatpush1.xpose.msra.mxu0 0.0
    %1715 = vmatprep.subr.mxu0 0.0
    %1716 = vmatpush1.xpose.msra.mxu0 0.0
    %1717 = vmatprep.subr.mxu0 0.0
    %1718 = vmatpush1.xpose.msra.mxu0 0.0
    %1719 = vmatprep.mubr.f32.mxu0 0.0
    %v1720 = vand.u32 %v309, 4294901760
    %v1721 = vsub.f32 %v309, %v1720
    %1722 = vmatmul.mubr.f32.gmra.mrb[0].mxu0 %v1721
    %v1723 = vpop.f32.mrb[0].mxu0
    %v1724 = vadd.f32 %v1242, %v1723
    %v1725 = vpop.f32.mrb[0].mxu0
    %1726 = vmatprep.mubr.f32.mxu0 0.0
    %v1727 = vand.u32 %v310, 4294901760
    %v1728 = vsub.f32 %v310, %v1727
    %1729 = vmatmul.mubr.f32.gmra.mrb[0].mxu0 %v1728
    %v1730 = vpop.f32.mrb[0].mxu0
    %v1731 = vadd.f32 %v1248, %v1730
    %v1732 = vpop.f32.mrb[0].mxu0
    %1733 = vmatprep.mubr.f32.mxu0 0.0
    %v1734 = vand.u32 %v311, 4294901760
    %v1735 = vsub.f32 %v311, %v1734
    %1736 = vmatmul.mubr.f32.gmra.mrb[0].mxu0 %v1735
    %v1737 = vpop.f32.mrb[0].mxu0
    %v1738 = vadd.f32 %v1254, %v1737
    %v1739 = vpop.f32.mrb[0].mxu0
    %1740 = vmatprep.mubr.f32.mxu0 0.0
    %v1741 = vand.u32 %v312, 4294901760
    %v1742 = vsub.f32 %v312, %v1741
    %1743 = vmatmul.mubr.f32.gmra.mrb[0].mxu0 %v1742
    %v1744 = vpop.f32.mrb[0].mxu0
    %v1745 = vadd.f32 %v1260, %v1744
    %v1746 = vpop.f32.mrb[0].mxu0
    %1747 = vmatprep.mubr.f32.mxu0 0.0
    %v1748 = vand.u32 %v313, 4294901760
    %v1749 = vsub.f32 %v313, %v1748
    %1750 = vmatmul.mubr.f32.gmra.mrb[0].mxu0 %v1749
    %v1751 = vpop.f32.mrb[0].mxu0
    %v1752 = vadd.f32 %v1266, %v1751
    %v1753 = vpop.f32.mrb[0].mxu0
    %1754 = vmatprep.mubr.f32.mxu0 0.0
    %v1755 = vand.u32 %v314, 4294901760
    %v1756 = vsub.f32 %v314, %v1755
    %1757 = vmatmul.mubr.f32.gmra.mrb[0].mxu0 %v1756
    %v1758 = vpop.f32.mrb[0].mxu0
    %v1759 = vadd.f32 %v1272, %v1758
    %v1760 = vpop.f32.mrb[0].mxu0
    %1761 = vmatprep.mubr.f32.mxu0 0.0
    %v1762 = vand.u32 %v315, 4294901760
    %v1763 = vsub.f32 %v315, %v1762
    %1764 = vmatmul.mubr.f32.gmra.mrb[0].mxu0 %v1763
    %v1765 = vpop.f32.mrb[0].mxu0
    %v1766 = vadd.f32 %v1278, %v1765
    %v1767 = vpop.f32.mrb[0].mxu0
    %1768 = vmatprep.mubr.f32.mxu0 0.0
    %v1769 = vand.u32 %v316, 4294901760
    %v1770 = vsub.f32 %v316, %v1769
    %1771 = vmatmul.mubr.f32.gmra.mrb[0].mxu0 %v1770
    %v1772 = vpop.f32.mrb[0].mxu0
    %v1773 = vadd.f32 %v1284, %v1772
    %v1774 = vpop.f32.mrb[0].mxu0
    %1775 = vmatprep.mubr.f32.mxu0 0.0
    %v1776 = vand.u32 %v317, 4294901760
    %v1777 = vsub.f32 %v317, %v1776
    %1778 = vmatmul.mubr.f32.gmra.mrb[0].mxu0 %v1777
    %v1779 = vpop.f32.mrb[0].mxu0
    %v1780 = vadd.f32 %v1290, %v1779
    %v1781 = vpop.f32.mrb[0].mxu0
    %1782 = vmatprep.mubr.f32.mxu0 0.0
    %v1783 = vand.u32 %v318, 4294901760
    %v1784 = vsub.f32 %v318, %v1783
    %1785 = vmatmul.mubr.f32.gmra.mrb[0].mxu0 %v1784
    %v1786 = vpop.f32.mrb[0].mxu0
    %v1787 = vadd.f32 %v1296, %v1786
    %v1788 = vpop.f32.mrb[0].mxu0
    %1789 = vmatprep.mubr.f32.mxu0 0.0
    %v1790 = vand.u32 %v319, 4294901760
    %v1791 = vsub.f32 %v319, %v1790
    %1792 = vmatmul.mubr.f32.gmra.mrb[0].mxu0 %v1791
    %v1793 = vpop.f32.mrb[0].mxu0
    %v1794 = vadd.f32 %v1302, %v1793
    %v1795 = vpop.f32.mrb[0].mxu0
    %1796 = vmatprep.mubr.f32.mxu0 0.0
    %v1797 = vand.u32 %v320, 4294901760
    %v1798 = vsub.f32 %v320, %v1797
    %1799 = vmatmul.mubr.f32.gmra.mrb[0].mxu0 %v1798
    %v1800 = vpop.f32.mrb[0].mxu0
    %v1801 = vadd.f32 %v1308, %v1800
    %v1802 = vpop.f32.mrb[0].mxu0
    %1803 = vmatprep.mubr.f32.mxu0 0.0
    %v1804 = vand.u32 %v321, 4294901760
    %v1805 = vsub.f32 %v321, %v1804
    %1806 = vmatmul.mubr.f32.gmra.mrb[0].mxu0 %v1805
    %v1807 = vpop.f32.mrb[0].mxu0
    %v1808 = vadd.f32 %v1314, %v1807
    %v1809 = vpop.f32.mrb[0].mxu0
    %1810 = vmatprep.mubr.f32.mxu0 0.0
    %v1811 = vand.u32 %v322, 4294901760
    %v1812 = vsub.f32 %v322, %v1811
    %1813 = vmatmul.mubr.f32.gmra.mrb[0].mxu0 %v1812
    %v1814 = vpop.f32.mrb[0].mxu0
    %v1815 = vadd.f32 %v1320, %v1814
    %v1816 = vpop.f32.mrb[0].mxu0
    %1817 = vmatprep.mubr.f32.mxu0 0.0
    %v1818 = vand.u32 %v323, 4294901760
    %v1819 = vsub.f32 %v323, %v1818
    %1820 = vmatmul.mubr.f32.gmra.mrb[0].mxu0 %v1819
    %v1821 = vpop.f32.mrb[0].mxu0
    %v1822 = vadd.f32 %v1326, %v1821
    %v1823 = vpop.f32.mrb[0].mxu0
    %1824 = vmatprep.mubr.f32.mxu0 0.0
    %v1825 = vand.u32 %v324, 4294901760
    %v1826 = vsub.f32 %v324, %v1825
    %1827 = vmatmul.mubr.f32.gmra.mrb[0].mxu0 %v1826
    %v1828 = vpop.f32.mrb[0].mxu0
    %v1829 = vadd.f32 %v1332, %v1828
    %v1830 = vpop.f32.mrb[0].mxu0
    %1831 = vmatprep.mubr.f32.mxu0 0.0
    %v1832 = vand.u32 %v325, 4294901760
    %v1833 = vsub.f32 %v325, %v1832
    %1834 = vmatmul.mubr.f32.gmra.mrb[0].mxu0 %v1833
    %v1835 = vpop.f32.mrb[0].mxu0
    %v1836 = vadd.f32 %v1338, %v1835
    %v1837 = vpop.f32.mrb[0].mxu0
    %1838 = vmatprep.mubr.f32.mxu0 0.0
    %v1839 = vand.u32 %v326, 4294901760
    %v1840 = vsub.f32 %v326, %v1839
    %1841 = vmatmul.mubr.f32.gmra.mrb[0].mxu0 %v1840
    %v1842 = vpop.f32.mrb[0].mxu0
    %v1843 = vadd.f32 %v1344, %v1842
    %v1844 = vpop.f32.mrb[0].mxu0
    %1845 = vmatprep.mubr.f32.mxu0 0.0
    %v1846 = vand.u32 %v327, 4294901760
    %v1847 = vsub.f32 %v327, %v1846
    %1848 = vmatmul.mubr.f32.gmra.mrb[0].mxu0 %v1847
    %v1849 = vpop.f32.mrb[0].mxu0
    %v1850 = vadd.f32 %v1350, %v1849
    %v1851 = vpop.f32.mrb[0].mxu0
    %1852 = vmatprep.mubr.f32.mxu0 0.0
    %v1853 = vand.u32 %v328, 4294901760
    %v1854 = vsub.f32 %v328, %v1853
    %1855 = vmatmul.mubr.f32.gmra.mrb[0].mxu0 %v1854
    %v1856 = vpop.f32.mrb[0].mxu0
    %v1857 = vadd.f32 %v1356, %v1856
    %v1858 = vpop.f32.mrb[0].mxu0
    %1859 = vmatprep.mubr.f32.mxu0 0.0
    %v1860 = vand.u32 %v329, 4294901760
    %v1861 = vsub.f32 %v329, %v1860
    %1862 = vmatmul.mubr.f32.gmra.mrb[0].mxu0 %v1861
    %v1863 = vpop.f32.mrb[0].mxu0
    %v1864 = vadd.f32 %v1362, %v1863
    %v1865 = vpop.f32.mrb[0].mxu0
    %1866 = vmatprep.mubr.f32.mxu0 0.0
    %v1867 = vand.u32 %v330, 4294901760
    %v1868 = vsub.f32 %v330, %v1867
    %1869 = vmatmul.mubr.f32.gmra.mrb[0].mxu0 %v1868
    %v1870 = vpop.f32.mrb[0].mxu0
    %v1871 = vadd.f32 %v1368, %v1870
    %v1872 = vpop.f32.mrb[0].mxu0
    %1873 = vmatprep.mubr.f32.mxu0 0.0
    %v1874 = vand.u32 %v331, 4294901760
    %v1875 = vsub.f32 %v331, %v1874
    %1876 = vmatmul.mubr.f32.gmra.mrb[0].mxu0 %v1875
    %v1877 = vpop.f32.mrb[0].mxu0
    %v1878 = vadd.f32 %v1374, %v1877
    %v1879 = vpop.f32.mrb[0].mxu0
    %1880 = vmatprep.mubr.f32.mxu0 0.0
    %v1881 = vand.u32 %v332, 4294901760
    %v1882 = vsub.f32 %v332, %v1881
    %1883 = vmatmul.mubr.f32.gmra.mrb[0].mxu0 %v1882
    %v1884 = vpop.f32.mrb[0].mxu0
    %v1885 = vadd.f32 %v1380, %v1884
    %v1886 = vpop.f32.mrb[0].mxu0
    %1887 = vmatprep.mubr.f32.mxu0 0.0
    %v1888 = vand.u32 %v333, 4294901760
    %v1889 = vsub.f32 %v333, %v1888
    %1890 = vmatmul.mubr.f32.gmra.mrb[0].mxu0 %v1889
    %v1891 = vpop.f32.mrb[0].mxu0
    %v1892 = vadd.f32 %v1386, %v1891
    %v1893 = vpop.f32.mrb[0].mxu0
    %1894 = vmatprep.mubr.f32.mxu0 0.0
    %v1895 = vand.u32 %v334, 4294901760
    %v1896 = vsub.f32 %v334, %v1895
    %1897 = vmatmul.mubr.f32.gmra.mrb[0].mxu0 %v1896
    %v1898 = vpop.f32.mrb[0].mxu0
    %v1899 = vadd.f32 %v1392, %v1898
    %v1900 = vpop.f32.mrb[0].mxu0
    %1901 = vmatprep.mubr.f32.mxu0 0.0
    %v1902 = vand.u32 %v335, 4294901760
    %v1903 = vsub.f32 %v335, %v1902
    %1904 = vmatmul.mubr.f32.gmra.mrb[0].mxu0 %v1903
    %v1905 = vpop.f32.mrb[0].mxu0
    %v1906 = vadd.f32 %v1398, %v1905
    %v1907 = vpop.f32.mrb[0].mxu0
    %1908 = vmatprep.mubr.f32.mxu0 0.0
    %v1909 = vand.u32 %v336, 4294901760
    %v1910 = vsub.f32 %v336, %v1909
    %1911 = vmatmul.mubr.f32.gmra.mrb[0].mxu0 %v1910
    %v1912 = vpop.f32.mrb[0].mxu0
    %v1913 = vadd.f32 %v1404, %v1912
    %v1914 = vpop.f32.mrb[0].mxu0
    %1915 = vmatprep.mubr.f32.mxu0 0.0
    %v1916 = vand.u32 %v337, 4294901760
    %v1917 = vsub.f32 %v337, %v1916
    %1918 = vmatmul.mubr.f32.gmra.mrb[0].mxu0 %v1917
    %v1919 = vpop.f32.mrb[0].mxu0
    %v1920 = vadd.f32 %v1410, %v1919
    %v1921 = vpop.f32.mrb[0].mxu0
    %1922 = vmatprep.mubr.f32.mxu0 0.0
    %v1923 = vand.u32 %v338, 4294901760
    %v1924 = vsub.f32 %v338, %v1923
    %1925 = vmatmul.mubr.f32.gmra.mrb[0].mxu0 %v1924
    %v1926 = vpop.f32.mrb[0].mxu0
    %v1927 = vadd.f32 %v1416, %v1926
    %v1928 = vpop.f32.mrb[0].mxu0
    %1929 = vmatprep.mubr.f32.mxu0 0.0
    %v1930 = vand.u32 %v339, 4294901760
    %v1931 = vsub.f32 %v339, %v1930
    %1932 = vmatmul.mubr.f32.gmra.mrb[0].mxu0 %v1931
    %v1933 = vpop.f32.mrb[0].mxu0
    %v1934 = vadd.f32 %v1422, %v1933
    %v1935 = vpop.f32.mrb[0].mxu0
    %1936 = vmatprep.mubr.f32.mxu0 0.0
    %v1937 = vand.u32 %v340, 4294901760
    %v1938 = vsub.f32 %v340, %v1937
    %1939 = vmatmul.mubr.f32.gmra.mrb[0].mxu0 %v1938
    %v1940 = vpop.f32.mrb[0].mxu0
    %v1941 = vadd.f32 %v1428, %v1940
    %v1942 = vpop.f32.mrb[0].mxu0
    %1943 = vmatprep.mubr.f32.mxu0 0.0
    %v1944 = vand.u32 %v341, 4294901760
    %v1945 = vsub.f32 %v341, %v1944
    %1946 = vmatmul.mubr.f32.gmra.mrb[0].mxu0 %v1945
    %v1947 = vpop.f32.mrb[0].mxu0
    %v1948 = vadd.f32 %v1434, %v1947
    %v1949 = vpop.f32.mrb[0].mxu0
    %1950 = vmatprep.mubr.f32.mxu0 0.0
    %v1951 = vand.u32 %v342, 4294901760
    %v1952 = vsub.f32 %v342, %v1951
    %1953 = vmatmul.mubr.f32.gmra.mrb[0].mxu0 %v1952
    %v1954 = vpop.f32.mrb[0].mxu0
    %v1955 = vadd.f32 %v1440, %v1954
    %v1956 = vpop.f32.mrb[0].mxu0
    %1957 = vmatprep.mubr.f32.mxu0 0.0
    %v1958 = vand.u32 %v343, 4294901760
    %v1959 = vsub.f32 %v343, %v1958
    %1960 = vmatmul.mubr.f32.gmra.mrb[0].mxu0 %v1959
    %v1961 = vpop.f32.mrb[0].mxu0
    %v1962 = vadd.f32 %v1446, %v1961
    %v1963 = vpop.f32.mrb[0].mxu0
    %1964 = vmatprep.mubr.f32.mxu0 0.0
    %v1965 = vand.u32 %v344, 4294901760
    %v1966 = vsub.f32 %v344, %v1965
    %1967 = vmatmul.mubr.f32.gmra.mrb[0].mxu0 %v1966
    %v1968 = vpop.f32.mrb[0].mxu0
    %v1969 = vadd.f32 %v1452, %v1968
    %v1970 = vpop.f32.mrb[0].mxu0
    %1971 = vmatprep.mubr.f32.mxu0 0.0
    %v1972 = vand.u32 %v345, 4294901760
    %v1973 = vsub.f32 %v345, %v1972
    %1974 = vmatmul.mubr.f32.gmra.mrb[0].mxu0 %v1973
    %v1975 = vpop.f32.mrb[0].mxu0
    %v1976 = vadd.f32 %v1458, %v1975
    %v1977 = vpop.f32.mrb[0].mxu0
    %1978 = vmatprep.mubr.f32.mxu0 0.0
    %v1979 = vand.u32 %v346, 4294901760
    %v1980 = vsub.f32 %v346, %v1979
    %1981 = vmatmul.mubr.f32.gmra.mrb[0].mxu0 %v1980
    %v1982 = vpop.f32.mrb[0].mxu0
    %v1983 = vadd.f32 %v1464, %v1982
    %v1984 = vpop.f32.mrb[0].mxu0
    %1985 = vmatprep.mubr.f32.mxu0 0.0
    %v1986 = vand.u32 %v347, 4294901760
    %v1987 = vsub.f32 %v347, %v1986
    %1988 = vmatmul.mubr.f32.gmra.mrb[0].mxu0 %v1987
    %v1989 = vpop.f32.mrb[0].mxu0
    %v1990 = vadd.f32 %v1470, %v1989
    %v1991 = vpop.f32.mrb[0].mxu0
    %1992 = vmatprep.mubr.f32.mxu0 0.0
    %v1993 = vand.u32 %v348, 4294901760
    %v1994 = vsub.f32 %v348, %v1993
    %1995 = vmatmul.mubr.f32.gmra.mrb[0].mxu0 %v1994
    %v1996 = vpop.f32.mrb[0].mxu0
    %v1997 = vadd.f32 %v1476, %v1996
    %v1998 = vpop.f32.mrb[0].mxu0
    %1999 = vmatprep.mubr.f32.mxu0 0.0
    %v2000 = vand.u32 %v349, 4294901760
    %v2001 = vsub.f32 %v349, %v2000
    %2002 = vmatmul.mubr.f32.gmra.mrb[0].mxu0 %v2001
    %v2003 = vpop.f32.mrb[0].mxu0
    %v2004 = vadd.f32 %v1482, %v2003
    %v2005 = vpop.f32.mrb[0].mxu0
    %2006 = vmatprep.mubr.f32.mxu0 0.0
    %v2007 = vand.u32 %v350, 4294901760
    %v2008 = vsub.f32 %v350, %v2007
    %2009 = vmatmul.mubr.f32.gmra.mrb[0].mxu0 %v2008
    %v2010 = vpop.f32.mrb[0].mxu0
    %v2011 = vadd.f32 %v1488, %v2010
    %v2012 = vpop.f32.mrb[0].mxu0
    %2013 = vmatprep.mubr.f32.mxu0 0.0
    %v2014 = vand.u32 %v351, 4294901760
    %v2015 = vsub.f32 %v351, %v2014
    %2016 = vmatmul.mubr.f32.gmra.mrb[0].mxu0 %v2015
    %v2017 = vpop.f32.mrb[0].mxu0
    %v2018 = vadd.f32 %v1494, %v2017
    %v2019 = vpop.f32.mrb[0].mxu0
    %2020 = vmatprep.mubr.f32.mxu0 0.0
    %v2021 = vand.u32 %v352, 4294901760
    %v2022 = vsub.f32 %v352, %v2021
    %2023 = vmatmul.mubr.f32.gmra.mrb[0].mxu0 %v2022
    %v2024 = vpop.f32.mrb[0].mxu0
    %v2025 = vadd.f32 %v1500, %v2024
    %v2026 = vpop.f32.mrb[0].mxu0
    %2027 = vmatprep.mubr.f32.mxu0 0.0
    %v2028 = vand.u32 %v353, 4294901760
    %v2029 = vsub.f32 %v353, %v2028
    %2030 = vmatmul.mubr.f32.gmra.mrb[0].mxu0 %v2029
    %v2031 = vpop.f32.mrb[0].mxu0
    %v2032 = vadd.f32 %v1506, %v2031
    %v2033 = vpop.f32.mrb[0].mxu0
    %2034 = vmatprep.mubr.f32.mxu0 0.0
    %v2035 = vand.u32 %v354, 4294901760
    %v2036 = vsub.f32 %v354, %v2035
    %2037 = vmatmul.mubr.f32.gmra.mrb[0].mxu0 %v2036
    %v2038 = vpop.f32.mrb[0].mxu0
    %v2039 = vadd.f32 %v1512, %v2038
    %v2040 = vpop.f32.mrb[0].mxu0
    %2041 = vmatprep.mubr.f32.mxu0 0.0
    %v2042 = vand.u32 %v355, 4294901760
    %v2043 = vsub.f32 %v355, %v2042
    %2044 = vmatmul.mubr.f32.gmra.mrb[0].mxu0 %v2043
    %v2045 = vpop.f32.mrb[0].mxu0
    %v2046 = vadd.f32 %v1518, %v2045
    %v2047 = vpop.f32.mrb[0].mxu0
    %2048 = vmatprep.mubr.f32.mxu0 0.0
    %v2049 = vand.u32 %v356, 4294901760
    %v2050 = vsub.f32 %v356, %v2049
    %2051 = vmatmul.mubr.f32.gmra.mrb[0].mxu0 %v2050
    %v2052 = vpop.f32.mrb[0].mxu0
    %v2053 = vadd.f32 %v1524, %v2052
    %v2054 = vpop.f32.mrb[0].mxu0
    %2055 = vmatprep.mubr.f32.mxu0 0.0
    %v2056 = vand.u32 %v357, 4294901760
    %v2057 = vsub.f32 %v357, %v2056
    %2058 = vmatmul.mubr.f32.gmra.mrb[0].mxu0 %v2057
    %v2059 = vpop.f32.mrb[0].mxu0
    %v2060 = vadd.f32 %v1530, %v2059
    %v2061 = vpop.f32.mrb[0].mxu0
    %2062 = vmatprep.mubr.f32.mxu0 0.0
    %v2063 = vand.u32 %v358, 4294901760
    %v2064 = vsub.f32 %v358, %v2063
    %2065 = vmatmul.mubr.f32.gmra.mrb[0].mxu0 %v2064
    %v2066 = vpop.f32.mrb[0].mxu0
    %v2067 = vadd.f32 %v1536, %v2066
    %v2068 = vpop.f32.mrb[0].mxu0
    %2069 = vmatprep.mubr.f32.mxu0 0.0
    %v2070 = vand.u32 %v359, 4294901760
    %v2071 = vsub.f32 %v359, %v2070
    %2072 = vmatmul.mubr.f32.gmra.mrb[0].mxu0 %v2071
    %v2073 = vpop.f32.mrb[0].mxu0
    %v2074 = vadd.f32 %v1542, %v2073
    %v2075 = vpop.f32.mrb[0].mxu0
    %2076 = vmatprep.mubr.f32.mxu0 0.0
    %v2077 = vand.u32 %v360, 4294901760
    %v2078 = vsub.f32 %v360, %v2077
    %2079 = vmatmul.mubr.f32.gmra.mrb[0].mxu0 %v2078
    %v2080 = vpop.f32.mrb[0].mxu0
    %v2081 = vadd.f32 %v1548, %v2080
    %v2082 = vpop.f32.mrb[0].mxu0
    %2083 = vmatprep.mubr.f32.mxu0 0.0
    %v2084 = vand.u32 %v361, 4294901760
    %v2085 = vsub.f32 %v361, %v2084
    %2086 = vmatmul.mubr.f32.gmra.mrb[0].mxu0 %v2085
    %v2087 = vpop.f32.mrb[0].mxu0
    %v2088 = vadd.f32 %v1554, %v2087
    %v2089 = vpop.f32.mrb[0].mxu0
    %2090 = vmatprep.mubr.f32.mxu0 0.0
    %v2091 = vand.u32 %v362, 4294901760
    %v2092 = vsub.f32 %v362, %v2091
    %2093 = vmatmul.mubr.f32.gmra.mrb[0].mxu0 %v2092
    %v2094 = vpop.f32.mrb[0].mxu0
    %v2095 = vadd.f32 %v1560, %v2094
    %v2096 = vpop.f32.mrb[0].mxu0
    %2097 = vmatprep.mubr.f32.mxu0 0.0
    %v2098 = vand.u32 %v363, 4294901760
    %v2099 = vsub.f32 %v363, %v2098
    %2100 = vmatmul.mubr.f32.gmra.mrb[0].mxu0 %v2099
    %v2101 = vpop.f32.mrb[0].mxu0
    %v2102 = vadd.f32 %v1566, %v2101
    %v2103 = vpop.f32.mrb[0].mxu0
    %2104 = vmatprep.mubr.f32.mxu0 0.0
    %v2105 = vand.u32 %v364, 4294901760
    %v2106 = vsub.f32 %v364, %v2105
    %2107 = vmatmul.mubr.f32.gmra.mrb[0].mxu0 %v2106
    %v2108 = vpop.f32.mrb[0].mxu0
    %v2109 = vadd.f32 %v1572, %v2108
    %v2110 = vpop.f32.mrb[0].mxu0
    %2111 = vmatprep.mubr.f32.mxu0 0.0
    %v2112 = vand.u32 %v365, 4294901760
    %v2113 = vsub.f32 %v365, %v2112
    %2114 = vmatmul.mubr.f32.gmra.mrb[0].mxu0 %v2113
    %v2115 = vpop.f32.mrb[0].mxu0
    %v2116 = vadd.f32 %v1578, %v2115
    %v2117 = vpop.f32.mrb[0].mxu0
    %2118 = vmatprep.mubr.f32.mxu0 0.0
    %v2119 = vand.u32 %v366, 4294901760
    %v2120 = vsub.f32 %v366, %v2119
    %2121 = vmatmul.mubr.f32.gmra.mrb[0].mxu0 %v2120
    %v2122 = vpop.f32.mrb[0].mxu0
    %v2123 = vadd.f32 %v1584, %v2122
    %v2124 = vpop.f32.mrb[0].mxu0
    %2125 = vmatprep.mubr.f32.mxu0 0.0
    %v2126 = vand.u32 %v367, 4294901760
    %v2127 = vsub.f32 %v367, %v2126
    %2128 = vmatmul.mubr.f32.gmra.mrb[0].mxu0 %v2127
    %v2129 = vpop.f32.mrb[0].mxu0
    %v2130 = vadd.f32 %v1590, %v2129
    %v2131 = vpop.f32.mrb[0].mxu0
    %2132 = vmatprep.mubr.f32.mxu0 0.0
    %v2133 = vand.u32 %v368, 4294901760
    %v2134 = vsub.f32 %v368, %v2133
    %2135 = vmatmul.mubr.f32.gmra.mrb[0].mxu0 %v2134
    %v2136 = vpop.f32.mrb[0].mxu0
    %v2137 = vadd.f32 %v1596, %v2136
    %v2138 = vpop.f32.mrb[0].mxu0
    %2139 = vmatprep.mubr.f32.mxu0 0.0
    %v2140 = vand.u32 %v369, 4294901760
    %v2141 = vsub.f32 %v369, %v2140
    %2142 = vmatmul.mubr.f32.gmra.mrb[0].mxu0 %v2141
    %v2143 = vpop.f32.mrb[0].mxu0
    %v2144 = vadd.f32 %v1602, %v2143
    %v2145 = vpop.f32.mrb[0].mxu0
    %2146 = vmatprep.mubr.f32.mxu0 0.0
    %v2147 = vand.u32 %v370, 4294901760
    %v2148 = vsub.f32 %v370, %v2147
    %2149 = vmatmul.mubr.f32.gmra.mrb[0].mxu0 %v2148
    %v2150 = vpop.f32.mrb[0].mxu0
    %v2151 = vadd.f32 %v1608, %v2150
    %v2152 = vpop.f32.mrb[0].mxu0
    %2153 = vmatprep.mubr.f32.mxu0 0.0
    %v2154 = vand.u32 %v371, 4294901760
    %v2155 = vsub.f32 %v371, %v2154
    %2156 = vmatmul.mubr.f32.gmra.mrb[0].mxu0 %v2155
    %v2157 = vpop.f32.mrb[0].mxu0
    %v2158 = vadd.f32 %v1614, %v2157
    %v2159 = vpop.f32.mrb[0].mxu0
    %2160 = vmatprep.mubr.f32.mxu0 0.0
    %v2161 = vand.u32 %v372, 4294901760
    %v2162 = vsub.f32 %v372, %v2161
    %2163 = vmatmul.mubr.f32.gmra.mrb[0].mxu0 %v2162
    %v2164 = vpop.f32.mrb[0].mxu0
    %v2165 = vadd.f32 %v1620, %v2164
    %v2166 = vpop.f32.mrb[0].mxu0
    %2167 = vdwg.mxu0
    %2168 = vmatprep.subr.mxu0 0.0
    %v2169 = vand.u32 %v273, 4294901760
    %2170 = vmatpush1.xpose.msra.mxu0 %v2169
    %2171 = vmatprep.subr.mxu0 0.0
    %v2172 = vand.u32 %v274, 4294901760
    %2173 = vmatpush1.xpose.msra.mxu0 %v2172
    %2174 = vmatprep.subr.mxu0 0.0
    %v2175 = vand.u32 %v275, 4294901760
    %2176 = vmatpush1.xpose.msra.mxu0 %v2175
    %2177 = vmatprep.subr.mxu0 0.0
    %v2178 = vand.u32 %v276, 4294901760
    %2179 = vmatpush1.xpose.msra.mxu0 %v2178
    %2180 = vmatprep.subr.mxu0 0.0
    %v2181 = vand.u32 %v277, 4294901760
    %2182 = vmatpush1.xpose.msra.mxu0 %v2181
    %2183 = vmatprep.subr.mxu0 0.0
    %v2184 = vand.u32 %v278, 4294901760
    %2185 = vmatpush1.xpose.msra.mxu0 %v2184
    %2186 = vmatprep.subr.mxu0 0.0
    %v2187 = vand.u32 %v279, 4294901760
    %2188 = vmatpush1.xpose.msra.mxu0 %v2187
    %2189 = vmatprep.subr.mxu0 0.0
    %v2190 = vand.u32 %v280, 4294901760
    %2191 = vmatpush1.xpose.msra.mxu0 %v2190
    %2192 = vmatprep.subr.mxu0 0.0
    %v2193 = vand.u32 %v281, 4294901760
    %2194 = vmatpush1.xpose.msra.mxu0 %v2193
    %2195 = vmatprep.subr.mxu0 0.0
    %v2196 = vand.u32 %v282, 4294901760
    %2197 = vmatpush1.xpose.msra.mxu0 %v2196
    %2198 = vmatprep.subr.mxu0 0.0
    %v2199 = vand.u32 %v283, 4294901760
    %2200 = vmatpush1.xpose.msra.mxu0 %v2199
    %2201 = vmatprep.subr.mxu0 0.0
    %v2202 = vand.u32 %v284, 4294901760
    %2203 = vmatpush1.xpose.msra.mxu0 %v2202
    %2204 = vmatprep.subr.mxu0 0.0
    %v2205 = vand.u32 %v285, 4294901760
    %2206 = vmatpush1.xpose.msra.mxu0 %v2205
    %2207 = vmatprep.subr.mxu0 0.0
    %v2208 = vand.u32 %v286, 4294901760
    %2209 = vmatpush1.xpose.msra.mxu0 %v2208
    %2210 = vmatprep.subr.mxu0 0.0
    %v2211 = vand.u32 %v287, 4294901760
    %2212 = vmatpush1.xpose.msra.mxu0 %v2211
    %2213 = vmatprep.subr.mxu0 0.0
    %v2214 = vand.u32 %v288, 4294901760
    %2215 = vmatpush1.xpose.msra.mxu0 %v2214
    %2216 = vmatprep.subr.mxu0 0.0
    %2217 = vmatpush1.xpose.msra.mxu0 0.0
    %2218 = vmatprep.subr.mxu0 0.0
    %2219 = vmatpush1.xpose.msra.mxu0 0.0
    %2220 = vmatprep.subr.mxu0 0.0
    %2221 = vmatpush1.xpose.msra.mxu0 0.0
    %2222 = vmatprep.subr.mxu0 0.0
    %2223 = vmatpush1.xpose.msra.mxu0 0.0
    %2224 = vmatprep.subr.mxu0 0.0
    %2225 = vmatpush1.xpose.msra.mxu0 0.0
    %2226 = vmatprep.subr.mxu0 0.0
    %2227 = vmatpush1.xpose.msra.mxu0 0.0
    %2228 = vmatprep.subr.mxu0 0.0
    %2229 = vmatpush1.xpose.msra.mxu0 0.0
    %2230 = vmatprep.subr.mxu0 0.0
    %2231 = vmatpush1.xpose.msra.mxu0 0.0
    %2232 = vmatprep.subr.mxu0 0.0
    %2233 = vmatpush1.xpose.msra.mxu0 0.0
    %2234 = vmatprep.subr.mxu0 0.0
    %2235 = vmatpush1.xpose.msra.mxu0 0.0
    %2236 = vmatprep.subr.mxu0 0.0
    %2237 = vmatpush1.xpose.msra.mxu0 0.0
    %2238 = vmatprep.subr.mxu0 0.0
    %2239 = vmatpush1.xpose.msra.mxu0 0.0
    %2240 = vmatprep.subr.mxu0 0.0
    %2241 = vmatpush1.xpose.msra.mxu0 0.0
    %2242 = vmatprep.subr.mxu0 0.0
    %2243 = vmatpush1.xpose.msra.mxu0 0.0
    %2244 = vmatprep.subr.mxu0 0.0
    %2245 = vmatpush1.xpose.msra.mxu0 0.0
    %2246 = vmatprep.subr.mxu0 0.0
    %2247 = vmatpush1.xpose.msra.mxu0 0.0
    %2248 = vmatprep.mubr.f32.mxu0 0.0
    %v2249 = vand.u32 %v309, 4294901760
    %v2250 = vsub.f32 %v309, %v2249
    %v2251 = vand.u32 %v2250, 4294901760
    %2252 = vmatmul.mubr.f32.gmra.mrb[0].mxu0 %v2251
    %v2253 = vpop.f32.mrb[0].mxu0
    %v2254 = vadd.f32 %v1724, %v2253
    %v2255 = vpop.f32.mrb[0].mxu0
    %2256 = vmatprep.mubr.f32.mxu0 0.0
    %v2257 = vand.u32 %v310, 4294901760
    %v2258 = vsub.f32 %v310, %v2257
    %v2259 = vand.u32 %v2258, 4294901760
    %2260 = vmatmul.mubr.f32.gmra.mrb[0].mxu0 %v2259
    %v2261 = vpop.f32.mrb[0].mxu0
    %v2262 = vadd.f32 %v1731, %v2261
    %v2263 = vpop.f32.mrb[0].mxu0
    %2264 = vmatprep.mubr.f32.mxu0 0.0
    %v2265 = vand.u32 %v311, 4294901760
    %v2266 = vsub.f32 %v311, %v2265
    %v2267 = vand.u32 %v2266, 4294901760
    %2268 = vmatmul.mubr.f32.gmra.mrb[0].mxu0 %v2267
    %v2269 = vpop.f32.mrb[0].mxu0
    %v2270 = vadd.f32 %v1738, %v2269
    %v2271 = vpop.f32.mrb[0].mxu0
    %2272 = vmatprep.mubr.f32.mxu0 0.0
    %v2273 = vand.u32 %v312, 4294901760
    %v2274 = vsub.f32 %v312, %v2273
    %v2275 = vand.u32 %v2274, 4294901760
    %2276 = vmatmul.mubr.f32.gmra.mrb[0].mxu0 %v2275
    %v2277 = vpop.f32.mrb[0].mxu0
    %v2278 = vadd.f32 %v1745, %v2277
    %v2279 = vpop.f32.mrb[0].mxu0
    %2280 = vmatprep.mubr.f32.mxu0 0.0
    %v2281 = vand.u32 %v313, 4294901760
    %v2282 = vsub.f32 %v313, %v2281
    %v2283 = vand.u32 %v2282, 4294901760
    %2284 = vmatmul.mubr.f32.gmra.mrb[0].mxu0 %v2283
    %v2285 = vpop.f32.mrb[0].mxu0
    %v2286 = vadd.f32 %v1752, %v2285
    %v2287 = vpop.f32.mrb[0].mxu0
    %2288 = vmatprep.mubr.f32.mxu0 0.0
    %v2289 = vand.u32 %v314, 4294901760
    %v2290 = vsub.f32 %v314, %v2289
    %v2291 = vand.u32 %v2290, 4294901760
    %2292 = vmatmul.mubr.f32.gmra.mrb[0].mxu0 %v2291
    %v2293 = vpop.f32.mrb[0].mxu0
    %v2294 = vadd.f32 %v1759, %v2293
    %v2295 = vpop.f32.mrb[0].mxu0
    %2296 = vmatprep.mubr.f32.mxu0 0.0
    %v2297 = vand.u32 %v315, 4294901760
    %v2298 = vsub.f32 %v315, %v2297
    %v2299 = vand.u32 %v2298, 4294901760
    %2300 = vmatmul.mubr.f32.gmra.mrb[0].mxu0 %v2299
    %v2301 = vpop.f32.mrb[0].mxu0
    %v2302 = vadd.f32 %v1766, %v2301
    %v2303 = vpop.f32.mrb[0].mxu0
    %2304 = vmatprep.mubr.f32.mxu0 0.0
    %v2305 = vand.u32 %v316, 4294901760
    %v2306 = vsub.f32 %v316, %v2305
    %v2307 = vand.u32 %v2306, 4294901760
    %2308 = vmatmul.mubr.f32.gmra.mrb[0].mxu0 %v2307
    %v2309 = vpop.f32.mrb[0].mxu0
    %v2310 = vadd.f32 %v1773, %v2309
    %v2311 = vpop.f32.mrb[0].mxu0
    %2312 = vmatprep.mubr.f32.mxu0 0.0
    %v2313 = vand.u32 %v317, 4294901760
    %v2314 = vsub.f32 %v317, %v2313
    %v2315 = vand.u32 %v2314, 4294901760
    %2316 = vmatmul.mubr.f32.gmra.mrb[0].mxu0 %v2315
    %v2317 = vpop.f32.mrb[0].mxu0
    %v2318 = vadd.f32 %v1780, %v2317
    %v2319 = vpop.f32.mrb[0].mxu0
    %2320 = vmatprep.mubr.f32.mxu0 0.0
    %v2321 = vand.u32 %v318, 4294901760
    %v2322 = vsub.f32 %v318, %v2321
    %v2323 = vand.u32 %v2322, 4294901760
    %2324 = vmatmul.mubr.f32.gmra.mrb[0].mxu0 %v2323
    %v2325 = vpop.f32.mrb[0].mxu0
    %v2326 = vadd.f32 %v1787, %v2325
    %v2327 = vpop.f32.mrb[0].mxu0
    %2328 = vmatprep.mubr.f32.mxu0 0.0
    %v2329 = vand.u32 %v319, 4294901760
    %v2330 = vsub.f32 %v319, %v2329
    %v2331 = vand.u32 %v2330, 4294901760
    %2332 = vmatmul.mubr.f32.gmra.mrb[0].mxu0 %v2331
    %v2333 = vpop.f32.mrb[0].mxu0
    %v2334 = vadd.f32 %v1794, %v2333
    %v2335 = vpop.f32.mrb[0].mxu0
    %2336 = vmatprep.mubr.f32.mxu0 0.0
    %v2337 = vand.u32 %v320, 4294901760
    %v2338 = vsub.f32 %v320, %v2337
    %v2339 = vand.u32 %v2338, 4294901760
    %2340 = vmatmul.mubr.f32.gmra.mrb[0].mxu0 %v2339
    %v2341 = vpop.f32.mrb[0].mxu0
    %v2342 = vadd.f32 %v1801, %v2341
    %v2343 = vpop.f32.mrb[0].mxu0
    %2344 = vmatprep.mubr.f32.mxu0 0.0
    %v2345 = vand.u32 %v321, 4294901760
    %v2346 = vsub.f32 %v321, %v2345
    %v2347 = vand.u32 %v2346, 4294901760
    %2348 = vmatmul.mubr.f32.gmra.mrb[0].mxu0 %v2347
    %v2349 = vpop.f32.mrb[0].mxu0
    %v2350 = vadd.f32 %v1808, %v2349
    %v2351 = vpop.f32.mrb[0].mxu0
    %2352 = vmatprep.mubr.f32.mxu0 0.0
    %v2353 = vand.u32 %v322, 4294901760
    %v2354 = vsub.f32 %v322, %v2353
    %v2355 = vand.u32 %v2354, 4294901760
    %2356 = vmatmul.mubr.f32.gmra.mrb[0].mxu0 %v2355
    %v2357 = vpop.f32.mrb[0].mxu0
    %v2358 = vadd.f32 %v1815, %v2357
    %v2359 = vpop.f32.mrb[0].mxu0
    %2360 = vmatprep.mubr.f32.mxu0 0.0
    %v2361 = vand.u32 %v323, 4294901760
    %v2362 = vsub.f32 %v323, %v2361
    %v2363 = vand.u32 %v2362, 4294901760
    %2364 = vmatmul.mubr.f32.gmra.mrb[0].mxu0 %v2363
    %v2365 = vpop.f32.mrb[0].mxu0
    %v2366 = vadd.f32 %v1822, %v2365
    %v2367 = vpop.f32.mrb[0].mxu0
    %2368 = vmatprep.mubr.f32.mxu0 0.0
    %v2369 = vand.u32 %v324, 4294901760
    %v2370 = vsub.f32 %v324, %v2369
    %v2371 = vand.u32 %v2370, 4294901760
    %2372 = vmatmul.mubr.f32.gmra.mrb[0].mxu0 %v2371
    %v2373 = vpop.f32.mrb[0].mxu0
    %v2374 = vadd.f32 %v1829, %v2373
    %v2375 = vpop.f32.mrb[0].mxu0
    %2376 = vmatprep.mubr.f32.mxu0 0.0
    %v2377 = vand.u32 %v325, 4294901760
    %v2378 = vsub.f32 %v325, %v2377
    %v2379 = vand.u32 %v2378, 4294901760
    %2380 = vmatmul.mubr.f32.gmra.mrb[0].mxu0 %v2379
    %v2381 = vpop.f32.mrb[0].mxu0
    %v2382 = vadd.f32 %v1836, %v2381
    %v2383 = vpop.f32.mrb[0].mxu0
    %2384 = vmatprep.mubr.f32.mxu0 0.0
    %v2385 = vand.u32 %v326, 4294901760
    %v2386 = vsub.f32 %v326, %v2385
    %v2387 = vand.u32 %v2386, 4294901760
    %2388 = vmatmul.mubr.f32.gmra.mrb[0].mxu0 %v2387
    %v2389 = vpop.f32.mrb[0].mxu0
    %v2390 = vadd.f32 %v1843, %v2389
    %v2391 = vpop.f32.mrb[0].mxu0
    %2392 = vmatprep.mubr.f32.mxu0 0.0
    %v2393 = vand.u32 %v327, 4294901760
    %v2394 = vsub.f32 %v327, %v2393
    %v2395 = vand.u32 %v2394, 4294901760
    %2396 = vmatmul.mubr.f32.gmra.mrb[0].mxu0 %v2395
    %v2397 = vpop.f32.mrb[0].mxu0
    %v2398 = vadd.f32 %v1850, %v2397
    %v2399 = vpop.f32.mrb[0].mxu0
    %2400 = vmatprep.mubr.f32.mxu0 0.0
    %v2401 = vand.u32 %v328, 4294901760
    %v2402 = vsub.f32 %v328, %v2401
    %v2403 = vand.u32 %v2402, 4294901760
    %2404 = vmatmul.mubr.f32.gmra.mrb[0].mxu0 %v2403
    %v2405 = vpop.f32.mrb[0].mxu0
    %v2406 = vadd.f32 %v1857, %v2405
    %v2407 = vpop.f32.mrb[0].mxu0
    %2408 = vmatprep.mubr.f32.mxu0 0.0
    %v2409 = vand.u32 %v329, 4294901760
    %v2410 = vsub.f32 %v329, %v2409
    %v2411 = vand.u32 %v2410, 4294901760
    %2412 = vmatmul.mubr.f32.gmra.mrb[0].mxu0 %v2411
    %v2413 = vpop.f32.mrb[0].mxu0
    %v2414 = vadd.f32 %v1864, %v2413
    %v2415 = vpop.f32.mrb[0].mxu0
    %2416 = vmatprep.mubr.f32.mxu0 0.0
    %v2417 = vand.u32 %v330, 4294901760
    %v2418 = vsub.f32 %v330, %v2417
    %v2419 = vand.u32 %v2418, 4294901760
    %2420 = vmatmul.mubr.f32.gmra.mrb[0].mxu0 %v2419
    %v2421 = vpop.f32.mrb[0].mxu0
    %v2422 = vadd.f32 %v1871, %v2421
    %v2423 = vpop.f32.mrb[0].mxu0
    %2424 = vmatprep.mubr.f32.mxu0 0.0
    %v2425 = vand.u32 %v331, 4294901760
    %v2426 = vsub.f32 %v331, %v2425
    %v2427 = vand.u32 %v2426, 4294901760
    %2428 = vmatmul.mubr.f32.gmra.mrb[0].mxu0 %v2427
    %v2429 = vpop.f32.mrb[0].mxu0
    %v2430 = vadd.f32 %v1878, %v2429
    %v2431 = vpop.f32.mrb[0].mxu0
    %2432 = vmatprep.mubr.f32.mxu0 0.0
    %v2433 = vand.u32 %v332, 4294901760
    %v2434 = vsub.f32 %v332, %v2433
    %v2435 = vand.u32 %v2434, 4294901760
    %2436 = vmatmul.mubr.f32.gmra.mrb[0].mxu0 %v2435
    %v2437 = vpop.f32.mrb[0].mxu0
    %v2438 = vadd.f32 %v1885, %v2437
    %v2439 = vpop.f32.mrb[0].mxu0
    %2440 = vmatprep.mubr.f32.mxu0 0.0
    %v2441 = vand.u32 %v333, 4294901760
    %v2442 = vsub.f32 %v333, %v2441
    %v2443 = vand.u32 %v2442, 4294901760
    %2444 = vmatmul.mubr.f32.gmra.mrb[0].mxu0 %v2443
    %v2445 = vpop.f32.mrb[0].mxu0
    %v2446 = vadd.f32 %v1892, %v2445
    %v2447 = vpop.f32.mrb[0].mxu0
    %2448 = vmatprep.mubr.f32.mxu0 0.0
    %v2449 = vand.u32 %v334, 4294901760
    %v2450 = vsub.f32 %v334, %v2449
    %v2451 = vand.u32 %v2450, 4294901760
    %2452 = vmatmul.mubr.f32.gmra.mrb[0].mxu0 %v2451
    %v2453 = vpop.f32.mrb[0].mxu0
    %v2454 = vadd.f32 %v1899, %v2453
    %v2455 = vpop.f32.mrb[0].mxu0
    %2456 = vmatprep.mubr.f32.mxu0 0.0
    %v2457 = vand.u32 %v335, 4294901760
    %v2458 = vsub.f32 %v335, %v2457
    %v2459 = vand.u32 %v2458, 4294901760
    %2460 = vmatmul.mubr.f32.gmra.mrb[0].mxu0 %v2459
    %v2461 = vpop.f32.mrb[0].mxu0
    %v2462 = vadd.f32 %v1906, %v2461
    %v2463 = vpop.f32.mrb[0].mxu0
    %2464 = vmatprep.mubr.f32.mxu0 0.0
    %v2465 = vand.u32 %v336, 4294901760
    %v2466 = vsub.f32 %v336, %v2465
    %v2467 = vand.u32 %v2466, 4294901760
    %2468 = vmatmul.mubr.f32.gmra.mrb[0].mxu0 %v2467
    %v2469 = vpop.f32.mrb[0].mxu0
    %v2470 = vadd.f32 %v1913, %v2469
    %v2471 = vpop.f32.mrb[0].mxu0
    %2472 = vmatprep.mubr.f32.mxu0 0.0
    %v2473 = vand.u32 %v337, 4294901760
    %v2474 = vsub.f32 %v337, %v2473
    %v2475 = vand.u32 %v2474, 4294901760
    %2476 = vmatmul.mubr.f32.gmra.mrb[0].mxu0 %v2475
    %v2477 = vpop.f32.mrb[0].mxu0
    %v2478 = vadd.f32 %v1920, %v2477
    %v2479 = vpop.f32.mrb[0].mxu0
    %2480 = vmatprep.mubr.f32.mxu0 0.0
    %v2481 = vand.u32 %v338, 4294901760
    %v2482 = vsub.f32 %v338, %v2481
    %v2483 = vand.u32 %v2482, 4294901760
    %2484 = vmatmul.mubr.f32.gmra.mrb[0].mxu0 %v2483
    %v2485 = vpop.f32.mrb[0].mxu0
    %v2486 = vadd.f32 %v1927, %v2485
    %v2487 = vpop.f32.mrb[0].mxu0
    %2488 = vmatprep.mubr.f32.mxu0 0.0
    %v2489 = vand.u32 %v339, 4294901760
    %v2490 = vsub.f32 %v339, %v2489
    %v2491 = vand.u32 %v2490, 4294901760
    %2492 = vmatmul.mubr.f32.gmra.mrb[0].mxu0 %v2491
    %v2493 = vpop.f32.mrb[0].mxu0
    %v2494 = vadd.f32 %v1934, %v2493
    %v2495 = vpop.f32.mrb[0].mxu0
    %2496 = vmatprep.mubr.f32.mxu0 0.0
    %v2497 = vand.u32 %v340, 4294901760
    %v2498 = vsub.f32 %v340, %v2497
    %v2499 = vand.u32 %v2498, 4294901760
    %2500 = vmatmul.mubr.f32.gmra.mrb[0].mxu0 %v2499
    %v2501 = vpop.f32.mrb[0].mxu0
    %v2502 = vadd.f32 %v1941, %v2501
    %v2503 = vpop.f32.mrb[0].mxu0
    %2504 = vmatprep.mubr.f32.mxu0 0.0
    %v2505 = vand.u32 %v341, 4294901760
    %v2506 = vsub.f32 %v341, %v2505
    %v2507 = vand.u32 %v2506, 4294901760
    %2508 = vmatmul.mubr.f32.gmra.mrb[0].mxu0 %v2507
    %v2509 = vpop.f32.mrb[0].mxu0
    %v2510 = vadd.f32 %v1948, %v2509
    %v2511 = vpop.f32.mrb[0].mxu0
    %2512 = vmatprep.mubr.f32.mxu0 0.0
    %v2513 = vand.u32 %v342, 4294901760
    %v2514 = vsub.f32 %v342, %v2513
    %v2515 = vand.u32 %v2514, 4294901760
    %2516 = vmatmul.mubr.f32.gmra.mrb[0].mxu0 %v2515
    %v2517 = vpop.f32.mrb[0].mxu0
    %v2518 = vadd.f32 %v1955, %v2517
    %v2519 = vpop.f32.mrb[0].mxu0
    %2520 = vmatprep.mubr.f32.mxu0 0.0
    %v2521 = vand.u32 %v343, 4294901760
    %v2522 = vsub.f32 %v343, %v2521
    %v2523 = vand.u32 %v2522, 4294901760
    %2524 = vmatmul.mubr.f32.gmra.mrb[0].mxu0 %v2523
    %v2525 = vpop.f32.mrb[0].mxu0
    %v2526 = vadd.f32 %v1962, %v2525
    %v2527 = vpop.f32.mrb[0].mxu0
    %2528 = vmatprep.mubr.f32.mxu0 0.0
    %v2529 = vand.u32 %v344, 4294901760
    %v2530 = vsub.f32 %v344, %v2529
    %v2531 = vand.u32 %v2530, 4294901760
    %2532 = vmatmul.mubr.f32.gmra.mrb[0].mxu0 %v2531
    %v2533 = vpop.f32.mrb[0].mxu0
    %v2534 = vadd.f32 %v1969, %v2533
    %v2535 = vpop.f32.mrb[0].mxu0
    %2536 = vmatprep.mubr.f32.mxu0 0.0
    %v2537 = vand.u32 %v345, 4294901760
    %v2538 = vsub.f32 %v345, %v2537
    %v2539 = vand.u32 %v2538, 4294901760
    %2540 = vmatmul.mubr.f32.gmra.mrb[0].mxu0 %v2539
    %v2541 = vpop.f32.mrb[0].mxu0
    %v2542 = vadd.f32 %v1976, %v2541
    %v2543 = vpop.f32.mrb[0].mxu0
    %2544 = vmatprep.mubr.f32.mxu0 0.0
    %v2545 = vand.u32 %v346, 4294901760
    %v2546 = vsub.f32 %v346, %v2545
    %v2547 = vand.u32 %v2546, 4294901760
    %2548 = vmatmul.mubr.f32.gmra.mrb[0].mxu0 %v2547
    %v2549 = vpop.f32.mrb[0].mxu0
    %v2550 = vadd.f32 %v1983, %v2549
    %v2551 = vpop.f32.mrb[0].mxu0
    %2552 = vmatprep.mubr.f32.mxu0 0.0
    %v2553 = vand.u32 %v347, 4294901760
    %v2554 = vsub.f32 %v347, %v2553
    %v2555 = vand.u32 %v2554, 4294901760
    %2556 = vmatmul.mubr.f32.gmra.mrb[0].mxu0 %v2555
    %v2557 = vpop.f32.mrb[0].mxu0
    %v2558 = vadd.f32 %v1990, %v2557
    %v2559 = vpop.f32.mrb[0].mxu0
    %2560 = vmatprep.mubr.f32.mxu0 0.0
    %v2561 = vand.u32 %v348, 4294901760
    %v2562 = vsub.f32 %v348, %v2561
    %v2563 = vand.u32 %v2562, 4294901760
    %2564 = vmatmul.mubr.f32.gmra.mrb[0].mxu0 %v2563
    %v2565 = vpop.f32.mrb[0].mxu0
    %v2566 = vadd.f32 %v1997, %v2565
    %v2567 = vpop.f32.mrb[0].mxu0
    %2568 = vmatprep.mubr.f32.mxu0 0.0
    %v2569 = vand.u32 %v349, 4294901760
    %v2570 = vsub.f32 %v349, %v2569
    %v2571 = vand.u32 %v2570, 4294901760
    %2572 = vmatmul.mubr.f32.gmra.mrb[0].mxu0 %v2571
    %v2573 = vpop.f32.mrb[0].mxu0
    %v2574 = vadd.f32 %v2004, %v2573
    %v2575 = vpop.f32.mrb[0].mxu0
    %2576 = vmatprep.mubr.f32.mxu0 0.0
    %v2577 = vand.u32 %v350, 4294901760
    %v2578 = vsub.f32 %v350, %v2577
    %v2579 = vand.u32 %v2578, 4294901760
    %2580 = vmatmul.mubr.f32.gmra.mrb[0].mxu0 %v2579
    %v2581 = vpop.f32.mrb[0].mxu0
    %v2582 = vadd.f32 %v2011, %v2581
    %v2583 = vpop.f32.mrb[0].mxu0
    %2584 = vmatprep.mubr.f32.mxu0 0.0
    %v2585 = vand.u32 %v351, 4294901760
    %v2586 = vsub.f32 %v351, %v2585
    %v2587 = vand.u32 %v2586, 4294901760
    %2588 = vmatmul.mubr.f32.gmra.mrb[0].mxu0 %v2587
    %v2589 = vpop.f32.mrb[0].mxu0
    %v2590 = vadd.f32 %v2018, %v2589
    %v2591 = vpop.f32.mrb[0].mxu0
    %2592 = vmatprep.mubr.f32.mxu0 0.0
    %v2593 = vand.u32 %v352, 4294901760
    %v2594 = vsub.f32 %v352, %v2593
    %v2595 = vand.u32 %v2594, 4294901760
    %2596 = vmatmul.mubr.f32.gmra.mrb[0].mxu0 %v2595
    %v2597 = vpop.f32.mrb[0].mxu0
    %v2598 = vadd.f32 %v2025, %v2597
    %v2599 = vpop.f32.mrb[0].mxu0
    %2600 = vmatprep.mubr.f32.mxu0 0.0
    %v2601 = vand.u32 %v353, 4294901760
    %v2602 = vsub.f32 %v353, %v2601
    %v2603 = vand.u32 %v2602, 4294901760
    %2604 = vmatmul.mubr.f32.gmra.mrb[0].mxu0 %v2603
    %v2605 = vpop.f32.mrb[0].mxu0
    %v2606 = vadd.f32 %v2032, %v2605
    %v2607 = vpop.f32.mrb[0].mxu0
    %2608 = vmatprep.mubr.f32.mxu0 0.0
    %v2609 = vand.u32 %v354, 4294901760
    %v2610 = vsub.f32 %v354, %v2609
    %v2611 = vand.u32 %v2610, 4294901760
    %2612 = vmatmul.mubr.f32.gmra.mrb[0].mxu0 %v2611
    %v2613 = vpop.f32.mrb[0].mxu0
    %v2614 = vadd.f32 %v2039, %v2613
    %v2615 = vpop.f32.mrb[0].mxu0
    %2616 = vmatprep.mubr.f32.mxu0 0.0
    %v2617 = vand.u32 %v355, 4294901760
    %v2618 = vsub.f32 %v355, %v2617
    %v2619 = vand.u32 %v2618, 4294901760
    %2620 = vmatmul.mubr.f32.gmra.mrb[0].mxu0 %v2619
    %v2621 = vpop.f32.mrb[0].mxu0
    %v2622 = vadd.f32 %v2046, %v2621
    %v2623 = vpop.f32.mrb[0].mxu0
    %2624 = vmatprep.mubr.f32.mxu0 0.0
    %v2625 = vand.u32 %v356, 4294901760
    %v2626 = vsub.f32 %v356, %v2625
    %v2627 = vand.u32 %v2626, 4294901760
    %2628 = vmatmul.mubr.f32.gmra.mrb[0].mxu0 %v2627
    %v2629 = vpop.f32.mrb[0].mxu0
    %v2630 = vadd.f32 %v2053, %v2629
    %v2631 = vpop.f32.mrb[0].mxu0
    %2632 = vmatprep.mubr.f32.mxu0 0.0
    %v2633 = vand.u32 %v357, 4294901760
    %v2634 = vsub.f32 %v357, %v2633
    %v2635 = vand.u32 %v2634, 4294901760
    %2636 = vmatmul.mubr.f32.gmra.mrb[0].mxu0 %v2635
    %v2637 = vpop.f32.mrb[0].mxu0
    %v2638 = vadd.f32 %v2060, %v2637
    %v2639 = vpop.f32.mrb[0].mxu0
    %2640 = vmatprep.mubr.f32.mxu0 0.0
    %v2641 = vand.u32 %v358, 4294901760
    %v2642 = vsub.f32 %v358, %v2641
    %v2643 = vand.u32 %v2642, 4294901760
    %2644 = vmatmul.mubr.f32.gmra.mrb[0].mxu0 %v2643
    %v2645 = vpop.f32.mrb[0].mxu0
    %v2646 = vadd.f32 %v2067, %v2645
    %v2647 = vpop.f32.mrb[0].mxu0
    %2648 = vmatprep.mubr.f32.mxu0 0.0
    %v2649 = vand.u32 %v359, 4294901760
    %v2650 = vsub.f32 %v359, %v2649
    %v2651 = vand.u32 %v2650, 4294901760
    %2652 = vmatmul.mubr.f32.gmra.mrb[0].mxu0 %v2651
    %v2653 = vpop.f32.mrb[0].mxu0
    %v2654 = vadd.f32 %v2074, %v2653
    %v2655 = vpop.f32.mrb[0].mxu0
    %2656 = vmatprep.mubr.f32.mxu0 0.0
    %v2657 = vand.u32 %v360, 4294901760
    %v2658 = vsub.f32 %v360, %v2657
    %v2659 = vand.u32 %v2658, 4294901760
    %2660 = vmatmul.mubr.f32.gmra.mrb[0].mxu0 %v2659
    %v2661 = vpop.f32.mrb[0].mxu0
    %v2662 = vadd.f32 %v2081, %v2661
    %v2663 = vpop.f32.mrb[0].mxu0
    %2664 = vmatprep.mubr.f32.mxu0 0.0
    %v2665 = vand.u32 %v361, 4294901760
    %v2666 = vsub.f32 %v361, %v2665
    %v2667 = vand.u32 %v2666, 4294901760
    %2668 = vmatmul.mubr.f32.gmra.mrb[0].mxu0 %v2667
    %v2669 = vpop.f32.mrb[0].mxu0
    %v2670 = vadd.f32 %v2088, %v2669
    %v2671 = vpop.f32.mrb[0].mxu0
    %2672 = vmatprep.mubr.f32.mxu0 0.0
    %v2673 = vand.u32 %v362, 4294901760
    %v2674 = vsub.f32 %v362, %v2673
    %v2675 = vand.u32 %v2674, 4294901760
    %2676 = vmatmul.mubr.f32.gmra.mrb[0].mxu0 %v2675
    %v2677 = vpop.f32.mrb[0].mxu0
    %v2678 = vadd.f32 %v2095, %v2677
    %v2679 = vpop.f32.mrb[0].mxu0
    %2680 = vmatprep.mubr.f32.mxu0 0.0
    %v2681 = vand.u32 %v363, 4294901760
    %v2682 = vsub.f32 %v363, %v2681
    %v2683 = vand.u32 %v2682, 4294901760
    %2684 = vmatmul.mubr.f32.gmra.mrb[0].mxu0 %v2683
    %v2685 = vpop.f32.mrb[0].mxu0
    %v2686 = vadd.f32 %v2102, %v2685
    %v2687 = vpop.f32.mrb[0].mxu0
    %2688 = vmatprep.mubr.f32.mxu0 0.0
    %v2689 = vand.u32 %v364, 4294901760
    %v2690 = vsub.f32 %v364, %v2689
    %v2691 = vand.u32 %v2690, 4294901760
    %2692 = vmatmul.mubr.f32.gmra.mrb[0].mxu0 %v2691
    %v2693 = vpop.f32.mrb[0].mxu0
    %v2694 = vadd.f32 %v2109, %v2693
    %v2695 = vpop.f32.mrb[0].mxu0
    %2696 = vmatprep.mubr.f32.mxu0 0.0
    %v2697 = vand.u32 %v365, 4294901760
    %v2698 = vsub.f32 %v365, %v2697
    %v2699 = vand.u32 %v2698, 4294901760
    %2700 = vmatmul.mubr.f32.gmra.mrb[0].mxu0 %v2699
    %v2701 = vpop.f32.mrb[0].mxu0
    %v2702 = vadd.f32 %v2116, %v2701
    %v2703 = vpop.f32.mrb[0].mxu0
    %2704 = vmatprep.mubr.f32.mxu0 0.0
    %v2705 = vand.u32 %v366, 4294901760
    %v2706 = vsub.f32 %v366, %v2705
    %v2707 = vand.u32 %v2706, 4294901760
    %2708 = vmatmul.mubr.f32.gmra.mrb[0].mxu0 %v2707
    %v2709 = vpop.f32.mrb[0].mxu0
    %v2710 = vadd.f32 %v2123, %v2709
    %v2711 = vpop.f32.mrb[0].mxu0
    %2712 = vmatprep.mubr.f32.mxu0 0.0
    %v2713 = vand.u32 %v367, 4294901760
    %v2714 = vsub.f32 %v367, %v2713
    %v2715 = vand.u32 %v2714, 4294901760
    %2716 = vmatmul.mubr.f32.gmra.mrb[0].mxu0 %v2715
    %v2717 = vpop.f32.mrb[0].mxu0
    %v2718 = vadd.f32 %v2130, %v2717
    %v2719 = vpop.f32.mrb[0].mxu0
    %2720 = vmatprep.mubr.f32.mxu0 0.0
    %v2721 = vand.u32 %v368, 4294901760
    %v2722 = vsub.f32 %v368, %v2721
    %v2723 = vand.u32 %v2722, 4294901760
    %2724 = vmatmul.mubr.f32.gmra.mrb[0].mxu0 %v2723
    %v2725 = vpop.f32.mrb[0].mxu0
    %v2726 = vadd.f32 %v2137, %v2725
    %v2727 = vpop.f32.mrb[0].mxu0
    %2728 = vmatprep.mubr.f32.mxu0 0.0
    %v2729 = vand.u32 %v369, 4294901760
    %v2730 = vsub.f32 %v369, %v2729
    %v2731 = vand.u32 %v2730, 4294901760
    %2732 = vmatmul.mubr.f32.gmra.mrb[0].mxu0 %v2731
    %v2733 = vpop.f32.mrb[0].mxu0
    %v2734 = vadd.f32 %v2144, %v2733
    %v2735 = vpop.f32.mrb[0].mxu0
    %2736 = vmatprep.mubr.f32.mxu0 0.0
    %v2737 = vand.u32 %v370, 4294901760
    %v2738 = vsub.f32 %v370, %v2737
    %v2739 = vand.u32 %v2738, 4294901760
    %2740 = vmatmul.mubr.f32.gmra.mrb[0].mxu0 %v2739
    %v2741 = vpop.f32.mrb[0].mxu0
    %v2742 = vadd.f32 %v2151, %v2741
    %v2743 = vpop.f32.mrb[0].mxu0
    %2744 = vmatprep.mubr.f32.mxu0 0.0
    %v2745 = vand.u32 %v371, 4294901760
    %v2746 = vsub.f32 %v371, %v2745
    %v2747 = vand.u32 %v2746, 4294901760
    %2748 = vmatmul.mubr.f32.gmra.mrb[0].mxu0 %v2747
    %v2749 = vpop.f32.mrb[0].mxu0
    %v2750 = vadd.f32 %v2158, %v2749
    %v2751 = vpop.f32.mrb[0].mxu0
    %2752 = vmatprep.mubr.f32.mxu0 0.0
    %v2753 = vand.u32 %v372, 4294901760
    %v2754 = vsub.f32 %v372, %v2753
    %v2755 = vand.u32 %v2754, 4294901760
    %2756 = vmatmul.mubr.f32.gmra.mrb[0].mxu0 %v2755
    %v2757 = vpop.f32.mrb[0].mxu0
    %v2758 = vadd.f32 %v2165, %v2757
    %v2759 = vpop.f32.mrb[0].mxu0
    %2760 = vdwg.mxu0
    %2761 = vmatprep.subr.mxu0 0.0
    %v2762 = vand.u32 %v273, 4294901760
    %v2763 = vsub.f32 %v273, %v2762
    %v2764 = vand.u32 %v2763, 4294901760
    %2765 = vmatpush1.xpose.msra.mxu0 %v2764
    %2766 = vmatprep.subr.mxu0 0.0
    %v2767 = vand.u32 %v274, 4294901760
    %v2768 = vsub.f32 %v274, %v2767
    %v2769 = vand.u32 %v2768, 4294901760
    %2770 = vmatpush1.xpose.msra.mxu0 %v2769
    %2771 = vmatprep.subr.mxu0 0.0
    %v2772 = vand.u32 %v275, 4294901760
    %v2773 = vsub.f32 %v275, %v2772
    %v2774 = vand.u32 %v2773, 4294901760
    %2775 = vmatpush1.xpose.msra.mxu0 %v2774
    %2776 = vmatprep.subr.mxu0 0.0
    %v2777 = vand.u32 %v276, 4294901760
    %v2778 = vsub.f32 %v276, %v2777
    %v2779 = vand.u32 %v2778, 4294901760
    %2780 = vmatpush1.xpose.msra.mxu0 %v2779
    %2781 = vmatprep.subr.mxu0 0.0
    %v2782 = vand.u32 %v277, 4294901760
    %v2783 = vsub.f32 %v277, %v2782
    %v2784 = vand.u32 %v2783, 4294901760
    %2785 = vmatpush1.xpose.msra.mxu0 %v2784
    %2786 = vmatprep.subr.mxu0 0.0
    %v2787 = vand.u32 %v278, 4294901760
    %v2788 = vsub.f32 %v278, %v2787
    %v2789 = vand.u32 %v2788, 4294901760
    %2790 = vmatpush1.xpose.msra.mxu0 %v2789
    %2791 = vmatprep.subr.mxu0 0.0
    %v2792 = vand.u32 %v279, 4294901760
    %v2793 = vsub.f32 %v279, %v2792
    %v2794 = vand.u32 %v2793, 4294901760
    %2795 = vmatpush1.xpose.msra.mxu0 %v2794
    %2796 = vmatprep.subr.mxu0 0.0
    %v2797 = vand.u32 %v280, 4294901760
    %v2798 = vsub.f32 %v280, %v2797
    %v2799 = vand.u32 %v2798, 4294901760
    %2800 = vmatpush1.xpose.msra.mxu0 %v2799
    %2801 = vmatprep.subr.mxu0 0.0
    %v2802 = vand.u32 %v281, 4294901760
    %v2803 = vsub.f32 %v281, %v2802
    %v2804 = vand.u32 %v2803, 4294901760
    %2805 = vmatpush1.xpose.msra.mxu0 %v2804
    %2806 = vmatprep.subr.mxu0 0.0
    %v2807 = vand.u32 %v282, 4294901760
    %v2808 = vsub.f32 %v282, %v2807
    %v2809 = vand.u32 %v2808, 4294901760
    %2810 = vmatpush1.xpose.msra.mxu0 %v2809
    %2811 = vmatprep.subr.mxu0 0.0
    %v2812 = vand.u32 %v283, 4294901760
    %v2813 = vsub.f32 %v283, %v2812
    %v2814 = vand.u32 %v2813, 4294901760
    %2815 = vmatpush1.xpose.msra.mxu0 %v2814
    %2816 = vmatprep.subr.mxu0 0.0
    %v2817 = vand.u32 %v284, 4294901760
    %v2818 = vsub.f32 %v284, %v2817
    %v2819 = vand.u32 %v2818, 4294901760
    %2820 = vmatpush1.xpose.msra.mxu0 %v2819
    %2821 = vmatprep.subr.mxu0 0.0
    %v2822 = vand.u32 %v285, 4294901760
    %v2823 = vsub.f32 %v285, %v2822
    %v2824 = vand.u32 %v2823, 4294901760
    %2825 = vmatpush1.xpose.msra.mxu0 %v2824
    %2826 = vmatprep.subr.mxu0 0.0
    %v2827 = vand.u32 %v286, 4294901760
    %v2828 = vsub.f32 %v286, %v2827
    %v2829 = vand.u32 %v2828, 4294901760
    %2830 = vmatpush1.xpose.msra.mxu0 %v2829
    %2831 = vmatprep.subr.mxu0 0.0
    %v2832 = vand.u32 %v287, 4294901760
    %v2833 = vsub.f32 %v287, %v2832
    %v2834 = vand.u32 %v2833, 4294901760
    %2835 = vmatpush1.xpose.msra.mxu0 %v2834
    %2836 = vmatprep.subr.mxu0 0.0
    %v2837 = vand.u32 %v288, 4294901760
    %v2838 = vsub.f32 %v288, %v2837
    %v2839 = vand.u32 %v2838, 4294901760
    %2840 = vmatpush1.xpose.msra.mxu0 %v2839
    %2841 = vmatprep.subr.mxu0 0.0
    %2842 = vmatpush1.xpose.msra.mxu0 0.0
    %2843 = vmatprep.subr.mxu0 0.0
    %2844 = vmatpush1.xpose.msra.mxu0 0.0
    %2845 = vmatprep.subr.mxu0 0.0
    %2846 = vmatpush1.xpose.msra.mxu0 0.0
    %2847 = vmatprep.subr.mxu0 0.0
    %2848 = vmatpush1.xpose.msra.mxu0 0.0
    %2849 = vmatprep.subr.mxu0 0.0
    %2850 = vmatpush1.xpose.msra.mxu0 0.0
    %2851 = vmatprep.subr.mxu0 0.0
    %2852 = vmatpush1.xpose.msra.mxu0 0.0
    %2853 = vmatprep.subr.mxu0 0.0
    %2854 = vmatpush1.xpose.msra.mxu0 0.0
    %2855 = vmatprep.subr.mxu0 0.0
    %2856 = vmatpush1.xpose.msra.mxu0 0.0
    %2857 = vmatprep.subr.mxu0 0.0
    %2858 = vmatpush1.xpose.msra.mxu0 0.0
    %2859 = vmatprep.subr.mxu0 0.0
    %2860 = vmatpush1.xpose.msra.mxu0 0.0
    %2861 = vmatprep.subr.mxu0 0.0
    %2862 = vmatpush1.xpose.msra.mxu0 0.0
    %2863 = vmatprep.subr.mxu0 0.0
    %2864 = vmatpush1.xpose.msra.mxu0 0.0
    %2865 = vmatprep.subr.mxu0 0.0
    %2866 = vmatpush1.xpose.msra.mxu0 0.0
    %2867 = vmatprep.subr.mxu0 0.0
    %2868 = vmatpush1.xpose.msra.mxu0 0.0
    %2869 = vmatprep.subr.mxu0 0.0
    %2870 = vmatpush1.xpose.msra.mxu0 0.0
    %2871 = vmatprep.subr.mxu0 0.0
    %2872 = vmatpush1.xpose.msra.mxu0 0.0
    %2873 = vmatprep.mubr.f32.mxu0 0.0
    %v2874 = vand.u32 %v309, 4294901760
    %2875 = vmatmul.mubr.f32.gmra.mrb[0].mxu0 %v2874
    %v2876 = vpop.f32.mrb[0].mxu0
    %v2877 = vadd.f32 %v2254, %v2876
    %v2878 = vpop.f32.mrb[0].mxu0
    %2879 = vmatprep.mubr.f32.mxu0 0.0
    %v2880 = vand.u32 %v310, 4294901760
    %2881 = vmatmul.mubr.f32.gmra.mrb[0].mxu0 %v2880
    %v2882 = vpop.f32.mrb[0].mxu0
    %v2883 = vadd.f32 %v2262, %v2882
    %v2884 = vpop.f32.mrb[0].mxu0
    %2885 = vmatprep.mubr.f32.mxu0 0.0
    %v2886 = vand.u32 %v311, 4294901760
    %2887 = vmatmul.mubr.f32.gmra.mrb[0].mxu0 %v2886
    %v2888 = vpop.f32.mrb[0].mxu0
    %v2889 = vadd.f32 %v2270, %v2888
    %v2890 = vpop.f32.mrb[0].mxu0
    %2891 = vmatprep.mubr.f32.mxu0 0.0
    %v2892 = vand.u32 %v312, 4294901760
    %2893 = vmatmul.mubr.f32.gmra.mrb[0].mxu0 %v2892
    %v2894 = vpop.f32.mrb[0].mxu0
    %v2895 = vadd.f32 %v2278, %v2894
    %v2896 = vpop.f32.mrb[0].mxu0
    %2897 = vmatprep.mubr.f32.mxu0 0.0
    %v2898 = vand.u32 %v313, 4294901760
    %2899 = vmatmul.mubr.f32.gmra.mrb[0].mxu0 %v2898
    %v2900 = vpop.f32.mrb[0].mxu0
    %v2901 = vadd.f32 %v2286, %v2900
    %v2902 = vpop.f32.mrb[0].mxu0
    %2903 = vmatprep.mubr.f32.mxu0 0.0
    %v2904 = vand.u32 %v314, 4294901760
    %2905 = vmatmul.mubr.f32.gmra.mrb[0].mxu0 %v2904
    %v2906 = vpop.f32.mrb[0].mxu0
    %v2907 = vadd.f32 %v2294, %v2906
    %v2908 = vpop.f32.mrb[0].mxu0
    %2909 = vmatprep.mubr.f32.mxu0 0.0
    %v2910 = vand.u32 %v315, 4294901760
    %2911 = vmatmul.mubr.f32.gmra.mrb[0].mxu0 %v2910
    %v2912 = vpop.f32.mrb[0].mxu0
    %v2913 = vadd.f32 %v2302, %v2912
    %v2914 = vpop.f32.mrb[0].mxu0
    %2915 = vmatprep.mubr.f32.mxu0 0.0
    %v2916 = vand.u32 %v316, 4294901760
    %2917 = vmatmul.mubr.f32.gmra.mrb[0].mxu0 %v2916
    %v2918 = vpop.f32.mrb[0].mxu0
    %v2919 = vadd.f32 %v2310, %v2918
    %v2920 = vpop.f32.mrb[0].mxu0
    %2921 = vmatprep.mubr.f32.mxu0 0.0
    %v2922 = vand.u32 %v317, 4294901760
    %2923 = vmatmul.mubr.f32.gmra.mrb[0].mxu0 %v2922
    %v2924 = vpop.f32.mrb[0].mxu0
    %v2925 = vadd.f32 %v2318, %v2924
    %v2926 = vpop.f32.mrb[0].mxu0
    %2927 = vmatprep.mubr.f32.mxu0 0.0
    %v2928 = vand.u32 %v318, 4294901760
    %2929 = vmatmul.mubr.f32.gmra.mrb[0].mxu0 %v2928
    %v2930 = vpop.f32.mrb[0].mxu0
    %v2931 = vadd.f32 %v2326, %v2930
    %v2932 = vpop.f32.mrb[0].mxu0
    %2933 = vmatprep.mubr.f32.mxu0 0.0
    %v2934 = vand.u32 %v319, 4294901760
    %2935 = vmatmul.mubr.f32.gmra.mrb[0].mxu0 %v2934
    %v2936 = vpop.f32.mrb[0].mxu0
    %v2937 = vadd.f32 %v2334, %v2936
    %v2938 = vpop.f32.mrb[0].mxu0
    %2939 = vmatprep.mubr.f32.mxu0 0.0
    %v2940 = vand.u32 %v320, 4294901760
    %2941 = vmatmul.mubr.f32.gmra.mrb[0].mxu0 %v2940
    %v2942 = vpop.f32.mrb[0].mxu0
    %v2943 = vadd.f32 %v2342, %v2942
    %v2944 = vpop.f32.mrb[0].mxu0
    %2945 = vmatprep.mubr.f32.mxu0 0.0
    %v2946 = vand.u32 %v321, 4294901760
    %2947 = vmatmul.mubr.f32.gmra.mrb[0].mxu0 %v2946
    %v2948 = vpop.f32.mrb[0].mxu0
    %v2949 = vadd.f32 %v2350, %v2948
    %v2950 = vpop.f32.mrb[0].mxu0
    %2951 = vmatprep.mubr.f32.mxu0 0.0
    %v2952 = vand.u32 %v322, 4294901760
    %2953 = vmatmul.mubr.f32.gmra.mrb[0].mxu0 %v2952
    %v2954 = vpop.f32.mrb[0].mxu0
    %v2955 = vadd.f32 %v2358, %v2954
    %v2956 = vpop.f32.mrb[0].mxu0
    %2957 = vmatprep.mubr.f32.mxu0 0.0
    %v2958 = vand.u32 %v323, 4294901760
    %2959 = vmatmul.mubr.f32.gmra.mrb[0].mxu0 %v2958
    %v2960 = vpop.f32.mrb[0].mxu0
    %v2961 = vadd.f32 %v2366, %v2960
    %v2962 = vpop.f32.mrb[0].mxu0
    %2963 = vmatprep.mubr.f32.mxu0 0.0
    %v2964 = vand.u32 %v324, 4294901760
    %2965 = vmatmul.mubr.f32.gmra.mrb[0].mxu0 %v2964
    %v2966 = vpop.f32.mrb[0].mxu0
    %v2967 = vadd.f32 %v2374, %v2966
    %v2968 = vpop.f32.mrb[0].mxu0
    %2969 = vmatprep.mubr.f32.mxu0 0.0
    %v2970 = vand.u32 %v325, 4294901760
    %2971 = vmatmul.mubr.f32.gmra.mrb[0].mxu0 %v2970
    %v2972 = vpop.f32.mrb[0].mxu0
    %v2973 = vadd.f32 %v2382, %v2972
    %v2974 = vpop.f32.mrb[0].mxu0
    %2975 = vmatprep.mubr.f32.mxu0 0.0
    %v2976 = vand.u32 %v326, 4294901760
    %2977 = vmatmul.mubr.f32.gmra.mrb[0].mxu0 %v2976
    %v2978 = vpop.f32.mrb[0].mxu0
    %v2979 = vadd.f32 %v2390, %v2978
    %v2980 = vpop.f32.mrb[0].mxu0
    %2981 = vmatprep.mubr.f32.mxu0 0.0
    %v2982 = vand.u32 %v327, 4294901760
    %2983 = vmatmul.mubr.f32.gmra.mrb[0].mxu0 %v2982
    %v2984 = vpop.f32.mrb[0].mxu0
    %v2985 = vadd.f32 %v2398, %v2984
    %v2986 = vpop.f32.mrb[0].mxu0
    %2987 = vmatprep.mubr.f32.mxu0 0.0
    %v2988 = vand.u32 %v328, 4294901760
    %2989 = vmatmul.mubr.f32.gmra.mrb[0].mxu0 %v2988
    %v2990 = vpop.f32.mrb[0].mxu0
    %v2991 = vadd.f32 %v2406, %v2990
    %v2992 = vpop.f32.mrb[0].mxu0
    %2993 = vmatprep.mubr.f32.mxu0 0.0
    %v2994 = vand.u32 %v329, 4294901760
    %2995 = vmatmul.mubr.f32.gmra.mrb[0].mxu0 %v2994
    %v2996 = vpop.f32.mrb[0].mxu0
    %v2997 = vadd.f32 %v2414, %v2996
    %v2998 = vpop.f32.mrb[0].mxu0
    %2999 = vmatprep.mubr.f32.mxu0 0.0
    %v3000 = vand.u32 %v330, 4294901760
    %3001 = vmatmul.mubr.f32.gmra.mrb[0].mxu0 %v3000
    %v3002 = vpop.f32.mrb[0].mxu0
    %v3003 = vadd.f32 %v2422, %v3002
    %v3004 = vpop.f32.mrb[0].mxu0
    %3005 = vmatprep.mubr.f32.mxu0 0.0
    %v3006 = vand.u32 %v331, 4294901760
    %3007 = vmatmul.mubr.f32.gmra.mrb[0].mxu0 %v3006
    %v3008 = vpop.f32.mrb[0].mxu0
    %v3009 = vadd.f32 %v2430, %v3008
    %v3010 = vpop.f32.mrb[0].mxu0
    %3011 = vmatprep.mubr.f32.mxu0 0.0
    %v3012 = vand.u32 %v332, 4294901760
    %3013 = vmatmul.mubr.f32.gmra.mrb[0].mxu0 %v3012
    %v3014 = vpop.f32.mrb[0].mxu0
    %v3015 = vadd.f32 %v2438, %v3014
    %v3016 = vpop.f32.mrb[0].mxu0
    %3017 = vmatprep.mubr.f32.mxu0 0.0
    %v3018 = vand.u32 %v333, 4294901760
    %3019 = vmatmul.mubr.f32.gmra.mrb[0].mxu0 %v3018
    %v3020 = vpop.f32.mrb[0].mxu0
    %v3021 = vadd.f32 %v2446, %v3020
    %v3022 = vpop.f32.mrb[0].mxu0
    %3023 = vmatprep.mubr.f32.mxu0 0.0
    %v3024 = vand.u32 %v334, 4294901760
    %3025 = vmatmul.mubr.f32.gmra.mrb[0].mxu0 %v3024
    %v3026 = vpop.f32.mrb[0].mxu0
    %v3027 = vadd.f32 %v2454, %v3026
    %v3028 = vpop.f32.mrb[0].mxu0
    %3029 = vmatprep.mubr.f32.mxu0 0.0
    %v3030 = vand.u32 %v335, 4294901760
    %3031 = vmatmul.mubr.f32.gmra.mrb[0].mxu0 %v3030
    %v3032 = vpop.f32.mrb[0].mxu0
    %v3033 = vadd.f32 %v2462, %v3032
    %v3034 = vpop.f32.mrb[0].mxu0
    %3035 = vmatprep.mubr.f32.mxu0 0.0
    %v3036 = vand.u32 %v336, 4294901760
    %3037 = vmatmul.mubr.f32.gmra.mrb[0].mxu0 %v3036
    %v3038 = vpop.f32.mrb[0].mxu0
    %v3039 = vadd.f32 %v2470, %v3038
    %v3040 = vpop.f32.mrb[0].mxu0
    %3041 = vmatprep.mubr.f32.mxu0 0.0
    %v3042 = vand.u32 %v337, 4294901760
    %3043 = vmatmul.mubr.f32.gmra.mrb[0].mxu0 %v3042
    %v3044 = vpop.f32.mrb[0].mxu0
    %v3045 = vadd.f32 %v2478, %v3044
    %v3046 = vpop.f32.mrb[0].mxu0
    %3047 = vmatprep.mubr.f32.mxu0 0.0
    %v3048 = vand.u32 %v338, 4294901760
    %3049 = vmatmul.mubr.f32.gmra.mrb[0].mxu0 %v3048
    %v3050 = vpop.f32.mrb[0].mxu0
    %v3051 = vadd.f32 %v2486, %v3050
    %v3052 = vpop.f32.mrb[0].mxu0
    %3053 = vmatprep.mubr.f32.mxu0 0.0
    %v3054 = vand.u32 %v339, 4294901760
    %3055 = vmatmul.mubr.f32.gmra.mrb[0].mxu0 %v3054
    %v3056 = vpop.f32.mrb[0].mxu0
    %v3057 = vadd.f32 %v2494, %v3056
    %v3058 = vpop.f32.mrb[0].mxu0
    %3059 = vmatprep.mubr.f32.mxu0 0.0
    %v3060 = vand.u32 %v340, 4294901760
    %3061 = vmatmul.mubr.f32.gmra.mrb[0].mxu0 %v3060
    %v3062 = vpop.f32.mrb[0].mxu0
    %v3063 = vadd.f32 %v2502, %v3062
    %v3064 = vpop.f32.mrb[0].mxu0
    %3065 = vmatprep.mubr.f32.mxu0 0.0
    %v3066 = vand.u32 %v341, 4294901760
    %3067 = vmatmul.mubr.f32.gmra.mrb[0].mxu0 %v3066
    %v3068 = vpop.f32.mrb[0].mxu0
    %v3069 = vadd.f32 %v2510, %v3068
    %v3070 = vpop.f32.mrb[0].mxu0
    %3071 = vmatprep.mubr.f32.mxu0 0.0
    %v3072 = vand.u32 %v342, 4294901760
    %3073 = vmatmul.mubr.f32.gmra.mrb[0].mxu0 %v3072
    %v3074 = vpop.f32.mrb[0].mxu0
    %v3075 = vadd.f32 %v2518, %v3074
    %v3076 = vpop.f32.mrb[0].mxu0
    %3077 = vmatprep.mubr.f32.mxu0 0.0
    %v3078 = vand.u32 %v343, 4294901760
    %3079 = vmatmul.mubr.f32.gmra.mrb[0].mxu0 %v3078
    %v3080 = vpop.f32.mrb[0].mxu0
    %v3081 = vadd.f32 %v2526, %v3080
    %v3082 = vpop.f32.mrb[0].mxu0
    %3083 = vmatprep.mubr.f32.mxu0 0.0
    %v3084 = vand.u32 %v344, 4294901760
    %3085 = vmatmul.mubr.f32.gmra.mrb[0].mxu0 %v3084
    %v3086 = vpop.f32.mrb[0].mxu0
    %v3087 = vadd.f32 %v2534, %v3086
    %v3088 = vpop.f32.mrb[0].mxu0
    %3089 = vmatprep.mubr.f32.mxu0 0.0
    %v3090 = vand.u32 %v345, 4294901760
    %3091 = vmatmul.mubr.f32.gmra.mrb[0].mxu0 %v3090
    %v3092 = vpop.f32.mrb[0].mxu0
    %v3093 = vadd.f32 %v2542, %v3092
    %v3094 = vpop.f32.mrb[0].mxu0
    %3095 = vmatprep.mubr.f32.mxu0 0.0
    %v3096 = vand.u32 %v346, 4294901760
    %3097 = vmatmul.mubr.f32.gmra.mrb[0].mxu0 %v3096
    %v3098 = vpop.f32.mrb[0].mxu0
    %v3099 = vadd.f32 %v2550, %v3098
    %v3100 = vpop.f32.mrb[0].mxu0
    %3101 = vmatprep.mubr.f32.mxu0 0.0
    %v3102 = vand.u32 %v347, 4294901760
    %3103 = vmatmul.mubr.f32.gmra.mrb[0].mxu0 %v3102
    %v3104 = vpop.f32.mrb[0].mxu0
    %v3105 = vadd.f32 %v2558, %v3104
    %v3106 = vpop.f32.mrb[0].mxu0
    %3107 = vmatprep.mubr.f32.mxu0 0.0
    %v3108 = vand.u32 %v348, 4294901760
    %3109 = vmatmul.mubr.f32.gmra.mrb[0].mxu0 %v3108
    %v3110 = vpop.f32.mrb[0].mxu0
    %v3111 = vadd.f32 %v2566, %v3110
    %v3112 = vpop.f32.mrb[0].mxu0
    %3113 = vmatprep.mubr.f32.mxu0 0.0
    %v3114 = vand.u32 %v349, 4294901760
    %3115 = vmatmul.mubr.f32.gmra.mrb[0].mxu0 %v3114
    %v3116 = vpop.f32.mrb[0].mxu0
    %v3117 = vadd.f32 %v2574, %v3116
    %v3118 = vpop.f32.mrb[0].mxu0
    %3119 = vmatprep.mubr.f32.mxu0 0.0
    %v3120 = vand.u32 %v350, 4294901760
    %3121 = vmatmul.mubr.f32.gmra.mrb[0].mxu0 %v3120
    %v3122 = vpop.f32.mrb[0].mxu0
    %v3123 = vadd.f32 %v2582, %v3122
    %v3124 = vpop.f32.mrb[0].mxu0
    %3125 = vmatprep.mubr.f32.mxu0 0.0
    %v3126 = vand.u32 %v351, 4294901760
    %3127 = vmatmul.mubr.f32.gmra.mrb[0].mxu0 %v3126
    %v3128 = vpop.f32.mrb[0].mxu0
    %v3129 = vadd.f32 %v2590, %v3128
    %v3130 = vpop.f32.mrb[0].mxu0
    %3131 = vmatprep.mubr.f32.mxu0 0.0
    %v3132 = vand.u32 %v352, 4294901760
    %3133 = vmatmul.mubr.f32.gmra.mrb[0].mxu0 %v3132
    %v3134 = vpop.f32.mrb[0].mxu0
    %v3135 = vadd.f32 %v2598, %v3134
    %v3136 = vpop.f32.mrb[0].mxu0
    %3137 = vmatprep.mubr.f32.mxu0 0.0
    %v3138 = vand.u32 %v353, 4294901760
    %3139 = vmatmul.mubr.f32.gmra.mrb[0].mxu0 %v3138
    %v3140 = vpop.f32.mrb[0].mxu0
    %v3141 = vadd.f32 %v2606, %v3140
    %v3142 = vpop.f32.mrb[0].mxu0
    %3143 = vmatprep.mubr.f32.mxu0 0.0
    %v3144 = vand.u32 %v354, 4294901760
    %3145 = vmatmul.mubr.f32.gmra.mrb[0].mxu0 %v3144
    %v3146 = vpop.f32.mrb[0].mxu0
    %v3147 = vadd.f32 %v2614, %v3146
    %v3148 = vpop.f32.mrb[0].mxu0
    %3149 = vmatprep.mubr.f32.mxu0 0.0
    %v3150 = vand.u32 %v355, 4294901760
    %3151 = vmatmul.mubr.f32.gmra.mrb[0].mxu0 %v3150
    %v3152 = vpop.f32.mrb[0].mxu0
    %v3153 = vadd.f32 %v2622, %v3152
    %v3154 = vpop.f32.mrb[0].mxu0
    %3155 = vmatprep.mubr.f32.mxu0 0.0
    %v3156 = vand.u32 %v356, 4294901760
    %3157 = vmatmul.mubr.f32.gmra.mrb[0].mxu0 %v3156
    %v3158 = vpop.f32.mrb[0].mxu0
    %v3159 = vadd.f32 %v2630, %v3158
    %v3160 = vpop.f32.mrb[0].mxu0
    %3161 = vmatprep.mubr.f32.mxu0 0.0
    %v3162 = vand.u32 %v357, 4294901760
    %3163 = vmatmul.mubr.f32.gmra.mrb[0].mxu0 %v3162
    %v3164 = vpop.f32.mrb[0].mxu0
    %v3165 = vadd.f32 %v2638, %v3164
    %v3166 = vpop.f32.mrb[0].mxu0
    %3167 = vmatprep.mubr.f32.mxu0 0.0
    %v3168 = vand.u32 %v358, 4294901760
    %3169 = vmatmul.mubr.f32.gmra.mrb[0].mxu0 %v3168
    %v3170 = vpop.f32.mrb[0].mxu0
    %v3171 = vadd.f32 %v2646, %v3170
    %v3172 = vpop.f32.mrb[0].mxu0
    %3173 = vmatprep.mubr.f32.mxu0 0.0
    %v3174 = vand.u32 %v359, 4294901760
    %3175 = vmatmul.mubr.f32.gmra.mrb[0].mxu0 %v3174
    %v3176 = vpop.f32.mrb[0].mxu0
    %v3177 = vadd.f32 %v2654, %v3176
    %v3178 = vpop.f32.mrb[0].mxu0
    %3179 = vmatprep.mubr.f32.mxu0 0.0
    %v3180 = vand.u32 %v360, 4294901760
    %3181 = vmatmul.mubr.f32.gmra.mrb[0].mxu0 %v3180
    %v3182 = vpop.f32.mrb[0].mxu0
    %v3183 = vadd.f32 %v2662, %v3182
    %v3184 = vpop.f32.mrb[0].mxu0
    %3185 = vmatprep.mubr.f32.mxu0 0.0
    %v3186 = vand.u32 %v361, 4294901760
    %3187 = vmatmul.mubr.f32.gmra.mrb[0].mxu0 %v3186
    %v3188 = vpop.f32.mrb[0].mxu0
    %v3189 = vadd.f32 %v2670, %v3188
    %v3190 = vpop.f32.mrb[0].mxu0
    %3191 = vmatprep.mubr.f32.mxu0 0.0
    %v3192 = vand.u32 %v362, 4294901760
    %3193 = vmatmul.mubr.f32.gmra.mrb[0].mxu0 %v3192
    %v3194 = vpop.f32.mrb[0].mxu0
    %v3195 = vadd.f32 %v2678, %v3194
    %v3196 = vpop.f32.mrb[0].mxu0
    %3197 = vmatprep.mubr.f32.mxu0 0.0
    %v3198 = vand.u32 %v363, 4294901760
    %3199 = vmatmul.mubr.f32.gmra.mrb[0].mxu0 %v3198
    %v3200 = vpop.f32.mrb[0].mxu0
    %v3201 = vadd.f32 %v2686, %v3200
    %v3202 = vpop.f32.mrb[0].mxu0
    %3203 = vmatprep.mubr.f32.mxu0 0.0
    %v3204 = vand.u32 %v364, 4294901760
    %3205 = vmatmul.mubr.f32.gmra.mrb[0].mxu0 %v3204
    %v3206 = vpop.f32.mrb[0].mxu0
    %v3207 = vadd.f32 %v2694, %v3206
    %v3208 = vpop.f32.mrb[0].mxu0
    %3209 = vmatprep.mubr.f32.mxu0 0.0
    %v3210 = vand.u32 %v365, 4294901760
    %3211 = vmatmul.mubr.f32.gmra.mrb[0].mxu0 %v3210
    %v3212 = vpop.f32.mrb[0].mxu0
    %v3213 = vadd.f32 %v2702, %v3212
    %v3214 = vpop.f32.mrb[0].mxu0
    %3215 = vmatprep.mubr.f32.mxu0 0.0
    %v3216 = vand.u32 %v366, 4294901760
    %3217 = vmatmul.mubr.f32.gmra.mrb[0].mxu0 %v3216
    %v3218 = vpop.f32.mrb[0].mxu0
    %v3219 = vadd.f32 %v2710, %v3218
    %v3220 = vpop.f32.mrb[0].mxu0
    %3221 = vmatprep.mubr.f32.mxu0 0.0
    %v3222 = vand.u32 %v367, 4294901760
    %3223 = vmatmul.mubr.f32.gmra.mrb[0].mxu0 %v3222
    %v3224 = vpop.f32.mrb[0].mxu0
    %v3225 = vadd.f32 %v2718, %v3224
    %v3226 = vpop.f32.mrb[0].mxu0
    %3227 = vmatprep.mubr.f32.mxu0 0.0
    %v3228 = vand.u32 %v368, 4294901760
    %3229 = vmatmul.mubr.f32.gmra.mrb[0].mxu0 %v3228
    %v3230 = vpop.f32.mrb[0].mxu0
    %v3231 = vadd.f32 %v2726, %v3230
    %v3232 = vpop.f32.mrb[0].mxu0
    %3233 = vmatprep.mubr.f32.mxu0 0.0
    %v3234 = vand.u32 %v369, 4294901760
    %3235 = vmatmul.mubr.f32.gmra.mrb[0].mxu0 %v3234
    %v3236 = vpop.f32.mrb[0].mxu0
    %v3237 = vadd.f32 %v2734, %v3236
    %v3238 = vpop.f32.mrb[0].mxu0
    %3239 = vmatprep.mubr.f32.mxu0 0.0
    %v3240 = vand.u32 %v370, 4294901760
    %3241 = vmatmul.mubr.f32.gmra.mrb[0].mxu0 %v3240
    %v3242 = vpop.f32.mrb[0].mxu0
    %v3243 = vadd.f32 %v2742, %v3242
    %v3244 = vpop.f32.mrb[0].mxu0
    %3245 = vmatprep.mubr.f32.mxu0 0.0
    %v3246 = vand.u32 %v371, 4294901760
    %3247 = vmatmul.mubr.f32.gmra.mrb[0].mxu0 %v3246
    %v3248 = vpop.f32.mrb[0].mxu0
    %v3249 = vadd.f32 %v2750, %v3248
    %v3250 = vpop.f32.mrb[0].mxu0
    %3251 = vmatprep.mubr.f32.mxu0 0.0
    %v3252 = vand.u32 %v372, 4294901760
    %3253 = vmatmul.mubr.f32.gmra.mrb[0].mxu0 %v3252
    %v3254 = vpop.f32.mrb[0].mxu0
    %v3255 = vadd.f32 %v2758, %v3254
    %v3256 = vpop.f32.mrb[0].mxu0
    %3257 = vdwg.mxu0
    %3258 = vmatprep.subr.mxu0 0.0
    %v3259 = vand.u32 %v273, 4294901760
    %3260 = vmatpush1.xpose.msra.mxu0 %v3259
    %3261 = vmatprep.subr.mxu0 0.0
    %v3262 = vand.u32 %v274, 4294901760
    %3263 = vmatpush1.xpose.msra.mxu0 %v3262
    %3264 = vmatprep.subr.mxu0 0.0
    %v3265 = vand.u32 %v275, 4294901760
    %3266 = vmatpush1.xpose.msra.mxu0 %v3265
    %3267 = vmatprep.subr.mxu0 0.0
    %v3268 = vand.u32 %v276, 4294901760
    %3269 = vmatpush1.xpose.msra.mxu0 %v3268
    %3270 = vmatprep.subr.mxu0 0.0
    %v3271 = vand.u32 %v277, 4294901760
    %3272 = vmatpush1.xpose.msra.mxu0 %v3271
    %3273 = vmatprep.subr.mxu0 0.0
    %v3274 = vand.u32 %v278, 4294901760
    %3275 = vmatpush1.xpose.msra.mxu0 %v3274
    %3276 = vmatprep.subr.mxu0 0.0
    %v3277 = vand.u32 %v279, 4294901760
    %3278 = vmatpush1.xpose.msra.mxu0 %v3277
    %3279 = vmatprep.subr.mxu0 0.0
    %v3280 = vand.u32 %v280, 4294901760
    %3281 = vmatpush1.xpose.msra.mxu0 %v3280
    %3282 = vmatprep.subr.mxu0 0.0
    %v3283 = vand.u32 %v281, 4294901760
    %3284 = vmatpush1.xpose.msra.mxu0 %v3283
    %3285 = vmatprep.subr.mxu0 0.0
    %v3286 = vand.u32 %v282, 4294901760
    %3287 = vmatpush1.xpose.msra.mxu0 %v3286
    %3288 = vmatprep.subr.mxu0 0.0
    %v3289 = vand.u32 %v283, 4294901760
    %3290 = vmatpush1.xpose.msra.mxu0 %v3289
    %3291 = vmatprep.subr.mxu0 0.0
    %v3292 = vand.u32 %v284, 4294901760
    %3293 = vmatpush1.xpose.msra.mxu0 %v3292
    %3294 = vmatprep.subr.mxu0 0.0
    %v3295 = vand.u32 %v285, 4294901760
    %3296 = vmatpush1.xpose.msra.mxu0 %v3295
    %3297 = vmatprep.subr.mxu0 0.0
    %v3298 = vand.u32 %v286, 4294901760
    %3299 = vmatpush1.xpose.msra.mxu0 %v3298
    %3300 = vmatprep.subr.mxu0 0.0
    %v3301 = vand.u32 %v287, 4294901760
    %3302 = vmatpush1.xpose.msra.mxu0 %v3301
    %3303 = vmatprep.subr.mxu0 0.0
    %v3304 = vand.u32 %v288, 4294901760
    %3305 = vmatpush1.xpose.msra.mxu0 %v3304
    %3306 = vmatprep.subr.mxu0 0.0
    %3307 = vmatpush1.xpose.msra.mxu0 0.0
    %3308 = vmatprep.subr.mxu0 0.0
    %3309 = vmatpush1.xpose.msra.mxu0 0.0
    %3310 = vmatprep.subr.mxu0 0.0
    %3311 = vmatpush1.xpose.msra.mxu0 0.0
    %3312 = vmatprep.subr.mxu0 0.0
    %3313 = vmatpush1.xpose.msra.mxu0 0.0
    %3314 = vmatprep.subr.mxu0 0.0
    %3315 = vmatpush1.xpose.msra.mxu0 0.0
    %3316 = vmatprep.subr.mxu0 0.0
    %3317 = vmatpush1.xpose.msra.mxu0 0.0
    %3318 = vmatprep.subr.mxu0 0.0
    %3319 = vmatpush1.xpose.msra.mxu0 0.0
    %3320 = vmatprep.subr.mxu0 0.0
    %3321 = vmatpush1.xpose.msra.mxu0 0.0
    %3322 = vmatprep.subr.mxu0 0.0
    %3323 = vmatpush1.xpose.msra.mxu0 0.0
    %3324 = vmatprep.subr.mxu0 0.0
    %3325 = vmatpush1.xpose.msra.mxu0 0.0
    %3326 = vmatprep.subr.mxu0 0.0
    %3327 = vmatpush1.xpose.msra.mxu0 0.0
    %3328 = vmatprep.subr.mxu0 0.0
    %3329 = vmatpush1.xpose.msra.mxu0 0.0
    %3330 = vmatprep.subr.mxu0 0.0
    %3331 = vmatpush1.xpose.msra.mxu0 0.0
    %3332 = vmatprep.subr.mxu0 0.0
    %3333 = vmatpush1.xpose.msra.mxu0 0.0
    %3334 = vmatprep.subr.mxu0 0.0
    %3335 = vmatpush1.xpose.msra.mxu0 0.0
    %3336 = vmatprep.subr.mxu0 0.0
    %3337 = vmatpush1.xpose.msra.mxu0 0.0
    %3338 = vmatprep.mubr.f32.mxu0 0.0
    %v3339 = vand.u32 %v309, 4294901760
    %3340 = vmatmul.mubr.f32.gmra.mrb[0].mxu0 %v3339
    %v3341 = vpop.f32.mrb[0].mxu0
    %v3342 = vadd.f32 %v2877, %v3341
    %v3343 = vpop.f32.mrb[0].mxu0
    %3344 = vmatprep.mubr.f32.mxu0 0.0
    %v3345 = vand.u32 %v310, 4294901760
    %3346 = vmatmul.mubr.f32.gmra.mrb[0].mxu0 %v3345
    %v3347 = vpop.f32.mrb[0].mxu0
    %v3348 = vadd.f32 %v2883, %v3347
    %v3349 = vpop.f32.mrb[0].mxu0
    %3350 = vmatprep.mubr.f32.mxu0 0.0
    %v3351 = vand.u32 %v311, 4294901760
    %3352 = vmatmul.mubr.f32.gmra.mrb[0].mxu0 %v3351
    %v3353 = vpop.f32.mrb[0].mxu0
    %v3354 = vadd.f32 %v2889, %v3353
    %v3355 = vpop.f32.mrb[0].mxu0
    %3356 = vmatprep.mubr.f32.mxu0 0.0
    %v3357 = vand.u32 %v312, 4294901760
    %3358 = vmatmul.mubr.f32.gmra.mrb[0].mxu0 %v3357
    %v3359 = vpop.f32.mrb[0].mxu0
    %v3360 = vadd.f32 %v2895, %v3359
    %v3361 = vpop.f32.mrb[0].mxu0
    %3362 = vmatprep.mubr.f32.mxu0 0.0
    %v3363 = vand.u32 %v313, 4294901760
    %3364 = vmatmul.mubr.f32.gmra.mrb[0].mxu0 %v3363
    %v3365 = vpop.f32.mrb[0].mxu0
    %v3366 = vadd.f32 %v2901, %v3365
    %v3367 = vpop.f32.mrb[0].mxu0
    %3368 = vmatprep.mubr.f32.mxu0 0.0
    %v3369 = vand.u32 %v314, 4294901760
    %3370 = vmatmul.mubr.f32.gmra.mrb[0].mxu0 %v3369
    %v3371 = vpop.f32.mrb[0].mxu0
    %v3372 = vadd.f32 %v2907, %v3371
    %v3373 = vpop.f32.mrb[0].mxu0
    %3374 = vmatprep.mubr.f32.mxu0 0.0
    %v3375 = vand.u32 %v315, 4294901760
    %3376 = vmatmul.mubr.f32.gmra.mrb[0].mxu0 %v3375
    %v3377 = vpop.f32.mrb[0].mxu0
    %v3378 = vadd.f32 %v2913, %v3377
    %v3379 = vpop.f32.mrb[0].mxu0
    %3380 = vmatprep.mubr.f32.mxu0 0.0
    %v3381 = vand.u32 %v316, 4294901760
    %3382 = vmatmul.mubr.f32.gmra.mrb[0].mxu0 %v3381
    %v3383 = vpop.f32.mrb[0].mxu0
    %v3384 = vadd.f32 %v2919, %v3383
    %v3385 = vpop.f32.mrb[0].mxu0
    %3386 = vmatprep.mubr.f32.mxu0 0.0
    %v3387 = vand.u32 %v317, 4294901760
    %3388 = vmatmul.mubr.f32.gmra.mrb[0].mxu0 %v3387
    %v3389 = vpop.f32.mrb[0].mxu0
    %v3390 = vadd.f32 %v2925, %v3389
    %v3391 = vpop.f32.mrb[0].mxu0
    %3392 = vmatprep.mubr.f32.mxu0 0.0
    %v3393 = vand.u32 %v318, 4294901760
    %3394 = vmatmul.mubr.f32.gmra.mrb[0].mxu0 %v3393
    %v3395 = vpop.f32.mrb[0].mxu0
    %v3396 = vadd.f32 %v2931, %v3395
    %v3397 = vpop.f32.mrb[0].mxu0
    %3398 = vmatprep.mubr.f32.mxu0 0.0
    %v3399 = vand.u32 %v319, 4294901760
    %3400 = vmatmul.mubr.f32.gmra.mrb[0].mxu0 %v3399
    %v3401 = vpop.f32.mrb[0].mxu0
    %v3402 = vadd.f32 %v2937, %v3401
    %v3403 = vpop.f32.mrb[0].mxu0
    %3404 = vmatprep.mubr.f32.mxu0 0.0
    %v3405 = vand.u32 %v320, 4294901760
    %3406 = vmatmul.mubr.f32.gmra.mrb[0].mxu0 %v3405
    %v3407 = vpop.f32.mrb[0].mxu0
    %v3408 = vadd.f32 %v2943, %v3407
    %v3409 = vpop.f32.mrb[0].mxu0
    %3410 = vmatprep.mubr.f32.mxu0 0.0
    %v3411 = vand.u32 %v321, 4294901760
    %3412 = vmatmul.mubr.f32.gmra.mrb[0].mxu0 %v3411
    %v3413 = vpop.f32.mrb[0].mxu0
    %v3414 = vadd.f32 %v2949, %v3413
    %v3415 = vpop.f32.mrb[0].mxu0
    %3416 = vmatprep.mubr.f32.mxu0 0.0
    %v3417 = vand.u32 %v322, 4294901760
    %3418 = vmatmul.mubr.f32.gmra.mrb[0].mxu0 %v3417
    %v3419 = vpop.f32.mrb[0].mxu0
    %v3420 = vadd.f32 %v2955, %v3419
    %v3421 = vpop.f32.mrb[0].mxu0
    %3422 = vmatprep.mubr.f32.mxu0 0.0
    %v3423 = vand.u32 %v323, 4294901760
    %3424 = vmatmul.mubr.f32.gmra.mrb[0].mxu0 %v3423
    %v3425 = vpop.f32.mrb[0].mxu0
    %v3426 = vadd.f32 %v2961, %v3425
    %v3427 = vpop.f32.mrb[0].mxu0
    %3428 = vmatprep.mubr.f32.mxu0 0.0
    %v3429 = vand.u32 %v324, 4294901760
    %3430 = vmatmul.mubr.f32.gmra.mrb[0].mxu0 %v3429
    %v3431 = vpop.f32.mrb[0].mxu0
    %v3432 = vadd.f32 %v2967, %v3431
    %v3433 = vpop.f32.mrb[0].mxu0
    %3434 = vmatprep.mubr.f32.mxu0 0.0
    %v3435 = vand.u32 %v325, 4294901760
    %3436 = vmatmul.mubr.f32.gmra.mrb[0].mxu0 %v3435
    %v3437 = vpop.f32.mrb[0].mxu0
    %v3438 = vadd.f32 %v2973, %v3437
    %v3439 = vpop.f32.mrb[0].mxu0
    %3440 = vmatprep.mubr.f32.mxu0 0.0
    %v3441 = vand.u32 %v326, 4294901760
    %3442 = vmatmul.mubr.f32.gmra.mrb[0].mxu0 %v3441
    %v3443 = vpop.f32.mrb[0].mxu0
    %v3444 = vadd.f32 %v2979, %v3443
    %v3445 = vpop.f32.mrb[0].mxu0
    %3446 = vmatprep.mubr.f32.mxu0 0.0
    %v3447 = vand.u32 %v327, 4294901760
    %3448 = vmatmul.mubr.f32.gmra.mrb[0].mxu0 %v3447
    %v3449 = vpop.f32.mrb[0].mxu0
    %v3450 = vadd.f32 %v2985, %v3449
    %v3451 = vpop.f32.mrb[0].mxu0
    %3452 = vmatprep.mubr.f32.mxu0 0.0
    %v3453 = vand.u32 %v328, 4294901760
    %3454 = vmatmul.mubr.f32.gmra.mrb[0].mxu0 %v3453
    %v3455 = vpop.f32.mrb[0].mxu0
    %v3456 = vadd.f32 %v2991, %v3455
    %v3457 = vpop.f32.mrb[0].mxu0
    %3458 = vmatprep.mubr.f32.mxu0 0.0
    %v3459 = vand.u32 %v329, 4294901760
    %3460 = vmatmul.mubr.f32.gmra.mrb[0].mxu0 %v3459
    %v3461 = vpop.f32.mrb[0].mxu0
    %v3462 = vadd.f32 %v2997, %v3461
    %v3463 = vpop.f32.mrb[0].mxu0
    %3464 = vmatprep.mubr.f32.mxu0 0.0
    %v3465 = vand.u32 %v330, 4294901760
    %3466 = vmatmul.mubr.f32.gmra.mrb[0].mxu0 %v3465
    %v3467 = vpop.f32.mrb[0].mxu0
    %v3468 = vadd.f32 %v3003, %v3467
    %v3469 = vpop.f32.mrb[0].mxu0
    %3470 = vmatprep.mubr.f32.mxu0 0.0
    %v3471 = vand.u32 %v331, 4294901760
    %3472 = vmatmul.mubr.f32.gmra.mrb[0].mxu0 %v3471
    %v3473 = vpop.f32.mrb[0].mxu0
    %v3474 = vadd.f32 %v3009, %v3473
    %v3475 = vpop.f32.mrb[0].mxu0
    %3476 = vmatprep.mubr.f32.mxu0 0.0
    %v3477 = vand.u32 %v332, 4294901760
    %3478 = vmatmul.mubr.f32.gmra.mrb[0].mxu0 %v3477
    %v3479 = vpop.f32.mrb[0].mxu0
    %v3480 = vadd.f32 %v3015, %v3479
    %v3481 = vpop.f32.mrb[0].mxu0
    %3482 = vmatprep.mubr.f32.mxu0 0.0
    %v3483 = vand.u32 %v333, 4294901760
    %3484 = vmatmul.mubr.f32.gmra.mrb[0].mxu0 %v3483
    %v3485 = vpop.f32.mrb[0].mxu0
    %v3486 = vadd.f32 %v3021, %v3485
    %v3487 = vpop.f32.mrb[0].mxu0
    %3488 = vmatprep.mubr.f32.mxu0 0.0
    %v3489 = vand.u32 %v334, 4294901760
    %3490 = vmatmul.mubr.f32.gmra.mrb[0].mxu0 %v3489
    %v3491 = vpop.f32.mrb[0].mxu0
    %v3492 = vadd.f32 %v3027, %v3491
    %v3493 = vpop.f32.mrb[0].mxu0
    %3494 = vmatprep.mubr.f32.mxu0 0.0
    %v3495 = vand.u32 %v335, 4294901760
    %3496 = vmatmul.mubr.f32.gmra.mrb[0].mxu0 %v3495
    %v3497 = vpop.f32.mrb[0].mxu0
    %v3498 = vadd.f32 %v3033, %v3497
    %v3499 = vpop.f32.mrb[0].mxu0
    %3500 = vmatprep.mubr.f32.mxu0 0.0
    %v3501 = vand.u32 %v336, 4294901760
    %3502 = vmatmul.mubr.f32.gmra.mrb[0].mxu0 %v3501
    %v3503 = vpop.f32.mrb[0].mxu0
    %v3504 = vadd.f32 %v3039, %v3503
    %v3505 = vpop.f32.mrb[0].mxu0
    %3506 = vmatprep.mubr.f32.mxu0 0.0
    %v3507 = vand.u32 %v337, 4294901760
    %3508 = vmatmul.mubr.f32.gmra.mrb[0].mxu0 %v3507
    %v3509 = vpop.f32.mrb[0].mxu0
    %v3510 = vadd.f32 %v3045, %v3509
    %v3511 = vpop.f32.mrb[0].mxu0
    %3512 = vmatprep.mubr.f32.mxu0 0.0
    %v3513 = vand.u32 %v338, 4294901760
    %3514 = vmatmul.mubr.f32.gmra.mrb[0].mxu0 %v3513
    %v3515 = vpop.f32.mrb[0].mxu0
    %v3516 = vadd.f32 %v3051, %v3515
    %v3517 = vpop.f32.mrb[0].mxu0
    %3518 = vmatprep.mubr.f32.mxu0 0.0
    %v3519 = vand.u32 %v339, 4294901760
    %3520 = vmatmul.mubr.f32.gmra.mrb[0].mxu0 %v3519
    %v3521 = vpop.f32.mrb[0].mxu0
    %v3522 = vadd.f32 %v3057, %v3521
    %v3523 = vpop.f32.mrb[0].mxu0
    %3524 = vmatprep.mubr.f32.mxu0 0.0
    %v3525 = vand.u32 %v340, 4294901760
    %3526 = vmatmul.mubr.f32.gmra.mrb[0].mxu0 %v3525
    %v3527 = vpop.f32.mrb[0].mxu0
    %v3528 = vadd.f32 %v3063, %v3527
    %v3529 = vpop.f32.mrb[0].mxu0
    %3530 = vmatprep.mubr.f32.mxu0 0.0
    %v3531 = vand.u32 %v341, 4294901760
    %3532 = vmatmul.mubr.f32.gmra.mrb[0].mxu0 %v3531
    %v3533 = vpop.f32.mrb[0].mxu0
    %v3534 = vadd.f32 %v3069, %v3533
    %v3535 = vpop.f32.mrb[0].mxu0
    %3536 = vmatprep.mubr.f32.mxu0 0.0
    %v3537 = vand.u32 %v342, 4294901760
    %3538 = vmatmul.mubr.f32.gmra.mrb[0].mxu0 %v3537
    %v3539 = vpop.f32.mrb[0].mxu0
    %v3540 = vadd.f32 %v3075, %v3539
    %v3541 = vpop.f32.mrb[0].mxu0
    %3542 = vmatprep.mubr.f32.mxu0 0.0
    %v3543 = vand.u32 %v343, 4294901760
    %3544 = vmatmul.mubr.f32.gmra.mrb[0].mxu0 %v3543
    %v3545 = vpop.f32.mrb[0].mxu0
    %v3546 = vadd.f32 %v3081, %v3545
    %v3547 = vpop.f32.mrb[0].mxu0
    %3548 = vmatprep.mubr.f32.mxu0 0.0
    %v3549 = vand.u32 %v344, 4294901760
    %3550 = vmatmul.mubr.f32.gmra.mrb[0].mxu0 %v3549
    %v3551 = vpop.f32.mrb[0].mxu0
    %v3552 = vadd.f32 %v3087, %v3551
    %v3553 = vpop.f32.mrb[0].mxu0
    %3554 = vmatprep.mubr.f32.mxu0 0.0
    %v3555 = vand.u32 %v345, 4294901760
    %3556 = vmatmul.mubr.f32.gmra.mrb[0].mxu0 %v3555
    %v3557 = vpop.f32.mrb[0].mxu0
    %v3558 = vadd.f32 %v3093, %v3557
    %v3559 = vpop.f32.mrb[0].mxu0
    %3560 = vmatprep.mubr.f32.mxu0 0.0
    %v3561 = vand.u32 %v346, 4294901760
    %3562 = vmatmul.mubr.f32.gmra.mrb[0].mxu0 %v3561
    %v3563 = vpop.f32.mrb[0].mxu0
    %v3564 = vadd.f32 %v3099, %v3563
    %v3565 = vpop.f32.mrb[0].mxu0
    %3566 = vmatprep.mubr.f32.mxu0 0.0
    %v3567 = vand.u32 %v347, 4294901760
    %3568 = vmatmul.mubr.f32.gmra.mrb[0].mxu0 %v3567
    %v3569 = vpop.f32.mrb[0].mxu0
    %v3570 = vadd.f32 %v3105, %v3569
    %v3571 = vpop.f32.mrb[0].mxu0
    %3572 = vmatprep.mubr.f32.mxu0 0.0
    %v3573 = vand.u32 %v348, 4294901760
    %3574 = vmatmul.mubr.f32.gmra.mrb[0].mxu0 %v3573
    %v3575 = vpop.f32.mrb[0].mxu0
    %v3576 = vadd.f32 %v3111, %v3575
    %v3577 = vpop.f32.mrb[0].mxu0
    %3578 = vmatprep.mubr.f32.mxu0 0.0
    %v3579 = vand.u32 %v349, 4294901760
    %3580 = vmatmul.mubr.f32.gmra.mrb[0].mxu0 %v3579
    %v3581 = vpop.f32.mrb[0].mxu0
    %v3582 = vadd.f32 %v3117, %v3581
    %v3583 = vpop.f32.mrb[0].mxu0
    %3584 = vmatprep.mubr.f32.mxu0 0.0
    %v3585 = vand.u32 %v350, 4294901760
    %3586 = vmatmul.mubr.f32.gmra.mrb[0].mxu0 %v3585
    %v3587 = vpop.f32.mrb[0].mxu0
    %v3588 = vadd.f32 %v3123, %v3587
    %v3589 = vpop.f32.mrb[0].mxu0
    %3590 = vmatprep.mubr.f32.mxu0 0.0
    %v3591 = vand.u32 %v351, 4294901760
    %3592 = vmatmul.mubr.f32.gmra.mrb[0].mxu0 %v3591
    %v3593 = vpop.f32.mrb[0].mxu0
    %v3594 = vadd.f32 %v3129, %v3593
    %v3595 = vpop.f32.mrb[0].mxu0
    %3596 = vmatprep.mubr.f32.mxu0 0.0
    %v3597 = vand.u32 %v352, 4294901760
    %3598 = vmatmul.mubr.f32.gmra.mrb[0].mxu0 %v3597
    %v3599 = vpop.f32.mrb[0].mxu0
    %v3600 = vadd.f32 %v3135, %v3599
    %v3601 = vpop.f32.mrb[0].mxu0
    %3602 = vmatprep.mubr.f32.mxu0 0.0
    %v3603 = vand.u32 %v353, 4294901760
    %3604 = vmatmul.mubr.f32.gmra.mrb[0].mxu0 %v3603
    %v3605 = vpop.f32.mrb[0].mxu0
    %v3606 = vadd.f32 %v3141, %v3605
    %v3607 = vpop.f32.mrb[0].mxu0
    %3608 = vmatprep.mubr.f32.mxu0 0.0
    %v3609 = vand.u32 %v354, 4294901760
    %3610 = vmatmul.mubr.f32.gmra.mrb[0].mxu0 %v3609
    %v3611 = vpop.f32.mrb[0].mxu0
    %v3612 = vadd.f32 %v3147, %v3611
    %v3613 = vpop.f32.mrb[0].mxu0
    %3614 = vmatprep.mubr.f32.mxu0 0.0
    %v3615 = vand.u32 %v355, 4294901760
    %3616 = vmatmul.mubr.f32.gmra.mrb[0].mxu0 %v3615
    %v3617 = vpop.f32.mrb[0].mxu0
    %v3618 = vadd.f32 %v3153, %v3617
    %v3619 = vpop.f32.mrb[0].mxu0
    %3620 = vmatprep.mubr.f32.mxu0 0.0
    %v3621 = vand.u32 %v356, 4294901760
    %3622 = vmatmul.mubr.f32.gmra.mrb[0].mxu0 %v3621
    %v3623 = vpop.f32.mrb[0].mxu0
    %v3624 = vadd.f32 %v3159, %v3623
    %v3625 = vpop.f32.mrb[0].mxu0
    %3626 = vmatprep.mubr.f32.mxu0 0.0
    %v3627 = vand.u32 %v357, 4294901760
    %3628 = vmatmul.mubr.f32.gmra.mrb[0].mxu0 %v3627
    %v3629 = vpop.f32.mrb[0].mxu0
    %v3630 = vadd.f32 %v3165, %v3629
    %v3631 = vpop.f32.mrb[0].mxu0
    %3632 = vmatprep.mubr.f32.mxu0 0.0
    %v3633 = vand.u32 %v358, 4294901760
    %3634 = vmatmul.mubr.f32.gmra.mrb[0].mxu0 %v3633
    %v3635 = vpop.f32.mrb[0].mxu0
    %v3636 = vadd.f32 %v3171, %v3635
    %v3637 = vpop.f32.mrb[0].mxu0
    %3638 = vmatprep.mubr.f32.mxu0 0.0
    %v3639 = vand.u32 %v359, 4294901760
    %3640 = vmatmul.mubr.f32.gmra.mrb[0].mxu0 %v3639
    %v3641 = vpop.f32.mrb[0].mxu0
    %v3642 = vadd.f32 %v3177, %v3641
    %v3643 = vpop.f32.mrb[0].mxu0
    %3644 = vmatprep.mubr.f32.mxu0 0.0
    %v3645 = vand.u32 %v360, 4294901760
    %3646 = vmatmul.mubr.f32.gmra.mrb[0].mxu0 %v3645
    %v3647 = vpop.f32.mrb[0].mxu0
    %v3648 = vadd.f32 %v3183, %v3647
    %v3649 = vpop.f32.mrb[0].mxu0
    %3650 = vmatprep.mubr.f32.mxu0 0.0
    %v3651 = vand.u32 %v361, 4294901760
    %3652 = vmatmul.mubr.f32.gmra.mrb[0].mxu0 %v3651
    %v3653 = vpop.f32.mrb[0].mxu0
    %v3654 = vadd.f32 %v3189, %v3653
    %v3655 = vpop.f32.mrb[0].mxu0
    %3656 = vmatprep.mubr.f32.mxu0 0.0
    %v3657 = vand.u32 %v362, 4294901760
    %3658 = vmatmul.mubr.f32.gmra.mrb[0].mxu0 %v3657
    %v3659 = vpop.f32.mrb[0].mxu0
    %v3660 = vadd.f32 %v3195, %v3659
    %v3661 = vpop.f32.mrb[0].mxu0
    %3662 = vmatprep.mubr.f32.mxu0 0.0
    %v3663 = vand.u32 %v363, 4294901760
    %3664 = vmatmul.mubr.f32.gmra.mrb[0].mxu0 %v3663
    %v3665 = vpop.f32.mrb[0].mxu0
    %v3666 = vadd.f32 %v3201, %v3665
    %v3667 = vpop.f32.mrb[0].mxu0
    %3668 = vmatprep.mubr.f32.mxu0 0.0
    %v3669 = vand.u32 %v364, 4294901760
    %3670 = vmatmul.mubr.f32.gmra.mrb[0].mxu0 %v3669
    %v3671 = vpop.f32.mrb[0].mxu0
    %v3672 = vadd.f32 %v3207, %v3671
    %v3673 = vpop.f32.mrb[0].mxu0
    %3674 = vmatprep.mubr.f32.mxu0 0.0
    %v3675 = vand.u32 %v365, 4294901760
    %3676 = vmatmul.mubr.f32.gmra.mrb[0].mxu0 %v3675
    %v3677 = vpop.f32.mrb[0].mxu0
    %v3678 = vadd.f32 %v3213, %v3677
    %v3679 = vpop.f32.mrb[0].mxu0
    %3680 = vmatprep.mubr.f32.mxu0 0.0
    %v3681 = vand.u32 %v366, 4294901760
    %3682 = vmatmul.mubr.f32.gmra.mrb[0].mxu0 %v3681
    %v3683 = vpop.f32.mrb[0].mxu0
    %v3684 = vadd.f32 %v3219, %v3683
    %v3685 = vpop.f32.mrb[0].mxu0
    %3686 = vmatprep.mubr.f32.mxu0 0.0
    %v3687 = vand.u32 %v367, 4294901760
    %3688 = vmatmul.mubr.f32.gmra.mrb[0].mxu0 %v3687
    %v3689 = vpop.f32.mrb[0].mxu0
    %v3690 = vadd.f32 %v3225, %v3689
    %v3691 = vpop.f32.mrb[0].mxu0
    %3692 = vmatprep.mubr.f32.mxu0 0.0
    %v3693 = vand.u32 %v368, 4294901760
    %3694 = vmatmul.mubr.f32.gmra.mrb[0].mxu0 %v3693
    %v3695 = vpop.f32.mrb[0].mxu0
    %v3696 = vadd.f32 %v3231, %v3695
    %v3697 = vpop.f32.mrb[0].mxu0
    %3698 = vmatprep.mubr.f32.mxu0 0.0
    %v3699 = vand.u32 %v369, 4294901760
    %3700 = vmatmul.mubr.f32.gmra.mrb[0].mxu0 %v3699
    %v3701 = vpop.f32.mrb[0].mxu0
    %v3702 = vadd.f32 %v3237, %v3701
    %v3703 = vpop.f32.mrb[0].mxu0
    %3704 = vmatprep.mubr.f32.mxu0 0.0
    %v3705 = vand.u32 %v370, 4294901760
    %3706 = vmatmul.mubr.f32.gmra.mrb[0].mxu0 %v3705
    %v3707 = vpop.f32.mrb[0].mxu0
    %v3708 = vadd.f32 %v3243, %v3707
    %v3709 = vpop.f32.mrb[0].mxu0
    %3710 = vmatprep.mubr.f32.mxu0 0.0
    %v3711 = vand.u32 %v371, 4294901760
    %3712 = vmatmul.mubr.f32.gmra.mrb[0].mxu0 %v3711
    %v3713 = vpop.f32.mrb[0].mxu0
    %v3714 = vadd.f32 %v3249, %v3713
    %v3715 = vpop.f32.mrb[0].mxu0
    %3716 = vmatprep.mubr.f32.mxu0 0.0
    %v3717 = vand.u32 %v372, 4294901760
    %3718 = vmatmul.mubr.f32.gmra.mrb[0].mxu0 %v3717
    %v3719 = vpop.f32.mrb[0].mxu0
    %v3720 = vadd.f32 %v3255, %v3719
    %v3721 = vpop.f32.mrb[0].mxu0
    %3722 = vdwg.mxu0
    %vm3723 = vcmp.eq.s32.totalorder %v293, 2
    %vm3724 = vcmp.eq.s32.totalorder %v294, 2
    %vm3725 = vcmp.eq.s32.totalorder %v295, 2
    %vm3726 = vcmp.eq.s32.totalorder %v296, 2
    %vm3727 = vcmp.eq.s32.totalorder %v297, 2
    %vm3728 = vcmp.eq.s32.totalorder %v298, 2
    %vm3729 = vcmp.eq.s32.totalorder %v299, 2
    %vm3730 = vcmp.eq.s32.totalorder %v300, 2
    %vm3731 = vcmp.eq.s32.totalorder %v301, 2
    %vm3732 = vcmp.eq.s32.totalorder %v302, 2
    %vm3733 = vcmp.eq.s32.totalorder %v303, 2
    %vm3734 = vcmp.eq.s32.totalorder %v304, 2
    %vm3735 = vcmp.eq.s32.totalorder %v305, 2
    %vm3736 = vcmp.eq.s32.totalorder %v306, 2
    %vm3737 = vcmp.eq.s32.totalorder %v307, 2
    %vm3738 = vcmp.eq.s32.totalorder %v308, 2
    %v3739 = vsel %vm3723, %v3438, %v3342
    %v3740 = vsel %vm3724, %v3444, %v3348
    %v3741 = vsel %vm3725, %v3450, %v3354
    %v3742 = vsel %vm3726, %v3456, %v3360
    %v3743 = vsel %vm3727, %v3462, %v3366
    %v3744 = vsel %vm3728, %v3468, %v3372
    %v3745 = vsel %vm3729, %v3474, %v3378
    %v3746 = vsel %vm3730, %v3480, %v3384
    %v3747 = vsel %vm3731, %v3486, %v3390
    %v3748 = vsel %vm3732, %v3492, %v3396
    %v3749 = vsel %vm3733, %v3498, %v3402
    %v3750 = vsel %vm3734, %v3504, %v3408
    %v3751 = vsel %vm3735, %v3510, %v3414
    %v3752 = vsel %vm3736, %v3516, %v3420
    %v3753 = vsel %vm3737, %v3522, %v3426
    %v3754 = vsel %vm3738, %v3528, %v3432
    %vm3755 = vcmp.eq.s32.totalorder %v293, 3
    %vm3756 = vcmp.eq.s32.totalorder %v294, 3
    %vm3757 = vcmp.eq.s32.totalorder %v295, 3
    %vm3758 = vcmp.eq.s32.totalorder %v296, 3
    %vm3759 = vcmp.eq.s32.totalorder %v297, 3
    %vm3760 = vcmp.eq.s32.totalorder %v298, 3
    %vm3761 = vcmp.eq.s32.totalorder %v299, 3
    %vm3762 = vcmp.eq.s32.totalorder %v300, 3
    %vm3763 = vcmp.eq.s32.totalorder %v301, 3
    %vm3764 = vcmp.eq.s32.totalorder %v302, 3
    %vm3765 = vcmp.eq.s32.totalorder %v303, 3
    %vm3766 = vcmp.eq.s32.totalorder %v304, 3
    %vm3767 = vcmp.eq.s32.totalorder %v305, 3
    %vm3768 = vcmp.eq.s32.totalorder %v306, 3
    %vm3769 = vcmp.eq.s32.totalorder %v307, 3
    %vm3770 = vcmp.eq.s32.totalorder %v308, 3
    %v3771 = vsel %vm3755, %v3534, %v3739
    %v3772 = vsel %vm3756, %v3540, %v3740
    %v3773 = vsel %vm3757, %v3546, %v3741
    %v3774 = vsel %vm3758, %v3552, %v3742
    %v3775 = vsel %vm3759, %v3558, %v3743
    %v3776 = vsel %vm3760, %v3564, %v3744
    %v3777 = vsel %vm3761, %v3570, %v3745
    %v3778 = vsel %vm3762, %v3576, %v3746
    %v3779 = vsel %vm3763, %v3582, %v3747
    %v3780 = vsel %vm3764, %v3588, %v3748
    %v3781 = vsel %vm3765, %v3594, %v3749
    %v3782 = vsel %vm3766, %v3600, %v3750
    %v3783 = vsel %vm3767, %v3606, %v3751
    %v3784 = vsel %vm3768, %v3612, %v3752
    %v3785 = vsel %vm3769, %v3618, %v3753
    %v3786 = vsel %vm3770, %v3624, %v3754
    %vm3787 = vcmp.eq.s32.totalorder %v293, 4
    %vm3788 = vcmp.eq.s32.totalorder %v294, 4
    %vm3789 = vcmp.eq.s32.totalorder %v295, 4
    %vm3790 = vcmp.eq.s32.totalorder %v296, 4
    %vm3791 = vcmp.eq.s32.totalorder %v297, 4
    %vm3792 = vcmp.eq.s32.totalorder %v298, 4
    %vm3793 = vcmp.eq.s32.totalorder %v299, 4
    %vm3794 = vcmp.eq.s32.totalorder %v300, 4
    %vm3795 = vcmp.eq.s32.totalorder %v301, 4
    %vm3796 = vcmp.eq.s32.totalorder %v302, 4
    %vm3797 = vcmp.eq.s32.totalorder %v303, 4
    %vm3798 = vcmp.eq.s32.totalorder %v304, 4
    %vm3799 = vcmp.eq.s32.totalorder %v305, 4
    %vm3800 = vcmp.eq.s32.totalorder %v306, 4
    %vm3801 = vcmp.eq.s32.totalorder %v307, 4
    %vm3802 = vcmp.eq.s32.totalorder %v308, 4
    %v3803 = vsel %vm3787, %v3630, %v3771
    %v3804 = vsel %vm3788, %v3636, %v3772
    %v3805 = vsel %vm3789, %v3642, %v3773
    %v3806 = vsel %vm3790, %v3648, %v3774
    %v3807 = vsel %vm3791, %v3654, %v3775
    %v3808 = vsel %vm3792, %v3660, %v3776
    %v3809 = vsel %vm3793, %v3666, %v3777
    %v3810 = vsel %vm3794, %v3672, %v3778
    %v3811 = vsel %vm3795, %v3678, %v3779
    %v3812 = vsel %vm3796, %v3684, %v3780
    %v3813 = vsel %vm3797, %v3690, %v3781
    %v3814 = vsel %vm3798, %v3696, %v3782
    %v3815 = vsel %vm3799, %v3702, %v3783
    %v3816 = vsel %vm3800, %v3708, %v3784
    %v3817 = vsel %vm3801, %v3714, %v3785
    %v3818 = vsel %vm3802, %v3720, %v3786
    %v3819 = vmul.f32 %v3803, 0.2
    %v3820 = vmul.f32 %v3804, 0.2
    %v3821 = vmul.f32 %v3805, 0.2
    %v3822 = vmul.f32 %v3806, 0.2
    %v3823 = vmul.f32 %v3807, 0.2
    %v3824 = vmul.f32 %v3808, 0.2
    %v3825 = vmul.f32 %v3809, 0.2
    %v3826 = vmul.f32 %v3810, 0.2
    %v3827 = vmul.f32 %v3811, 0.2
    %v3828 = vmul.f32 %v3812, 0.2
    %v3829 = vmul.f32 %v3813, 0.2
    %v3830 = vmul.f32 %v3814, 0.2
    %v3831 = vmul.f32 %v3815, 0.2
    %v3832 = vmul.f32 %v3816, 0.2
    %v3833 = vmul.f32 %v3817, 0.2
    %v3834 = vmul.f32 %v3818, 0.2
    %v3835 = vmax.f32 %v3803, %v3819
    %v3836 = vmax.f32 %v3804, %v3820
    %v3837 = vmax.f32 %v3805, %v3821
    %v3838 = vmax.f32 %v3806, %v3822
    %v3839 = vmax.f32 %v3807, %v3823
    %v3840 = vmax.f32 %v3808, %v3824
    %v3841 = vmax.f32 %v3809, %v3825
    %v3842 = vmax.f32 %v3810, %v3826
    %v3843 = vmax.f32 %v3811, %v3827
    %v3844 = vmax.f32 %v3812, %v3828
    %v3845 = vmax.f32 %v3813, %v3829
    %v3846 = vmax.f32 %v3814, %v3830
    %v3847 = vmax.f32 %v3815, %v3831
    %v3848 = vmax.f32 %v3816, %v3832
    %v3849 = vmax.f32 %v3817, %v3833
    %v3850 = vmax.f32 %v3818, %v3834
    %vm3851 = vcmp.lt.s32.totalorder %v293, 0
    %vm3852 = vcmp.lt.s32.totalorder %v294, 0
    %vm3853 = vcmp.lt.s32.totalorder %v295, 0
    %vm3854 = vcmp.lt.s32.totalorder %v296, 0
    %vm3855 = vcmp.lt.s32.totalorder %v297, 0
    %vm3856 = vcmp.lt.s32.totalorder %v298, 0
    %vm3857 = vcmp.lt.s32.totalorder %v299, 0
    %vm3858 = vcmp.lt.s32.totalorder %v300, 0
    %vm3859 = vcmp.lt.s32.totalorder %v301, 0
    %vm3860 = vcmp.lt.s32.totalorder %v302, 0
    %vm3861 = vcmp.lt.s32.totalorder %v303, 0
    %vm3862 = vcmp.lt.s32.totalorder %v304, 0
    %vm3863 = vcmp.lt.s32.totalorder %v305, 0
    %vm3864 = vcmp.lt.s32.totalorder %v306, 0
    %vm3865 = vcmp.lt.s32.totalorder %v307, 0
    %vm3866 = vcmp.lt.s32.totalorder %v308, 0
    %v3867 = vsel %vm3851, -1.8e+16, -9e+15
    %v3868 = vsel %vm3852, -1.8e+16, -9e+15
    %v3869 = vsel %vm3853, -1.8e+16, -9e+15
    %v3870 = vsel %vm3854, -1.8e+16, -9e+15
    %v3871 = vsel %vm3855, -1.8e+16, -9e+15
    %v3872 = vsel %vm3856, -1.8e+16, -9e+15
    %v3873 = vsel %vm3857, -1.8e+16, -9e+15
    %v3874 = vsel %vm3858, -1.8e+16, -9e+15
    %v3875 = vsel %vm3859, -1.8e+16, -9e+15
    %v3876 = vsel %vm3860, -1.8e+16, -9e+15
    %v3877 = vsel %vm3861, -1.8e+16, -9e+15
    %v3878 = vsel %vm3862, -1.8e+16, -9e+15
    %v3879 = vsel %vm3863, -1.8e+16, -9e+15
    %v3880 = vsel %vm3864, -1.8e+16, -9e+15
    %v3881 = vsel %vm3865, -1.8e+16, -9e+15
    %v3882 = vsel %vm3866, -1.8e+16, -9e+15
    %vm3883 = vcmp.gt.s32.totalorder %v293, 0
    %vm3884 = vcmp.gt.s32.totalorder %v294, 0
    %vm3885 = vcmp.gt.s32.totalorder %v295, 0
    %vm3886 = vcmp.gt.s32.totalorder %v296, 0
    %vm3887 = vcmp.gt.s32.totalorder %v297, 0
    %vm3888 = vcmp.gt.s32.totalorder %v298, 0
    %vm3889 = vcmp.gt.s32.totalorder %v299, 0
    %vm3890 = vcmp.gt.s32.totalorder %v300, 0
    %vm3891 = vcmp.gt.s32.totalorder %v301, 0
    %vm3892 = vcmp.gt.s32.totalorder %v302, 0
    %vm3893 = vcmp.gt.s32.totalorder %v303, 0
    %vm3894 = vcmp.gt.s32.totalorder %v304, 0
    %vm3895 = vcmp.gt.s32.totalorder %v305, 0
    %vm3896 = vcmp.gt.s32.totalorder %v306, 0
    %vm3897 = vcmp.gt.s32.totalorder %v307, 0
    %vm3898 = vcmp.gt.s32.totalorder %v308, 0
    %v3899 = vsel %vm3883, %v3835, %v3867
    %v3900 = vsel %vm3884, %v3836, %v3868
    %v3901 = vsel %vm3885, %v3837, %v3869
    %v3902 = vsel %vm3886, %v3838, %v3870
    %v3903 = vsel %vm3887, %v3839, %v3871
    %v3904 = vsel %vm3888, %v3840, %v3872
    %v3905 = vsel %vm3889, %v3841, %v3873
    %v3906 = vsel %vm3890, %v3842, %v3874
    %v3907 = vsel %vm3891, %v3843, %v3875
    %v3908 = vsel %vm3892, %v3844, %v3876
    %v3909 = vsel %vm3893, %v3845, %v3877
    %v3910 = vsel %vm3894, %v3846, %v3878
    %v3911 = vsel %vm3895, %v3847, %v3879
    %v3912 = vsel %vm3896, %v3848, %v3880
    %v3913 = vsel %vm3897, %v3849, %v3881
    %v3914 = vsel %vm3898, %v3850, %v3882
    %v3915 = vld [vmem:[#allocation2] sm:$0xff]
    %v3916 = vld [vmem:[#allocation2 + $0x8] sm:$0xff]
    %v3917 = vld [vmem:[#allocation2 + $0x10] sm:$0xff]
    %v3918 = vld [vmem:[#allocation2 + $0x18] sm:$0xff]
    %v3919 = vld [vmem:[#allocation2 + $0x20] sm:$0xff]
    %v3920 = vld [vmem:[#allocation2 + $0x28] sm:$0xff]
    %v3921 = vld [vmem:[#allocation2 + $0x30] sm:$0xff]
    %v3922 = vld [vmem:[#allocation2 + $0x38] sm:$0xff]
    %v3923 = vld [vmem:[#allocation2 + $0x40] sm:$0xff]
    %v3924 = vld [vmem:[#allocation2 + $0x48] sm:$0xff]
    %v3925 = vld [vmem:[#allocation2 + $0x50] sm:$0xff]
    %v3926 = vld [vmem:[#allocation2 + $0x58] sm:$0xff]
    %v3927 = vld [vmem:[#allocation2 + $0x60] sm:$0xff]
    %v3928 = vld [vmem:[#allocation2 + $0x68] sm:$0xff]
    %v3929 = vld [vmem:[#allocation2 + $0x70] sm:$0xff]
    %v3930 = vld [vmem:[#allocation2 + $0x78] sm:$0xff]
    %3931 = vmax.xlane.f32.xlu0 %v3899
    %v3932 = vpop.xlane.xlu0 %3931
    %3933 = vmax.xlane.f32.xlu0 %v3900
    %v3934 = vpop.xlane.xlu0 %3933
    %3935 = vmax.xlane.f32.xlu0 %v3901
    %v3936 = vpop.xlane.xlu0 %3935
    %3937 = vmax.xlane.f32.xlu0 %v3902
    %v3938 = vpop.xlane.xlu0 %3937
    %3939 = vmax.xlane.f32.xlu0 %v3903
    %v3940 = vpop.xlane.xlu0 %3939
    %3941 = vmax.xlane.f32.xlu0 %v3904
    %v3942 = vpop.xlane.xlu0 %3941
    %3943 = vmax.xlane.f32.xlu0 %v3905
    %v3944 = vpop.xlane.xlu0 %3943
    %3945 = vmax.xlane.f32.xlu0 %v3906
    %v3946 = vpop.xlane.xlu0 %3945
    %3947 = vmax.xlane.f32.xlu0 %v3907
    %v3948 = vpop.xlane.xlu0 %3947
    %3949 = vmax.xlane.f32.xlu0 %v3908
    %v3950 = vpop.xlane.xlu0 %3949
    %3951 = vmax.xlane.f32.xlu0 %v3909
    %v3952 = vpop.xlane.xlu0 %3951
    %3953 = vmax.xlane.f32.xlu0 %v3910
    %v3954 = vpop.xlane.xlu0 %3953
    %3955 = vmax.xlane.f32.xlu0 %v3911
    %v3956 = vpop.xlane.xlu0 %3955
    %3957 = vmax.xlane.f32.xlu0 %v3912
    %v3958 = vpop.xlane.xlu0 %3957
    %3959 = vmax.xlane.f32.xlu0 %v3913
    %v3960 = vpop.xlane.xlu0 %3959
    %3961 = vmax.xlane.f32.xlu0 %v3914
    %v3962 = vpop.xlane.xlu0 %3961
    %v3963 = vmax.f32 %v3915, %v3932
    %v3964 = vmax.f32 %v3916, %v3934
    %v3965 = vmax.f32 %v3917, %v3936
    %v3966 = vmax.f32 %v3918, %v3938
    %v3967 = vmax.f32 %v3919, %v3940
    %v3968 = vmax.f32 %v3920, %v3942
    %v3969 = vmax.f32 %v3921, %v3944
    %v3970 = vmax.f32 %v3922, %v3946
    %v3971 = vmax.f32 %v3923, %v3948
    %v3972 = vmax.f32 %v3924, %v3950
    %v3973 = vmax.f32 %v3925, %v3952
    %v3974 = vmax.f32 %v3926, %v3954
    %v3975 = vmax.f32 %v3927, %v3956
    %v3976 = vmax.f32 %v3928, %v3958
    %v3977 = vmax.f32 %v3929, %v3960
    %v3978 = vmax.f32 %v3930, %v3962
    %v3979 = vsub.f32 %v3915, %v3963
    %v3980 = vsub.f32 %v3916, %v3964
    %v3981 = vsub.f32 %v3917, %v3965
    %v3982 = vsub.f32 %v3918, %v3966
    %v3983 = vsub.f32 %v3919, %v3967
    %v3984 = vsub.f32 %v3920, %v3968
    %v3985 = vsub.f32 %v3921, %v3969
    %v3986 = vsub.f32 %v3922, %v3970
    %v3987 = vsub.f32 %v3923, %v3971
    %v3988 = vsub.f32 %v3924, %v3972
    %v3989 = vsub.f32 %v3925, %v3973
    %v3990 = vsub.f32 %v3926, %v3974
    %v3991 = vsub.f32 %v3927, %v3975
    %v3992 = vsub.f32 %v3928, %v3976
    %v3993 = vsub.f32 %v3929, %v3977
    %v3994 = vsub.f32 %v3930, %v3978
    %v3995 = vmul.f32 %v3979, 1.442695
    %v3996 = vpow.pop %v3995
    %v3997 = vmul.f32 %v3980, 1.442695
    %v3998 = vpow.pop %v3997
    %v3999 = vmul.f32 %v3981, 1.442695
    %v4000 = vpow.pop %v3999
    %v4001 = vmul.f32 %v3982, 1.442695
    %v4002 = vpow.pop %v4001
    %v4003 = vmul.f32 %v3983, 1.442695
    %v4004 = vpow.pop %v4003
    %v4005 = vmul.f32 %v3984, 1.442695
    %v4006 = vpow.pop %v4005
    %v4007 = vmul.f32 %v3985, 1.442695
    %v4008 = vpow.pop %v4007
    %v4009 = vmul.f32 %v3986, 1.442695
    %v4010 = vpow.pop %v4009
    %v4011 = vmul.f32 %v3987, 1.442695
    %v4012 = vpow.pop %v4011
    %v4013 = vmul.f32 %v3988, 1.442695
    %v4014 = vpow.pop %v4013
    %v4015 = vmul.f32 %v3989, 1.442695
    %v4016 = vpow.pop %v4015
    %v4017 = vmul.f32 %v3990, 1.442695
    %v4018 = vpow.pop %v4017
    %v4019 = vmul.f32 %v3991, 1.442695
    %v4020 = vpow.pop %v4019
    %v4021 = vmul.f32 %v3992, 1.442695
    %v4022 = vpow.pop %v4021
    %v4023 = vmul.f32 %v3993, 1.442695
    %v4024 = vpow.pop %v4023
    %v4025 = vmul.f32 %v3994, 1.442695
    %v4026 = vpow.pop %v4025
    %4028 = vset.pattern.permute.xlu0 0
    %4029 = vperm.xlu0 %4028, %v3963
    %v4030 = vpop.permute.xlu0 %4029
    %4033 = vset.pattern.permute.xlu0 0
    %4034 = vperm.xlu0 %4033, %v3964
    %v4035 = vpop.permute.xlu0 %4034
    %4038 = vset.pattern.permute.xlu0 0
    %4039 = vperm.xlu0 %4038, %v3965
    %v4040 = vpop.permute.xlu0 %4039
    %4043 = vset.pattern.permute.xlu0 0
    %4044 = vperm.xlu0 %4043, %v3966
    %v4045 = vpop.permute.xlu0 %4044
    %4048 = vset.pattern.permute.xlu0 0
    %4049 = vperm.xlu0 %4048, %v3967
    %v4050 = vpop.permute.xlu0 %4049
    %4053 = vset.pattern.permute.xlu0 0
    %4054 = vperm.xlu0 %4053, %v3968
    %v4055 = vpop.permute.xlu0 %4054
    %4058 = vset.pattern.permute.xlu0 0
    %4059 = vperm.xlu0 %4058, %v3969
    %v4060 = vpop.permute.xlu0 %4059
    %4063 = vset.pattern.permute.xlu0 0
    %4064 = vperm.xlu0 %4063, %v3970
    %v4065 = vpop.permute.xlu0 %4064
    %4068 = vset.pattern.permute.xlu0 0
    %4069 = vperm.xlu0 %4068, %v3971
    %v4070 = vpop.permute.xlu0 %4069
    %4073 = vset.pattern.permute.xlu0 0
    %4074 = vperm.xlu0 %4073, %v3972
    %v4075 = vpop.permute.xlu0 %4074
    %4078 = vset.pattern.permute.xlu0 0
    %4079 = vperm.xlu0 %4078, %v3973
    %v4080 = vpop.permute.xlu0 %4079
    %4083 = vset.pattern.permute.xlu0 0
    %4084 = vperm.xlu0 %4083, %v3974
    %v4085 = vpop.permute.xlu0 %4084
    %4088 = vset.pattern.permute.xlu0 0
    %4089 = vperm.xlu0 %4088, %v3975
    %v4090 = vpop.permute.xlu0 %4089
    %4093 = vset.pattern.permute.xlu0 0
    %4094 = vperm.xlu0 %4093, %v3976
    %v4095 = vpop.permute.xlu0 %4094
    %4098 = vset.pattern.permute.xlu0 0
    %4099 = vperm.xlu0 %4098, %v3977
    %v4100 = vpop.permute.xlu0 %4099
    %4103 = vset.pattern.permute.xlu0 0
    %4104 = vperm.xlu0 %4103, %v3978
    %v4105 = vpop.permute.xlu0 %4104
    %v4107 = vsub.f32 %v3899, %v4030
    %v4108 = vsub.f32 %v3900, %v4035
    %v4109 = vsub.f32 %v3901, %v4040
    %v4110 = vsub.f32 %v3902, %v4045
    %v4111 = vsub.f32 %v3903, %v4050
    %v4112 = vsub.f32 %v3904, %v4055
    %v4113 = vsub.f32 %v3905, %v4060
    %v4114 = vsub.f32 %v3906, %v4065
    %v4115 = vsub.f32 %v3907, %v4070
    %v4116 = vsub.f32 %v3908, %v4075
    %v4117 = vsub.f32 %v3909, %v4080
    %v4118 = vsub.f32 %v3910, %v4085
    %v4119 = vsub.f32 %v3911, %v4090
    %v4120 = vsub.f32 %v3912, %v4095
    %v4121 = vsub.f32 %v3913, %v4100
    %v4122 = vsub.f32 %v3914, %v4105
    %v4123 = vmul.f32 %v4107, 1.442695
    %v4124 = vpow.pop %v4123
    %v4125 = vmul.f32 %v4108, 1.442695
    %v4126 = vpow.pop %v4125
    %v4127 = vmul.f32 %v4109, 1.442695
    %v4128 = vpow.pop %v4127
    %v4129 = vmul.f32 %v4110, 1.442695
    %v4130 = vpow.pop %v4129
    %v4131 = vmul.f32 %v4111, 1.442695
    %v4132 = vpow.pop %v4131
    %v4133 = vmul.f32 %v4112, 1.442695
    %v4134 = vpow.pop %v4133
    %v4135 = vmul.f32 %v4113, 1.442695
    %v4136 = vpow.pop %v4135
    %v4137 = vmul.f32 %v4114, 1.442695
    %v4138 = vpow.pop %v4137
    %v4139 = vmul.f32 %v4115, 1.442695
    %v4140 = vpow.pop %v4139
    %v4141 = vmul.f32 %v4116, 1.442695
    %v4142 = vpow.pop %v4141
    %v4143 = vmul.f32 %v4117, 1.442695
    %v4144 = vpow.pop %v4143
    %v4145 = vmul.f32 %v4118, 1.442695
    %v4146 = vpow.pop %v4145
    %v4147 = vmul.f32 %v4119, 1.442695
    %v4148 = vpow.pop %v4147
    %v4149 = vmul.f32 %v4120, 1.442695
    %v4150 = vpow.pop %v4149
    %v4151 = vmul.f32 %v4121, 1.442695
    %v4152 = vpow.pop %v4151
    %v4153 = vmul.f32 %v4122, 1.442695
    %v4154 = vpow.pop %v4153
    %v4155 = vld [vmem:[#allocation3] sm:$0xff]
    %v4156 = vld [vmem:[#allocation3 + $0x8] sm:$0xff]
    %v4157 = vld [vmem:[#allocation3 + $0x10] sm:$0xff]
    %v4158 = vld [vmem:[#allocation3 + $0x18] sm:$0xff]
    %v4159 = vld [vmem:[#allocation3 + $0x20] sm:$0xff]
    %v4160 = vld [vmem:[#allocation3 + $0x28] sm:$0xff]
    %v4161 = vld [vmem:[#allocation3 + $0x30] sm:$0xff]
    %v4162 = vld [vmem:[#allocation3 + $0x38] sm:$0xff]
    %v4163 = vld [vmem:[#allocation3 + $0x40] sm:$0xff]
    %v4164 = vld [vmem:[#allocation3 + $0x48] sm:$0xff]
    %v4165 = vld [vmem:[#allocation3 + $0x50] sm:$0xff]
    %v4166 = vld [vmem:[#allocation3 + $0x58] sm:$0xff]
    %v4167 = vld [vmem:[#allocation3 + $0x60] sm:$0xff]
    %v4168 = vld [vmem:[#allocation3 + $0x68] sm:$0xff]
    %v4169 = vld [vmem:[#allocation3 + $0x70] sm:$0xff]
    %v4170 = vld [vmem:[#allocation3 + $0x78] sm:$0xff]
    %v4171 = vmul.f32 %v3996, %v4155
    %v4172 = vmul.f32 %v3998, %v4156
    %v4173 = vmul.f32 %v4000, %v4157
    %v4174 = vmul.f32 %v4002, %v4158
    %v4175 = vmul.f32 %v4004, %v4159
    %v4176 = vmul.f32 %v4006, %v4160
    %v4177 = vmul.f32 %v4008, %v4161
    %v4178 = vmul.f32 %v4010, %v4162
    %v4179 = vmul.f32 %v4012, %v4163
    %v4180 = vmul.f32 %v4014, %v4164
    %v4181 = vmul.f32 %v4016, %v4165
    %v4182 = vmul.f32 %v4018, %v4166
    %v4183 = vmul.f32 %v4020, %v4167
    %v4184 = vmul.f32 %v4022, %v4168
    %v4185 = vmul.f32 %v4024, %v4169
    %v4186 = vmul.f32 %v4026, %v4170
    %4187 = vadd.xlane.f32.xlu0 %v4124
    %v4188 = vpop.xlane.xlu0 %4187
    %4189 = vadd.xlane.f32.xlu0 %v4126
    %v4190 = vpop.xlane.xlu0 %4189
    %4191 = vadd.xlane.f32.xlu0 %v4128
    %v4192 = vpop.xlane.xlu0 %4191
    %4193 = vadd.xlane.f32.xlu0 %v4130
    %v4194 = vpop.xlane.xlu0 %4193
    %4195 = vadd.xlane.f32.xlu0 %v4132
    %v4196 = vpop.xlane.xlu0 %4195
    %4197 = vadd.xlane.f32.xlu0 %v4134
    %v4198 = vpop.xlane.xlu0 %4197
    %4199 = vadd.xlane.f32.xlu0 %v4136
    %v4200 = vpop.xlane.xlu0 %4199
    %4201 = vadd.xlane.f32.xlu0 %v4138
    %v4202 = vpop.xlane.xlu0 %4201
    %4203 = vadd.xlane.f32.xlu0 %v4140
    %v4204 = vpop.xlane.xlu0 %4203
    %4205 = vadd.xlane.f32.xlu0 %v4142
    %v4206 = vpop.xlane.xlu0 %4205
    %4207 = vadd.xlane.f32.xlu0 %v4144
    %v4208 = vpop.xlane.xlu0 %4207
    %4209 = vadd.xlane.f32.xlu0 %v4146
    %v4210 = vpop.xlane.xlu0 %4209
    %4211 = vadd.xlane.f32.xlu0 %v4148
    %v4212 = vpop.xlane.xlu0 %4211
    %4213 = vadd.xlane.f32.xlu0 %v4150
    %v4214 = vpop.xlane.xlu0 %4213
    %4215 = vadd.xlane.f32.xlu0 %v4152
    %v4216 = vpop.xlane.xlu0 %4215
    %4217 = vadd.xlane.f32.xlu0 %v4154
    %v4218 = vpop.xlane.xlu0 %4217
    %v4219 = vadd.f32 %v4171, %v4188
    %v4220 = vadd.f32 %v4172, %v4190
    %v4221 = vadd.f32 %v4173, %v4192
    %v4222 = vadd.f32 %v4174, %v4194
    %v4223 = vadd.f32 %v4175, %v4196
    %v4224 = vadd.f32 %v4176, %v4198
    %v4225 = vadd.f32 %v4177, %v4200
    %v4226 = vadd.f32 %v4178, %v4202
    %v4227 = vadd.f32 %v4179, %v4204
    %v4228 = vadd.f32 %v4180, %v4206
    %v4229 = vadd.f32 %v4181, %v4208
    %v4230 = vadd.f32 %v4182, %v4210
    %v4231 = vadd.f32 %v4183, %v4212
    %v4232 = vadd.f32 %v4184, %v4214
    %v4233 = vadd.f32 %v4185, %v4216
    %v4234 = vadd.f32 %v4186, %v4218
    %vm4235 = vcmask 7168
    %4236 = vst.msk [vmem:[#allocation3] sm:$0xff] %vm4235, %v4219
    %4237 = vst.msk [vmem:[#allocation3 + $0x8] sm:$0xff] %vm4235, %v4220
    %4238 = vst.msk [vmem:[#allocation3 + $0x10] sm:$0xff] %vm4235, %v4221
    %4239 = vst.msk [vmem:[#allocation3 + $0x18] sm:$0xff] %vm4235, %v4222
    %4240 = vst.msk [vmem:[#allocation3 + $0x20] sm:$0xff] %vm4235, %v4223
    %4241 = vst.msk [vmem:[#allocation3 + $0x28] sm:$0xff] %vm4235, %v4224
    %4242 = vst.msk [vmem:[#allocation3 + $0x30] sm:$0xff] %vm4235, %v4225
    %4243 = vst.msk [vmem:[#allocation3 + $0x38] sm:$0xff] %vm4235, %v4226
    %4244 = vst.msk [vmem:[#allocation3 + $0x40] sm:$0xff] %vm4235, %v4227
    %4245 = vst.msk [vmem:[#allocation3 + $0x48] sm:$0xff] %vm4235, %v4228
    %4246 = vst.msk [vmem:[#allocation3 + $0x50] sm:$0xff] %vm4235, %v4229
    %4247 = vst.msk [vmem:[#allocation3 + $0x58] sm:$0xff] %vm4235, %v4230
    %4248 = vst.msk [vmem:[#allocation3 + $0x60] sm:$0xff] %vm4235, %v4231
    %4249 = vst.msk [vmem:[#allocation3 + $0x68] sm:$0xff] %vm4235, %v4232
    %4250 = vst.msk [vmem:[#allocation3 + $0x70] sm:$0xff] %vm4235, %v4233
    %4251 = vst.msk [vmem:[#allocation3 + $0x78] sm:$0xff] %vm4235, %v4234
    %v4252 = vld [vmem:[#allocation4] sm:$0xff]
    %v4253 = vld [vmem:[#allocation4 + $0x8] sm:$0xff]
    %v4254 = vld [vmem:[#allocation4 + $0x10] sm:$0xff]
    %v4255 = vld [vmem:[#allocation4 + $0x18] sm:$0xff]
    %v4256 = vld [vmem:[#allocation4 + $0x20] sm:$0xff]
    %v4257 = vld [vmem:[#allocation4 + $0x28] sm:$0xff]
    %v4258 = vld [vmem:[#allocation4 + $0x30] sm:$0xff]
    %v4259 = vld [vmem:[#allocation4 + $0x38] sm:$0xff]
    %v4260 = vld [vmem:[#allocation4 + $0x40] sm:$0xff]
    %v4261 = vld [vmem:[#allocation4 + $0x48] sm:$0xff]
    %v4262 = vld [vmem:[#allocation4 + $0x50] sm:$0xff]
    %v4263 = vld [vmem:[#allocation4 + $0x58] sm:$0xff]
    %v4264 = vld [vmem:[#allocation4 + $0x60] sm:$0xff]
    %v4265 = vld [vmem:[#allocation4 + $0x68] sm:$0xff]
    %v4266 = vld [vmem:[#allocation4 + $0x70] sm:$0xff]
    %v4267 = vld [vmem:[#allocation4 + $0x78] sm:$0xff]
    %4269 = vset.pattern.permute.xlu0 0
    %4270 = vperm.xlu0 %4269, %v3996
    %v4271 = vpop.permute.xlu0 %4270
    %4274 = vset.pattern.permute.xlu0 0
    %4275 = vperm.xlu0 %4274, %v3998
    %v4276 = vpop.permute.xlu0 %4275
    %4279 = vset.pattern.permute.xlu0 0
    %4280 = vperm.xlu0 %4279, %v4000
    %v4281 = vpop.permute.xlu0 %4280
    %4284 = vset.pattern.permute.xlu0 0
    %4285 = vperm.xlu0 %4284, %v4002
    %v4286 = vpop.permute.xlu0 %4285
    %4289 = vset.pattern.permute.xlu0 0
    %4290 = vperm.xlu0 %4289, %v4004
    %v4291 = vpop.permute.xlu0 %4290
    %4294 = vset.pattern.permute.xlu0 0
    %4295 = vperm.xlu0 %4294, %v4006
    %v4296 = vpop.permute.xlu0 %4295
    %4299 = vset.pattern.permute.xlu0 0
    %4300 = vperm.xlu0 %4299, %v4008
    %v4301 = vpop.permute.xlu0 %4300
    %4304 = vset.pattern.permute.xlu0 0
    %4305 = vperm.xlu0 %4304, %v4010
    %v4306 = vpop.permute.xlu0 %4305
    %4309 = vset.pattern.permute.xlu0 0
    %4310 = vperm.xlu0 %4309, %v4012
    %v4311 = vpop.permute.xlu0 %4310
    %4314 = vset.pattern.permute.xlu0 0
    %4315 = vperm.xlu0 %4314, %v4014
    %v4316 = vpop.permute.xlu0 %4315
    %4319 = vset.pattern.permute.xlu0 0
    %4320 = vperm.xlu0 %4319, %v4016
    %v4321 = vpop.permute.xlu0 %4320
    %4324 = vset.pattern.permute.xlu0 0
    %4325 = vperm.xlu0 %4324, %v4018
    %v4326 = vpop.permute.xlu0 %4325
    %4329 = vset.pattern.permute.xlu0 0
    %4330 = vperm.xlu0 %4329, %v4020
    %v4331 = vpop.permute.xlu0 %4330
    %4334 = vset.pattern.permute.xlu0 0
    %4335 = vperm.xlu0 %4334, %v4022
    %v4336 = vpop.permute.xlu0 %4335
    %4339 = vset.pattern.permute.xlu0 0
    %4340 = vperm.xlu0 %4339, %v4024
    %v4341 = vpop.permute.xlu0 %4340
    %4344 = vset.pattern.permute.xlu0 0
    %4345 = vperm.xlu0 %4344, %v4026
    %v4346 = vpop.permute.xlu0 %4345
    %v4348 = vmul.f32 %v4271, %v4252
    %v4349 = vmul.f32 %v4276, %v4253
    %v4350 = vmul.f32 %v4281, %v4254
    %v4351 = vmul.f32 %v4286, %v4255
    %v4352 = vmul.f32 %v4291, %v4256
    %v4353 = vmul.f32 %v4296, %v4257
    %v4354 = vmul.f32 %v4301, %v4258
    %v4355 = vmul.f32 %v4306, %v4259
    %v4356 = vmul.f32 %v4311, %v4260
    %v4357 = vmul.f32 %v4316, %v4261
    %v4358 = vmul.f32 %v4321, %v4262
    %v4359 = vmul.f32 %v4326, %v4263
    %v4360 = vmul.f32 %v4331, %v4264
    %v4361 = vmul.f32 %v4336, %v4265
    %v4362 = vmul.f32 %v4341, %v4266
    %v4363 = vmul.f32 %v4346, %v4267
    %4364 = vmatprep.subr.mxu0 0.0
    %v4365 = vand.u32 %v273, 4294901760
    %4366 = vmatpush1.msra.mxu0 %v4365
    %4367 = vmatprep.subr.mxu0 0.0
    %v4368 = vand.u32 %v274, 4294901760
    %4369 = vmatpush1.msra.mxu0 %v4368
    %4370 = vmatprep.subr.mxu0 0.0
    %v4371 = vand.u32 %v275, 4294901760
    %4372 = vmatpush1.msra.mxu0 %v4371
    %4373 = vmatprep.subr.mxu0 0.0
    %v4374 = vand.u32 %v276, 4294901760
    %4375 = vmatpush1.msra.mxu0 %v4374
    %4376 = vmatprep.subr.mxu0 0.0
    %v4377 = vand.u32 %v277, 4294901760
    %4378 = vmatpush1.msra.mxu0 %v4377
    %4379 = vmatprep.subr.mxu0 0.0
    %v4380 = vand.u32 %v278, 4294901760
    %4381 = vmatpush1.msra.mxu0 %v4380
    %4382 = vmatprep.subr.mxu0 0.0
    %v4383 = vand.u32 %v279, 4294901760
    %4384 = vmatpush1.msra.mxu0 %v4383
    %4385 = vmatprep.subr.mxu0 0.0
    %v4386 = vand.u32 %v280, 4294901760
    %4387 = vmatpush1.msra.mxu0 %v4386
    %4388 = vmatprep.subr.mxu0 0.0
    %v4389 = vand.u32 %v281, 4294901760
    %4390 = vmatpush1.msra.mxu0 %v4389
    %4391 = vmatprep.subr.mxu0 0.0
    %v4392 = vand.u32 %v282, 4294901760
    %4393 = vmatpush1.msra.mxu0 %v4392
    %4394 = vmatprep.subr.mxu0 0.0
    %v4395 = vand.u32 %v283, 4294901760
    %4396 = vmatpush1.msra.mxu0 %v4395
    %4397 = vmatprep.subr.mxu0 0.0
    %v4398 = vand.u32 %v284, 4294901760
    %4399 = vmatpush1.msra.mxu0 %v4398
    %4400 = vmatprep.subr.mxu0 0.0
    %v4401 = vand.u32 %v285, 4294901760
    %4402 = vmatpush1.msra.mxu0 %v4401
    %4403 = vmatprep.subr.mxu0 0.0
    %v4404 = vand.u32 %v286, 4294901760
    %4405 = vmatpush1.msra.mxu0 %v4404
    %4406 = vmatprep.subr.mxu0 0.0
    %v4407 = vand.u32 %v287, 4294901760
    %4408 = vmatpush1.msra.mxu0 %v4407
    %4409 = vmatprep.subr.mxu0 0.0
    %v4410 = vand.u32 %v288, 4294901760
    %4411 = vmatpush1.msra.mxu0 %v4410
    %4412 = vmatprep.subr.mxu0 0.0
    %4413 = vmatpush1.msra.mxu0 0.0
    %4414 = vmatprep.subr.mxu0 0.0
    %4415 = vmatpush1.msra.mxu0 0.0
    %4416 = vmatprep.subr.mxu0 0.0
    %4417 = vmatpush1.msra.mxu0 0.0
    %4418 = vmatprep.subr.mxu0 0.0
    %4419 = vmatpush1.msra.mxu0 0.0
    %4420 = vmatprep.subr.mxu0 0.0
    %4421 = vmatpush1.msra.mxu0 0.0
    %4422 = vmatprep.subr.mxu0 0.0
    %4423 = vmatpush1.msra.mxu0 0.0
    %4424 = vmatprep.subr.mxu0 0.0
    %4425 = vmatpush1.msra.mxu0 0.0
    %4426 = vmatprep.subr.mxu0 0.0
    %4427 = vmatpush1.msra.mxu0 0.0
    %4428 = vmatprep.subr.mxu0 0.0
    %4429 = vmatpush1.msra.mxu0 0.0
    %4430 = vmatprep.subr.mxu0 0.0
    %4431 = vmatpush1.msra.mxu0 0.0
    %4432 = vmatprep.subr.mxu0 0.0
    %4433 = vmatpush1.msra.mxu0 0.0
    %4434 = vmatprep.subr.mxu0 0.0
    %4435 = vmatpush1.msra.mxu0 0.0
    %4436 = vmatprep.subr.mxu0 0.0
    %4437 = vmatpush1.msra.mxu0 0.0
    %4438 = vmatprep.subr.mxu0 0.0
    %4439 = vmatpush1.msra.mxu0 0.0
    %4440 = vmatprep.subr.mxu0 0.0
    %4441 = vmatpush1.msra.mxu0 0.0
    %4442 = vmatprep.subr.mxu0 0.0
    %4443 = vmatpush1.msra.mxu0 0.0
    %4444 = vmatprep.mubr.f32.mxu0 0.0
    %v4445 = vand.u32 %v4124, 4294901760
    %v4446 = vsub.f32 %v4124, %v4445
    %v4447 = vand.u32 %v4446, 4294901760
    %v4448 = vsub.f32 %v4446, %v4447
    %v4449 = vand.u32 %v4448, 4294901760
    %4450 = vmatmul.mubr.f32.gmra.mrb[0].mxu0 %v4449
    %v4451 = vpop.f32.mrb[0].mxu0
    %v4452 = vadd.f32 0.0, %v4451
    %v4453 = vpop.f32.mrb[0].mxu0
    %4454 = vmatprep.mubr.f32.mxu0 0.0
    %v4455 = vand.u32 %v4126, 4294901760
    %v4456 = vsub.f32 %v4126, %v4455
    %v4457 = vand.u32 %v4456, 4294901760
    %v4458 = vsub.f32 %v4456, %v4457
    %v4459 = vand.u32 %v4458, 4294901760
    %4460 = vmatmul.mubr.f32.gmra.mrb[0].mxu0 %v4459
    %v4461 = vpop.f32.mrb[0].mxu0
    %v4462 = vadd.f32 0.0, %v4461
    %v4463 = vpop.f32.mrb[0].mxu0
    %4464 = vmatprep.mubr.f32.mxu0 0.0
    %v4465 = vand.u32 %v4128, 4294901760
    %v4466 = vsub.f32 %v4128, %v4465
    %v4467 = vand.u32 %v4466, 4294901760
    %v4468 = vsub.f32 %v4466, %v4467
    %v4469 = vand.u32 %v4468, 4294901760
    %4470 = vmatmul.mubr.f32.gmra.mrb[0].mxu0 %v4469
    %v4471 = vpop.f32.mrb[0].mxu0
    %v4472 = vadd.f32 0.0, %v4471
    %v4473 = vpop.f32.mrb[0].mxu0
    %4474 = vmatprep.mubr.f32.mxu0 0.0
    %v4475 = vand.u32 %v4130, 4294901760
    %v4476 = vsub.f32 %v4130, %v4475
    %v4477 = vand.u32 %v4476, 4294901760
    %v4478 = vsub.f32 %v4476, %v4477
    %v4479 = vand.u32 %v4478, 4294901760
    %4480 = vmatmul.mubr.f32.gmra.mrb[0].mxu0 %v4479
    %v4481 = vpop.f32.mrb[0].mxu0
    %v4482 = vadd.f32 0.0, %v4481
    %v4483 = vpop.f32.mrb[0].mxu0
    %4484 = vmatprep.mubr.f32.mxu0 0.0
    %v4485 = vand.u32 %v4132, 4294901760
    %v4486 = vsub.f32 %v4132, %v4485
    %v4487 = vand.u32 %v4486, 4294901760
    %v4488 = vsub.f32 %v4486, %v4487
    %v4489 = vand.u32 %v4488, 4294901760
    %4490 = vmatmul.mubr.f32.gmra.mrb[0].mxu0 %v4489
    %v4491 = vpop.f32.mrb[0].mxu0
    %v4492 = vadd.f32 0.0, %v4491
    %v4493 = vpop.f32.mrb[0].mxu0
    %4494 = vmatprep.mubr.f32.mxu0 0.0
    %v4495 = vand.u32 %v4134, 4294901760
    %v4496 = vsub.f32 %v4134, %v4495
    %v4497 = vand.u32 %v4496, 4294901760
    %v4498 = vsub.f32 %v4496, %v4497
    %v4499 = vand.u32 %v4498, 4294901760
    %4500 = vmatmul.mubr.f32.gmra.mrb[0].mxu0 %v4499
    %v4501 = vpop.f32.mrb[0].mxu0
    %v4502 = vadd.f32 0.0, %v4501
    %v4503 = vpop.f32.mrb[0].mxu0
    %4504 = vmatprep.mubr.f32.mxu0 0.0
    %v4505 = vand.u32 %v4136, 4294901760
    %v4506 = vsub.f32 %v4136, %v4505
    %v4507 = vand.u32 %v4506, 4294901760
    %v4508 = vsub.f32 %v4506, %v4507
    %v4509 = vand.u32 %v4508, 4294901760
    %4510 = vmatmul.mubr.f32.gmra.mrb[0].mxu0 %v4509
    %v4511 = vpop.f32.mrb[0].mxu0
    %v4512 = vadd.f32 0.0, %v4511
    %v4513 = vpop.f32.mrb[0].mxu0
    %4514 = vmatprep.mubr.f32.mxu0 0.0
    %v4515 = vand.u32 %v4138, 4294901760
    %v4516 = vsub.f32 %v4138, %v4515
    %v4517 = vand.u32 %v4516, 4294901760
    %v4518 = vsub.f32 %v4516, %v4517
    %v4519 = vand.u32 %v4518, 4294901760
    %4520 = vmatmul.mubr.f32.gmra.mrb[0].mxu0 %v4519
    %v4521 = vpop.f32.mrb[0].mxu0
    %v4522 = vadd.f32 0.0, %v4521
    %v4523 = vpop.f32.mrb[0].mxu0
    %4524 = vmatprep.mubr.f32.mxu0 0.0
    %v4525 = vand.u32 %v4140, 4294901760
    %v4526 = vsub.f32 %v4140, %v4525
    %v4527 = vand.u32 %v4526, 4294901760
    %v4528 = vsub.f32 %v4526, %v4527
    %v4529 = vand.u32 %v4528, 4294901760
    %4530 = vmatmul.mubr.f32.gmra.mrb[0].mxu0 %v4529
    %v4531 = vpop.f32.mrb[0].mxu0
    %v4532 = vadd.f32 0.0, %v4531
    %v4533 = vpop.f32.mrb[0].mxu0
    %4534 = vmatprep.mubr.f32.mxu0 0.0
    %v4535 = vand.u32 %v4142, 4294901760
    %v4536 = vsub.f32 %v4142, %v4535
    %v4537 = vand.u32 %v4536, 4294901760
    %v4538 = vsub.f32 %v4536, %v4537
    %v4539 = vand.u32 %v4538, 4294901760
    %4540 = vmatmul.mubr.f32.gmra.mrb[0].mxu0 %v4539
    %v4541 = vpop.f32.mrb[0].mxu0
    %v4542 = vadd.f32 0.0, %v4541
    %v4543 = vpop.f32.mrb[0].mxu0
    %4544 = vmatprep.mubr.f32.mxu0 0.0
    %v4545 = vand.u32 %v4144, 4294901760
    %v4546 = vsub.f32 %v4144, %v4545
    %v4547 = vand.u32 %v4546, 4294901760
    %v4548 = vsub.f32 %v4546, %v4547
    %v4549 = vand.u32 %v4548, 4294901760
    %4550 = vmatmul.mubr.f32.gmra.mrb[0].mxu0 %v4549
    %v4551 = vpop.f32.mrb[0].mxu0
    %v4552 = vadd.f32 0.0, %v4551
    %v4553 = vpop.f32.mrb[0].mxu0
    %4554 = vmatprep.mubr.f32.mxu0 0.0
    %v4555 = vand.u32 %v4146, 4294901760
    %v4556 = vsub.f32 %v4146, %v4555
    %v4557 = vand.u32 %v4556, 4294901760
    %v4558 = vsub.f32 %v4556, %v4557
    %v4559 = vand.u32 %v4558, 4294901760
    %4560 = vmatmul.mubr.f32.gmra.mrb[0].mxu0 %v4559
    %v4561 = vpop.f32.mrb[0].mxu0
    %v4562 = vadd.f32 0.0, %v4561
    %v4563 = vpop.f32.mrb[0].mxu0
    %4564 = vmatprep.mubr.f32.mxu0 0.0
    %v4565 = vand.u32 %v4148, 4294901760
    %v4566 = vsub.f32 %v4148, %v4565
    %v4567 = vand.u32 %v4566, 4294901760
    %v4568 = vsub.f32 %v4566, %v4567
    %v4569 = vand.u32 %v4568, 4294901760
    %4570 = vmatmul.mubr.f32.gmra.mrb[0].mxu0 %v4569
    %v4571 = vpop.f32.mrb[0].mxu0
    %v4572 = vadd.f32 0.0, %v4571
    %v4573 = vpop.f32.mrb[0].mxu0
    %4574 = vmatprep.mubr.f32.mxu0 0.0
    %v4575 = vand.u32 %v4150, 4294901760
    %v4576 = vsub.f32 %v4150, %v4575
    %v4577 = vand.u32 %v4576, 4294901760
    %v4578 = vsub.f32 %v4576, %v4577
    %v4579 = vand.u32 %v4578, 4294901760
    %4580 = vmatmul.mubr.f32.gmra.mrb[0].mxu0 %v4579
    %v4581 = vpop.f32.mrb[0].mxu0
    %v4582 = vadd.f32 0.0, %v4581
    %v4583 = vpop.f32.mrb[0].mxu0
    %4584 = vmatprep.mubr.f32.mxu0 0.0
    %v4585 = vand.u32 %v4152, 4294901760
    %v4586 = vsub.f32 %v4152, %v4585
    %v4587 = vand.u32 %v4586, 4294901760
    %v4588 = vsub.f32 %v4586, %v4587
    %v4589 = vand.u32 %v4588, 4294901760
    %4590 = vmatmul.mubr.f32.gmra.mrb[0].mxu0 %v4589
    %v4591 = vpop.f32.mrb[0].mxu0
    %v4592 = vadd.f32 0.0, %v4591
    %v4593 = vpop.f32.mrb[0].mxu0
    %4594 = vmatprep.mubr.f32.mxu0 0.0
    %v4595 = vand.u32 %v4154, 4294901760
    %v4596 = vsub.f32 %v4154, %v4595
    %v4597 = vand.u32 %v4596, 4294901760
    %v4598 = vsub.f32 %v4596, %v4597
    %v4599 = vand.u32 %v4598, 4294901760
    %4600 = vmatmul.mubr.f32.gmra.mrb[0].mxu0 %v4599
    %v4601 = vpop.f32.mrb[0].mxu0
    %v4602 = vadd.f32 0.0, %v4601
    %v4603 = vpop.f32.mrb[0].mxu0
    %4604 = vdwg.mxu0
    %4605 = vmatprep.subr.mxu0 0.0
    %v4606 = vand.u32 %v273, 4294901760
    %v4607 = vsub.f32 %v273, %v4606
    %v4608 = vand.u32 %v4607, 4294901760
    %v4609 = vsub.f32 %v4607, %v4608
    %v4610 = vand.u32 %v4609, 4294901760
    %4611 = vmatpush1.msra.mxu0 %v4610
    %4612 = vmatprep.subr.mxu0 0.0
    %v4613 = vand.u32 %v274, 4294901760
    %v4614 = vsub.f32 %v274, %v4613
    %v4615 = vand.u32 %v4614, 4294901760
    %v4616 = vsub.f32 %v4614, %v4615
    %v4617 = vand.u32 %v4616, 4294901760
    %4618 = vmatpush1.msra.mxu0 %v4617
    %4619 = vmatprep.subr.mxu0 0.0
    %v4620 = vand.u32 %v275, 4294901760
    %v4621 = vsub.f32 %v275, %v4620
    %v4622 = vand.u32 %v4621, 4294901760
    %v4623 = vsub.f32 %v4621, %v4622
    %v4624 = vand.u32 %v4623, 4294901760
    %4625 = vmatpush1.msra.mxu0 %v4624
    %4626 = vmatprep.subr.mxu0 0.0
    %v4627 = vand.u32 %v276, 4294901760
    %v4628 = vsub.f32 %v276, %v4627
    %v4629 = vand.u32 %v4628, 4294901760
    %v4630 = vsub.f32 %v4628, %v4629
    %v4631 = vand.u32 %v4630, 4294901760
    %4632 = vmatpush1.msra.mxu0 %v4631
    %4633 = vmatprep.subr.mxu0 0.0
    %v4634 = vand.u32 %v277, 4294901760
    %v4635 = vsub.f32 %v277, %v4634
    %v4636 = vand.u32 %v4635, 4294901760
    %v4637 = vsub.f32 %v4635, %v4636
    %v4638 = vand.u32 %v4637, 4294901760
    %4639 = vmatpush1.msra.mxu0 %v4638
    %4640 = vmatprep.subr.mxu0 0.0
    %v4641 = vand.u32 %v278, 4294901760
    %v4642 = vsub.f32 %v278, %v4641
    %v4643 = vand.u32 %v4642, 4294901760
    %v4644 = vsub.f32 %v4642, %v4643
    %v4645 = vand.u32 %v4644, 4294901760
    %4646 = vmatpush1.msra.mxu0 %v4645
    %4647 = vmatprep.subr.mxu0 0.0
    %v4648 = vand.u32 %v279, 4294901760
    %v4649 = vsub.f32 %v279, %v4648
    %v4650 = vand.u32 %v4649, 4294901760
    %v4651 = vsub.f32 %v4649, %v4650
    %v4652 = vand.u32 %v4651, 4294901760
    %4653 = vmatpush1.msra.mxu0 %v4652
    %4654 = vmatprep.subr.mxu0 0.0
    %v4655 = vand.u32 %v280, 4294901760
    %v4656 = vsub.f32 %v280, %v4655
    %v4657 = vand.u32 %v4656, 4294901760
    %v4658 = vsub.f32 %v4656, %v4657
    %v4659 = vand.u32 %v4658, 4294901760
    %4660 = vmatpush1.msra.mxu0 %v4659
    %4661 = vmatprep.subr.mxu0 0.0
    %v4662 = vand.u32 %v281, 4294901760
    %v4663 = vsub.f32 %v281, %v4662
    %v4664 = vand.u32 %v4663, 4294901760
    %v4665 = vsub.f32 %v4663, %v4664
    %v4666 = vand.u32 %v4665, 4294901760
    %4667 = vmatpush1.msra.mxu0 %v4666
    %4668 = vmatprep.subr.mxu0 0.0
    %v4669 = vand.u32 %v282, 4294901760
    %v4670 = vsub.f32 %v282, %v4669
    %v4671 = vand.u32 %v4670, 4294901760
    %v4672 = vsub.f32 %v4670, %v4671
    %v4673 = vand.u32 %v4672, 4294901760
    %4674 = vmatpush1.msra.mxu0 %v4673
    %4675 = vmatprep.subr.mxu0 0.0
    %v4676 = vand.u32 %v283, 4294901760
    %v4677 = vsub.f32 %v283, %v4676
    %v4678 = vand.u32 %v4677, 4294901760
    %v4679 = vsub.f32 %v4677, %v4678
    %v4680 = vand.u32 %v4679, 4294901760
    %4681 = vmatpush1.msra.mxu0 %v4680
    %4682 = vmatprep.subr.mxu0 0.0
    %v4683 = vand.u32 %v284, 4294901760
    %v4684 = vsub.f32 %v284, %v4683
    %v4685 = vand.u32 %v4684, 4294901760
    %v4686 = vsub.f32 %v4684, %v4685
    %v4687 = vand.u32 %v4686, 4294901760
    %4688 = vmatpush1.msra.mxu0 %v4687
    %4689 = vmatprep.subr.mxu0 0.0
    %v4690 = vand.u32 %v285, 4294901760
    %v4691 = vsub.f32 %v285, %v4690
    %v4692 = vand.u32 %v4691, 4294901760
    %v4693 = vsub.f32 %v4691, %v4692
    %v4694 = vand.u32 %v4693, 4294901760
    %4695 = vmatpush1.msra.mxu0 %v4694
    %4696 = vmatprep.subr.mxu0 0.0
    %v4697 = vand.u32 %v286, 4294901760
    %v4698 = vsub.f32 %v286, %v4697
    %v4699 = vand.u32 %v4698, 4294901760
    %v4700 = vsub.f32 %v4698, %v4699
    %v4701 = vand.u32 %v4700, 4294901760
    %4702 = vmatpush1.msra.mxu0 %v4701
    %4703 = vmatprep.subr.mxu0 0.0
    %v4704 = vand.u32 %v287, 4294901760
    %v4705 = vsub.f32 %v287, %v4704
    %v4706 = vand.u32 %v4705, 4294901760
    %v4707 = vsub.f32 %v4705, %v4706
    %v4708 = vand.u32 %v4707, 4294901760
    %4709 = vmatpush1.msra.mxu0 %v4708
    %4710 = vmatprep.subr.mxu0 0.0
    %v4711 = vand.u32 %v288, 4294901760
    %v4712 = vsub.f32 %v288, %v4711
    %v4713 = vand.u32 %v4712, 4294901760
    %v4714 = vsub.f32 %v4712, %v4713
    %v4715 = vand.u32 %v4714, 4294901760
    %4716 = vmatpush1.msra.mxu0 %v4715
    %4717 = vmatprep.subr.mxu0 0.0
    %4718 = vmatpush1.msra.mxu0 0.0
    %4719 = vmatprep.subr.mxu0 0.0
    %4720 = vmatpush1.msra.mxu0 0.0
    %4721 = vmatprep.subr.mxu0 0.0
    %4722 = vmatpush1.msra.mxu0 0.0
    %4723 = vmatprep.subr.mxu0 0.0
    %4724 = vmatpush1.msra.mxu0 0.0
    %4725 = vmatprep.subr.mxu0 0.0
    %4726 = vmatpush1.msra.mxu0 0.0
    %4727 = vmatprep.subr.mxu0 0.0
    %4728 = vmatpush1.msra.mxu0 0.0
    %4729 = vmatprep.subr.mxu0 0.0
    %4730 = vmatpush1.msra.mxu0 0.0
    %4731 = vmatprep.subr.mxu0 0.0
    %4732 = vmatpush1.msra.mxu0 0.0
    %4733 = vmatprep.subr.mxu0 0.0
    %4734 = vmatpush1.msra.mxu0 0.0
    %4735 = vmatprep.subr.mxu0 0.0
    %4736 = vmatpush1.msra.mxu0 0.0
    %4737 = vmatprep.subr.mxu0 0.0
    %4738 = vmatpush1.msra.mxu0 0.0
    %4739 = vmatprep.subr.mxu0 0.0
    %4740 = vmatpush1.msra.mxu0 0.0
    %4741 = vmatprep.subr.mxu0 0.0
    %4742 = vmatpush1.msra.mxu0 0.0
    %4743 = vmatprep.subr.mxu0 0.0
    %4744 = vmatpush1.msra.mxu0 0.0
    %4745 = vmatprep.subr.mxu0 0.0
    %4746 = vmatpush1.msra.mxu0 0.0
    %4747 = vmatprep.subr.mxu0 0.0
    %4748 = vmatpush1.msra.mxu0 0.0
    %4749 = vmatprep.mubr.f32.mxu0 0.0
    %v4750 = vand.u32 %v4124, 4294901760
    %4751 = vmatmul.mubr.f32.gmra.mrb[0].mxu0 %v4750
    %v4752 = vpop.f32.mrb[0].mxu0
    %v4753 = vadd.f32 %v4452, %v4752
    %v4754 = vpop.f32.mrb[0].mxu0
    %4755 = vmatprep.mubr.f32.mxu0 0.0
    %v4756 = vand.u32 %v4126, 4294901760
    %4757 = vmatmul.mubr.f32.gmra.mrb[0].mxu0 %v4756
    %v4758 = vpop.f32.mrb[0].mxu0
    %v4759 = vadd.f32 %v4462, %v4758
    %v4760 = vpop.f32.mrb[0].mxu0
    %4761 = vmatprep.mubr.f32.mxu0 0.0
    %v4762 = vand.u32 %v4128, 4294901760
    %4763 = vmatmul.mubr.f32.gmra.mrb[0].mxu0 %v4762
    %v4764 = vpop.f32.mrb[0].mxu0
    %v4765 = vadd.f32 %v4472, %v4764
    %v4766 = vpop.f32.mrb[0].mxu0
    %4767 = vmatprep.mubr.f32.mxu0 0.0
    %v4768 = vand.u32 %v4130, 4294901760
    %4769 = vmatmul.mubr.f32.gmra.mrb[0].mxu0 %v4768
    %v4770 = vpop.f32.mrb[0].mxu0
    %v4771 = vadd.f32 %v4482, %v4770
    %v4772 = vpop.f32.mrb[0].mxu0
    %4773 = vmatprep.mubr.f32.mxu0 0.0
    %v4774 = vand.u32 %v4132, 4294901760
    %4775 = vmatmul.mubr.f32.gmra.mrb[0].mxu0 %v4774
    %v4776 = vpop.f32.mrb[0].mxu0
    %v4777 = vadd.f32 %v4492, %v4776
    %v4778 = vpop.f32.mrb[0].mxu0
    %4779 = vmatprep.mubr.f32.mxu0 0.0
    %v4780 = vand.u32 %v4134, 4294901760
    %4781 = vmatmul.mubr.f32.gmra.mrb[0].mxu0 %v4780
    %v4782 = vpop.f32.mrb[0].mxu0
    %v4783 = vadd.f32 %v4502, %v4782
    %v4784 = vpop.f32.mrb[0].mxu0
    %4785 = vmatprep.mubr.f32.mxu0 0.0
    %v4786 = vand.u32 %v4136, 4294901760
    %4787 = vmatmul.mubr.f32.gmra.mrb[0].mxu0 %v4786
    %v4788 = vpop.f32.mrb[0].mxu0
    %v4789 = vadd.f32 %v4512, %v4788
    %v4790 = vpop.f32.mrb[0].mxu0
    %4791 = vmatprep.mubr.f32.mxu0 0.0
    %v4792 = vand.u32 %v4138, 4294901760
    %4793 = vmatmul.mubr.f32.gmra.mrb[0].mxu0 %v4792
    %v4794 = vpop.f32.mrb[0].mxu0
    %v4795 = vadd.f32 %v4522, %v4794
    %v4796 = vpop.f32.mrb[0].mxu0
    %4797 = vmatprep.mubr.f32.mxu0 0.0
    %v4798 = vand.u32 %v4140, 4294901760
    %4799 = vmatmul.mubr.f32.gmra.mrb[0].mxu0 %v4798
    %v4800 = vpop.f32.mrb[0].mxu0
    %v4801 = vadd.f32 %v4532, %v4800
    %v4802 = vpop.f32.mrb[0].mxu0
    %4803 = vmatprep.mubr.f32.mxu0 0.0
    %v4804 = vand.u32 %v4142, 4294901760
    %4805 = vmatmul.mubr.f32.gmra.mrb[0].mxu0 %v4804
    %v4806 = vpop.f32.mrb[0].mxu0
    %v4807 = vadd.f32 %v4542, %v4806
    %v4808 = vpop.f32.mrb[0].mxu0
    %4809 = vmatprep.mubr.f32.mxu0 0.0
    %v4810 = vand.u32 %v4144, 4294901760
    %4811 = vmatmul.mubr.f32.gmra.mrb[0].mxu0 %v4810
    %v4812 = vpop.f32.mrb[0].mxu0
    %v4813 = vadd.f32 %v4552, %v4812
    %v4814 = vpop.f32.mrb[0].mxu0
    %4815 = vmatprep.mubr.f32.mxu0 0.0
    %v4816 = vand.u32 %v4146, 4294901760
    %4817 = vmatmul.mubr.f32.gmra.mrb[0].mxu0 %v4816
    %v4818 = vpop.f32.mrb[0].mxu0
    %v4819 = vadd.f32 %v4562, %v4818
    %v4820 = vpop.f32.mrb[0].mxu0
    %4821 = vmatprep.mubr.f32.mxu0 0.0
    %v4822 = vand.u32 %v4148, 4294901760
    %4823 = vmatmul.mubr.f32.gmra.mrb[0].mxu0 %v4822
    %v4824 = vpop.f32.mrb[0].mxu0
    %v4825 = vadd.f32 %v4572, %v4824
    %v4826 = vpop.f32.mrb[0].mxu0
    %4827 = vmatprep.mubr.f32.mxu0 0.0
    %v4828 = vand.u32 %v4150, 4294901760
    %4829 = vmatmul.mubr.f32.gmra.mrb[0].mxu0 %v4828
    %v4830 = vpop.f32.mrb[0].mxu0
    %v4831 = vadd.f32 %v4582, %v4830
    %v4832 = vpop.f32.mrb[0].mxu0
    %4833 = vmatprep.mubr.f32.mxu0 0.0
    %v4834 = vand.u32 %v4152, 4294901760
    %4835 = vmatmul.mubr.f32.gmra.mrb[0].mxu0 %v4834
    %v4836 = vpop.f32.mrb[0].mxu0
    %v4837 = vadd.f32 %v4592, %v4836
    %v4838 = vpop.f32.mrb[0].mxu0
    %4839 = vmatprep.mubr.f32.mxu0 0.0
    %v4840 = vand.u32 %v4154, 4294901760
    %4841 = vmatmul.mubr.f32.gmra.mrb[0].mxu0 %v4840
    %v4842 = vpop.f32.mrb[0].mxu0
    %v4843 = vadd.f32 %v4602, %v4842
    %v4844 = vpop.f32.mrb[0].mxu0
    %4845 = vdwg.mxu0
    %4846 = vmatprep.subr.mxu0 0.0
    %v4847 = vand.u32 %v273, 4294901760
    %v4848 = vsub.f32 %v273, %v4847
    %4849 = vmatpush1.msra.mxu0 %v4848
    %4850 = vmatprep.subr.mxu0 0.0
    %v4851 = vand.u32 %v274, 4294901760
    %v4852 = vsub.f32 %v274, %v4851
    %4853 = vmatpush1.msra.mxu0 %v4852
    %4854 = vmatprep.subr.mxu0 0.0
    %v4855 = vand.u32 %v275, 4294901760
    %v4856 = vsub.f32 %v275, %v4855
    %4857 = vmatpush1.msra.mxu0 %v4856
    %4858 = vmatprep.subr.mxu0 0.0
    %v4859 = vand.u32 %v276, 4294901760
    %v4860 = vsub.f32 %v276, %v4859
    %4861 = vmatpush1.msra.mxu0 %v4860
    %4862 = vmatprep.subr.mxu0 0.0
    %v4863 = vand.u32 %v277, 4294901760
    %v4864 = vsub.f32 %v277, %v4863
    %4865 = vmatpush1.msra.mxu0 %v4864
    %4866 = vmatprep.subr.mxu0 0.0
    %v4867 = vand.u32 %v278, 4294901760
    %v4868 = vsub.f32 %v278, %v4867
    %4869 = vmatpush1.msra.mxu0 %v4868
    %4870 = vmatprep.subr.mxu0 0.0
    %v4871 = vand.u32 %v279, 4294901760
    %v4872 = vsub.f32 %v279, %v4871
    %4873 = vmatpush1.msra.mxu0 %v4872
    %4874 = vmatprep.subr.mxu0 0.0
    %v4875 = vand.u32 %v280, 4294901760
    %v4876 = vsub.f32 %v280, %v4875
    %4877 = vmatpush1.msra.mxu0 %v4876
    %4878 = vmatprep.subr.mxu0 0.0
    %v4879 = vand.u32 %v281, 4294901760
    %v4880 = vsub.f32 %v281, %v4879
    %4881 = vmatpush1.msra.mxu0 %v4880
    %4882 = vmatprep.subr.mxu0 0.0
    %v4883 = vand.u32 %v282, 4294901760
    %v4884 = vsub.f32 %v282, %v4883
    %4885 = vmatpush1.msra.mxu0 %v4884
    %4886 = vmatprep.subr.mxu0 0.0
    %v4887 = vand.u32 %v283, 4294901760
    %v4888 = vsub.f32 %v283, %v4887
    %4889 = vmatpush1.msra.mxu0 %v4888
    %4890 = vmatprep.subr.mxu0 0.0
    %v4891 = vand.u32 %v284, 4294901760
    %v4892 = vsub.f32 %v284, %v4891
    %4893 = vmatpush1.msra.mxu0 %v4892
    %4894 = vmatprep.subr.mxu0 0.0
    %v4895 = vand.u32 %v285, 4294901760
    %v4896 = vsub.f32 %v285, %v4895
    %4897 = vmatpush1.msra.mxu0 %v4896
    %4898 = vmatprep.subr.mxu0 0.0
    %v4899 = vand.u32 %v286, 4294901760
    %v4900 = vsub.f32 %v286, %v4899
    %4901 = vmatpush1.msra.mxu0 %v4900
    %4902 = vmatprep.subr.mxu0 0.0
    %v4903 = vand.u32 %v287, 4294901760
    %v4904 = vsub.f32 %v287, %v4903
    %4905 = vmatpush1.msra.mxu0 %v4904
    %4906 = vmatprep.subr.mxu0 0.0
    %v4907 = vand.u32 %v288, 4294901760
    %v4908 = vsub.f32 %v288, %v4907
    %4909 = vmatpush1.msra.mxu0 %v4908
    %4910 = vmatprep.subr.mxu0 0.0
    %4911 = vmatpush1.msra.mxu0 0.0
    %4912 = vmatprep.subr.mxu0 0.0
    %4913 = vmatpush1.msra.mxu0 0.0
    %4914 = vmatprep.subr.mxu0 0.0
    %4915 = vmatpush1.msra.mxu0 0.0
    %4916 = vmatprep.subr.mxu0 0.0
    %4917 = vmatpush1.msra.mxu0 0.0
    %4918 = vmatprep.subr.mxu0 0.0
    %4919 = vmatpush1.msra.mxu0 0.0
    %4920 = vmatprep.subr.mxu0 0.0
    %4921 = vmatpush1.msra.mxu0 0.0
    %4922 = vmatprep.subr.mxu0 0.0
    %4923 = vmatpush1.msra.mxu0 0.0
    %4924 = vmatprep.subr.mxu0 0.0
    %4925 = vmatpush1.msra.mxu0 0.0
    %4926 = vmatprep.subr.mxu0 0.0
    %4927 = vmatpush1.msra.mxu0 0.0
    %4928 = vmatprep.subr.mxu0 0.0
    %4929 = vmatpush1.msra.mxu0 0.0
    %4930 = vmatprep.subr.mxu0 0.0
    %4931 = vmatpush1.msra.mxu0 0.0
    %4932 = vmatprep.subr.mxu0 0.0
    %4933 = vmatpush1.msra.mxu0 0.0
    %4934 = vmatprep.subr.mxu0 0.0
    %4935 = vmatpush1.msra.mxu0 0.0
    %4936 = vmatprep.subr.mxu0 0.0
    %4937 = vmatpush1.msra.mxu0 0.0
    %4938 = vmatprep.subr.mxu0 0.0
    %4939 = vmatpush1.msra.mxu0 0.0
    %4940 = vmatprep.subr.mxu0 0.0
    %4941 = vmatpush1.msra.mxu0 0.0
    %4942 = vmatprep.mubr.f32.mxu0 0.0
    %v4943 = vand.u32 %v4124, 4294901760
    %v4944 = vsub.f32 %v4124, %v4943
    %4945 = vmatmul.mubr.f32.gmra.mrb[0].mxu0 %v4944
    %v4946 = vpop.f32.mrb[0].mxu0
    %v4947 = vadd.f32 %v4753, %v4946
    %v4948 = vpop.f32.mrb[0].mxu0
    %4949 = vmatprep.mubr.f32.mxu0 0.0
    %v4950 = vand.u32 %v4126, 4294901760
    %v4951 = vsub.f32 %v4126, %v4950
    %4952 = vmatmul.mubr.f32.gmra.mrb[0].mxu0 %v4951
    %v4953 = vpop.f32.mrb[0].mxu0
    %v4954 = vadd.f32 %v4759, %v4953
    %v4955 = vpop.f32.mrb[0].mxu0
    %4956 = vmatprep.mubr.f32.mxu0 0.0
    %v4957 = vand.u32 %v4128, 4294901760
    %v4958 = vsub.f32 %v4128, %v4957
    %4959 = vmatmul.mubr.f32.gmra.mrb[0].mxu0 %v4958
    %v4960 = vpop.f32.mrb[0].mxu0
    %v4961 = vadd.f32 %v4765, %v4960
    %v4962 = vpop.f32.mrb[0].mxu0
    %4963 = vmatprep.mubr.f32.mxu0 0.0
    %v4964 = vand.u32 %v4130, 4294901760
    %v4965 = vsub.f32 %v4130, %v4964
    %4966 = vmatmul.mubr.f32.gmra.mrb[0].mxu0 %v4965
    %v4967 = vpop.f32.mrb[0].mxu0
    %v4968 = vadd.f32 %v4771, %v4967
    %v4969 = vpop.f32.mrb[0].mxu0
    %4970 = vmatprep.mubr.f32.mxu0 0.0
    %v4971 = vand.u32 %v4132, 4294901760
    %v4972 = vsub.f32 %v4132, %v4971
    %4973 = vmatmul.mubr.f32.gmra.mrb[0].mxu0 %v4972
    %v4974 = vpop.f32.mrb[0].mxu0
    %v4975 = vadd.f32 %v4777, %v4974
    %v4976 = vpop.f32.mrb[0].mxu0
    %4977 = vmatprep.mubr.f32.mxu0 0.0
    %v4978 = vand.u32 %v4134, 4294901760
    %v4979 = vsub.f32 %v4134, %v4978
    %4980 = vmatmul.mubr.f32.gmra.mrb[0].mxu0 %v4979
    %v4981 = vpop.f32.mrb[0].mxu0
    %v4982 = vadd.f32 %v4783, %v4981
    %v4983 = vpop.f32.mrb[0].mxu0
    %4984 = vmatprep.mubr.f32.mxu0 0.0
    %v4985 = vand.u32 %v4136, 4294901760
    %v4986 = vsub.f32 %v4136, %v4985
    %4987 = vmatmul.mubr.f32.gmra.mrb[0].mxu0 %v4986
    %v4988 = vpop.f32.mrb[0].mxu0
    %v4989 = vadd.f32 %v4789, %v4988
    %v4990 = vpop.f32.mrb[0].mxu0
    %4991 = vmatprep.mubr.f32.mxu0 0.0
    %v4992 = vand.u32 %v4138, 4294901760
    %v4993 = vsub.f32 %v4138, %v4992
    %4994 = vmatmul.mubr.f32.gmra.mrb[0].mxu0 %v4993
    %v4995 = vpop.f32.mrb[0].mxu0
    %v4996 = vadd.f32 %v4795, %v4995
    %v4997 = vpop.f32.mrb[0].mxu0
    %4998 = vmatprep.mubr.f32.mxu0 0.0
    %v4999 = vand.u32 %v4140, 4294901760
    %v5000 = vsub.f32 %v4140, %v4999
    %5001 = vmatmul.mubr.f32.gmra.mrb[0].mxu0 %v5000
    %v5002 = vpop.f32.mrb[0].mxu0
    %v5003 = vadd.f32 %v4801, %v5002
    %v5004 = vpop.f32.mrb[0].mxu0
    %5005 = vmatprep.mubr.f32.mxu0 0.0
    %v5006 = vand.u32 %v4142, 4294901760
    %v5007 = vsub.f32 %v4142, %v5006
    %5008 = vmatmul.mubr.f32.gmra.mrb[0].mxu0 %v5007
    %v5009 = vpop.f32.mrb[0].mxu0
    %v5010 = vadd.f32 %v4807, %v5009
    %v5011 = vpop.f32.mrb[0].mxu0
    %5012 = vmatprep.mubr.f32.mxu0 0.0
    %v5013 = vand.u32 %v4144, 4294901760
    %v5014 = vsub.f32 %v4144, %v5013
    %5015 = vmatmul.mubr.f32.gmra.mrb[0].mxu0 %v5014
    %v5016 = vpop.f32.mrb[0].mxu0
    %v5017 = vadd.f32 %v4813, %v5016
    %v5018 = vpop.f32.mrb[0].mxu0
    %5019 = vmatprep.mubr.f32.mxu0 0.0
    %v5020 = vand.u32 %v4146, 4294901760
    %v5021 = vsub.f32 %v4146, %v5020
    %5022 = vmatmul.mubr.f32.gmra.mrb[0].mxu0 %v5021
    %v5023 = vpop.f32.mrb[0].mxu0
    %v5024 = vadd.f32 %v4819, %v5023
    %v5025 = vpop.f32.mrb[0].mxu0
    %5026 = vmatprep.mubr.f32.mxu0 0.0
    %v5027 = vand.u32 %v4148, 4294901760
    %v5028 = vsub.f32 %v4148, %v5027
    %5029 = vmatmul.mubr.f32.gmra.mrb[0].mxu0 %v5028
    %v5030 = vpop.f32.mrb[0].mxu0
    %v5031 = vadd.f32 %v4825, %v5030
    %v5032 = vpop.f32.mrb[0].mxu0
    %5033 = vmatprep.mubr.f32.mxu0 0.0
    %v5034 = vand.u32 %v4150, 4294901760
    %v5035 = vsub.f32 %v4150, %v5034
    %5036 = vmatmul.mubr.f32.gmra.mrb[0].mxu0 %v5035
    %v5037 = vpop.f32.mrb[0].mxu0
    %v5038 = vadd.f32 %v4831, %v5037
    %v5039 = vpop.f32.mrb[0].mxu0
    %5040 = vmatprep.mubr.f32.mxu0 0.0
    %v5041 = vand.u32 %v4152, 4294901760
    %v5042 = vsub.f32 %v4152, %v5041
    %5043 = vmatmul.mubr.f32.gmra.mrb[0].mxu0 %v5042
    %v5044 = vpop.f32.mrb[0].mxu0
    %v5045 = vadd.f32 %v4837, %v5044
    %v5046 = vpop.f32.mrb[0].mxu0
    %5047 = vmatprep.mubr.f32.mxu0 0.0
    %v5048 = vand.u32 %v4154, 4294901760
    %v5049 = vsub.f32 %v4154, %v5048
    %5050 = vmatmul.mubr.f32.gmra.mrb[0].mxu0 %v5049
    %v5051 = vpop.f32.mrb[0].mxu0
    %v5052 = vadd.f32 %v4843, %v5051
    %v5053 = vpop.f32.mrb[0].mxu0
    %5054 = vdwg.mxu0
    %5055 = vmatprep.subr.mxu0 0.0
    %v5056 = vand.u32 %v273, 4294901760
    %5057 = vmatpush1.msra.mxu0 %v5056
    %5058 = vmatprep.subr.mxu0 0.0
    %v5059 = vand.u32 %v274, 4294901760
    %5060 = vmatpush1.msra.mxu0 %v5059
    %5061 = vmatprep.subr.mxu0 0.0
    %v5062 = vand.u32 %v275, 4294901760
    %5063 = vmatpush1.msra.mxu0 %v5062
    %5064 = vmatprep.subr.mxu0 0.0
    %v5065 = vand.u32 %v276, 4294901760
    %5066 = vmatpush1.msra.mxu0 %v5065
    %5067 = vmatprep.subr.mxu0 0.0
    %v5068 = vand.u32 %v277, 4294901760
    %5069 = vmatpush1.msra.mxu0 %v5068
    %5070 = vmatprep.subr.mxu0 0.0
    %v5071 = vand.u32 %v278, 4294901760
    %5072 = vmatpush1.msra.mxu0 %v5071
    %5073 = vmatprep.subr.mxu0 0.0
    %v5074 = vand.u32 %v279, 4294901760
    %5075 = vmatpush1.msra.mxu0 %v5074
    %5076 = vmatprep.subr.mxu0 0.0
    %v5077 = vand.u32 %v280, 4294901760
    %5078 = vmatpush1.msra.mxu0 %v5077
    %5079 = vmatprep.subr.mxu0 0.0
    %v5080 = vand.u32 %v281, 4294901760
    %5081 = vmatpush1.msra.mxu0 %v5080
    %5082 = vmatprep.subr.mxu0 0.0
    %v5083 = vand.u32 %v282, 4294901760
    %5084 = vmatpush1.msra.mxu0 %v5083
    %5085 = vmatprep.subr.mxu0 0.0
    %v5086 = vand.u32 %v283, 4294901760
    %5087 = vmatpush1.msra.mxu0 %v5086
    %5088 = vmatprep.subr.mxu0 0.0
    %v5089 = vand.u32 %v284, 4294901760
    %5090 = vmatpush1.msra.mxu0 %v5089
    %5091 = vmatprep.subr.mxu0 0.0
    %v5092 = vand.u32 %v285, 4294901760
    %5093 = vmatpush1.msra.mxu0 %v5092
    %5094 = vmatprep.subr.mxu0 0.0
    %v5095 = vand.u32 %v286, 4294901760
    %5096 = vmatpush1.msra.mxu0 %v5095
    %5097 = vmatprep.subr.mxu0 0.0
    %v5098 = vand.u32 %v287, 4294901760
    %5099 = vmatpush1.msra.mxu0 %v5098
    %5100 = vmatprep.subr.mxu0 0.0
    %v5101 = vand.u32 %v288, 4294901760
    %5102 = vmatpush1.msra.mxu0 %v5101
    %5103 = vmatprep.subr.mxu0 0.0
    %5104 = vmatpush1.msra.mxu0 0.0
    %5105 = vmatprep.subr.mxu0 0.0
    %5106 = vmatpush1.msra.mxu0 0.0
    %5107 = vmatprep.subr.mxu0 0.0
    %5108 = vmatpush1.msra.mxu0 0.0
    %5109 = vmatprep.subr.mxu0 0.0
    %5110 = vmatpush1.msra.mxu0 0.0
    %5111 = vmatprep.subr.mxu0 0.0
    %5112 = vmatpush1.msra.mxu0 0.0
    %5113 = vmatprep.subr.mxu0 0.0
    %5114 = vmatpush1.msra.mxu0 0.0
    %5115 = vmatprep.subr.mxu0 0.0
    %5116 = vmatpush1.msra.mxu0 0.0
    %5117 = vmatprep.subr.mxu0 0.0
    %5118 = vmatpush1.msra.mxu0 0.0
    %5119 = vmatprep.subr.mxu0 0.0
    %5120 = vmatpush1.msra.mxu0 0.0
    %5121 = vmatprep.subr.mxu0 0.0
    %5122 = vmatpush1.msra.mxu0 0.0
    %5123 = vmatprep.subr.mxu0 0.0
    %5124 = vmatpush1.msra.mxu0 0.0
    %5125 = vmatprep.subr.mxu0 0.0
    %5126 = vmatpush1.msra.mxu0 0.0
    %5127 = vmatprep.subr.mxu0 0.0
    %5128 = vmatpush1.msra.mxu0 0.0
    %5129 = vmatprep.subr.mxu0 0.0
    %5130 = vmatpush1.msra.mxu0 0.0
    %5131 = vmatprep.subr.mxu0 0.0
    %5132 = vmatpush1.msra.mxu0 0.0
    %5133 = vmatprep.subr.mxu0 0.0
    %5134 = vmatpush1.msra.mxu0 0.0
    %5135 = vmatprep.mubr.f32.mxu0 0.0
    %v5136 = vand.u32 %v4124, 4294901760
    %v5137 = vsub.f32 %v4124, %v5136
    %v5138 = vand.u32 %v5137, 4294901760
    %5139 = vmatmul.mubr.f32.gmra.mrb[0].mxu0 %v5138
    %v5140 = vpop.f32.mrb[0].mxu0
    %v5141 = vadd.f32 %v4947, %v5140
    %v5142 = vpop.f32.mrb[0].mxu0
    %5143 = vmatprep.mubr.f32.mxu0 0.0
    %v5144 = vand.u32 %v4126, 4294901760
    %v5145 = vsub.f32 %v4126, %v5144
    %v5146 = vand.u32 %v5145, 4294901760
    %5147 = vmatmul.mubr.f32.gmra.mrb[0].mxu0 %v5146
    %v5148 = vpop.f32.mrb[0].mxu0
    %v5149 = vadd.f32 %v4954, %v5148
    %v5150 = vpop.f32.mrb[0].mxu0
    %5151 = vmatprep.mubr.f32.mxu0 0.0
    %v5152 = vand.u32 %v4128, 4294901760
    %v5153 = vsub.f32 %v4128, %v5152
    %v5154 = vand.u32 %v5153, 4294901760
    %5155 = vmatmul.mubr.f32.gmra.mrb[0].mxu0 %v5154
    %v5156 = vpop.f32.mrb[0].mxu0
    %v5157 = vadd.f32 %v4961, %v5156
    %v5158 = vpop.f32.mrb[0].mxu0
    %5159 = vmatprep.mubr.f32.mxu0 0.0
    %v5160 = vand.u32 %v4130, 4294901760
    %v5161 = vsub.f32 %v4130, %v5160
    %v5162 = vand.u32 %v5161, 4294901760
    %5163 = vmatmul.mubr.f32.gmra.mrb[0].mxu0 %v5162
    %v5164 = vpop.f32.mrb[0].mxu0
    %v5165 = vadd.f32 %v4968, %v5164
    %v5166 = vpop.f32.mrb[0].mxu0
    %5167 = vmatprep.mubr.f32.mxu0 0.0
    %v5168 = vand.u32 %v4132, 4294901760
    %v5169 = vsub.f32 %v4132, %v5168
    %v5170 = vand.u32 %v5169, 4294901760
    %5171 = vmatmul.mubr.f32.gmra.mrb[0].mxu0 %v5170
    %v5172 = vpop.f32.mrb[0].mxu0
    %v5173 = vadd.f32 %v4975, %v5172
    %v5174 = vpop.f32.mrb[0].mxu0
    %5175 = vmatprep.mubr.f32.mxu0 0.0
    %v5176 = vand.u32 %v4134, 4294901760
    %v5177 = vsub.f32 %v4134, %v5176
    %v5178 = vand.u32 %v5177, 4294901760
    %5179 = vmatmul.mubr.f32.gmra.mrb[0].mxu0 %v5178
    %v5180 = vpop.f32.mrb[0].mxu0
    %v5181 = vadd.f32 %v4982, %v5180
    %v5182 = vpop.f32.mrb[0].mxu0
    %5183 = vmatprep.mubr.f32.mxu0 0.0
    %v5184 = vand.u32 %v4136, 4294901760
    %v5185 = vsub.f32 %v4136, %v5184
    %v5186 = vand.u32 %v5185, 4294901760
    %5187 = vmatmul.mubr.f32.gmra.mrb[0].mxu0 %v5186
    %v5188 = vpop.f32.mrb[0].mxu0
    %v5189 = vadd.f32 %v4989, %v5188
    %v5190 = vpop.f32.mrb[0].mxu0
    %5191 = vmatprep.mubr.f32.mxu0 0.0
    %v5192 = vand.u32 %v4138, 4294901760
    %v5193 = vsub.f32 %v4138, %v5192
    %v5194 = vand.u32 %v5193, 4294901760
    %5195 = vmatmul.mubr.f32.gmra.mrb[0].mxu0 %v5194
    %v5196 = vpop.f32.mrb[0].mxu0
    %v5197 = vadd.f32 %v4996, %v5196
    %v5198 = vpop.f32.mrb[0].mxu0
    %5199 = vmatprep.mubr.f32.mxu0 0.0
    %v5200 = vand.u32 %v4140, 4294901760
    %v5201 = vsub.f32 %v4140, %v5200
    %v5202 = vand.u32 %v5201, 4294901760
    %5203 = vmatmul.mubr.f32.gmra.mrb[0].mxu0 %v5202
    %v5204 = vpop.f32.mrb[0].mxu0
    %v5205 = vadd.f32 %v5003, %v5204
    %v5206 = vpop.f32.mrb[0].mxu0
    %5207 = vmatprep.mubr.f32.mxu0 0.0
    %v5208 = vand.u32 %v4142, 4294901760
    %v5209 = vsub.f32 %v4142, %v5208
    %v5210 = vand.u32 %v5209, 4294901760
    %5211 = vmatmul.mubr.f32.gmra.mrb[0].mxu0 %v5210
    %v5212 = vpop.f32.mrb[0].mxu0
    %v5213 = vadd.f32 %v5010, %v5212
    %v5214 = vpop.f32.mrb[0].mxu0
    %5215 = vmatprep.mubr.f32.mxu0 0.0
    %v5216 = vand.u32 %v4144, 4294901760
    %v5217 = vsub.f32 %v4144, %v5216
    %v5218 = vand.u32 %v5217, 4294901760
    %5219 = vmatmul.mubr.f32.gmra.mrb[0].mxu0 %v5218
    %v5220 = vpop.f32.mrb[0].mxu0
    %v5221 = vadd.f32 %v5017, %v5220
    %v5222 = vpop.f32.mrb[0].mxu0
    %5223 = vmatprep.mubr.f32.mxu0 0.0
    %v5224 = vand.u32 %v4146, 4294901760
    %v5225 = vsub.f32 %v4146, %v5224
    %v5226 = vand.u32 %v5225, 4294901760
    %5227 = vmatmul.mubr.f32.gmra.mrb[0].mxu0 %v5226
    %v5228 = vpop.f32.mrb[0].mxu0
    %v5229 = vadd.f32 %v5024, %v5228
    %v5230 = vpop.f32.mrb[0].mxu0
    %5231 = vmatprep.mubr.f32.mxu0 0.0
    %v5232 = vand.u32 %v4148, 4294901760
    %v5233 = vsub.f32 %v4148, %v5232
    %v5234 = vand.u32 %v5233, 4294901760
    %5235 = vmatmul.mubr.f32.gmra.mrb[0].mxu0 %v5234
    %v5236 = vpop.f32.mrb[0].mxu0
    %v5237 = vadd.f32 %v5031, %v5236
    %v5238 = vpop.f32.mrb[0].mxu0
    %5239 = vmatprep.mubr.f32.mxu0 0.0
    %v5240 = vand.u32 %v4150, 4294901760
    %v5241 = vsub.f32 %v4150, %v5240
    %v5242 = vand.u32 %v5241, 4294901760
    %5243 = vmatmul.mubr.f32.gmra.mrb[0].mxu0 %v5242
    %v5244 = vpop.f32.mrb[0].mxu0
    %v5245 = vadd.f32 %v5038, %v5244
    %v5246 = vpop.f32.mrb[0].mxu0
    %5247 = vmatprep.mubr.f32.mxu0 0.0
    %v5248 = vand.u32 %v4152, 4294901760
    %v5249 = vsub.f32 %v4152, %v5248
    %v5250 = vand.u32 %v5249, 4294901760
    %5251 = vmatmul.mubr.f32.gmra.mrb[0].mxu0 %v5250
    %v5252 = vpop.f32.mrb[0].mxu0
    %v5253 = vadd.f32 %v5045, %v5252
    %v5254 = vpop.f32.mrb[0].mxu0
    %5255 = vmatprep.mubr.f32.mxu0 0.0
    %v5256 = vand.u32 %v4154, 4294901760
    %v5257 = vsub.f32 %v4154, %v5256
    %v5258 = vand.u32 %v5257, 4294901760
    %5259 = vmatmul.mubr.f32.gmra.mrb[0].mxu0 %v5258
    %v5260 = vpop.f32.mrb[0].mxu0
    %v5261 = vadd.f32 %v5052, %v5260
    %v5262 = vpop.f32.mrb[0].mxu0
    %5263 = vdwg.mxu0
    %5264 = vmatprep.subr.mxu0 0.0
    %v5265 = vand.u32 %v273, 4294901760
    %v5266 = vsub.f32 %v273, %v5265
    %v5267 = vand.u32 %v5266, 4294901760
    %5268 = vmatpush1.msra.mxu0 %v5267
    %5269 = vmatprep.subr.mxu0 0.0
    %v5270 = vand.u32 %v274, 4294901760
    %v5271 = vsub.f32 %v274, %v5270
    %v5272 = vand.u32 %v5271, 4294901760
    %5273 = vmatpush1.msra.mxu0 %v5272
    %5274 = vmatprep.subr.mxu0 0.0
    %v5275 = vand.u32 %v275, 4294901760
    %v5276 = vsub.f32 %v275, %v5275
    %v5277 = vand.u32 %v5276, 4294901760
    %5278 = vmatpush1.msra.mxu0 %v5277
    %5279 = vmatprep.subr.mxu0 0.0
    %v5280 = vand.u32 %v276, 4294901760
    %v5281 = vsub.f32 %v276, %v5280
    %v5282 = vand.u32 %v5281, 4294901760
    %5283 = vmatpush1.msra.mxu0 %v5282
    %5284 = vmatprep.subr.mxu0 0.0
    %v5285 = vand.u32 %v277, 4294901760
    %v5286 = vsub.f32 %v277, %v5285
    %v5287 = vand.u32 %v5286, 4294901760
    %5288 = vmatpush1.msra.mxu0 %v5287
    %5289 = vmatprep.subr.mxu0 0.0
    %v5290 = vand.u32 %v278, 4294901760
    %v5291 = vsub.f32 %v278, %v5290
    %v5292 = vand.u32 %v5291, 4294901760
    %5293 = vmatpush1.msra.mxu0 %v5292
    %5294 = vmatprep.subr.mxu0 0.0
    %v5295 = vand.u32 %v279, 4294901760
    %v5296 = vsub.f32 %v279, %v5295
    %v5297 = vand.u32 %v5296, 4294901760
    %5298 = vmatpush1.msra.mxu0 %v5297
    %5299 = vmatprep.subr.mxu0 0.0
    %v5300 = vand.u32 %v280, 4294901760
    %v5301 = vsub.f32 %v280, %v5300
    %v5302 = vand.u32 %v5301, 4294901760
    %5303 = vmatpush1.msra.mxu0 %v5302
    %5304 = vmatprep.subr.mxu0 0.0
    %v5305 = vand.u32 %v281, 4294901760
    %v5306 = vsub.f32 %v281, %v5305
    %v5307 = vand.u32 %v5306, 4294901760
    %5308 = vmatpush1.msra.mxu0 %v5307
    %5309 = vmatprep.subr.mxu0 0.0
    %v5310 = vand.u32 %v282, 4294901760
    %v5311 = vsub.f32 %v282, %v5310
    %v5312 = vand.u32 %v5311, 4294901760
    %5313 = vmatpush1.msra.mxu0 %v5312
    %5314 = vmatprep.subr.mxu0 0.0
    %v5315 = vand.u32 %v283, 4294901760
    %v5316 = vsub.f32 %v283, %v5315
    %v5317 = vand.u32 %v5316, 4294901760
    %5318 = vmatpush1.msra.mxu0 %v5317
    %5319 = vmatprep.subr.mxu0 0.0
    %v5320 = vand.u32 %v284, 4294901760
    %v5321 = vsub.f32 %v284, %v5320
    %v5322 = vand.u32 %v5321, 4294901760
    %5323 = vmatpush1.msra.mxu0 %v5322
    %5324 = vmatprep.subr.mxu0 0.0
    %v5325 = vand.u32 %v285, 4294901760
    %v5326 = vsub.f32 %v285, %v5325
    %v5327 = vand.u32 %v5326, 4294901760
    %5328 = vmatpush1.msra.mxu0 %v5327
    %5329 = vmatprep.subr.mxu0 0.0
    %v5330 = vand.u32 %v286, 4294901760
    %v5331 = vsub.f32 %v286, %v5330
    %v5332 = vand.u32 %v5331, 4294901760
    %5333 = vmatpush1.msra.mxu0 %v5332
    %5334 = vmatprep.subr.mxu0 0.0
    %v5335 = vand.u32 %v287, 4294901760
    %v5336 = vsub.f32 %v287, %v5335
    %v5337 = vand.u32 %v5336, 4294901760
    %5338 = vmatpush1.msra.mxu0 %v5337
    %5339 = vmatprep.subr.mxu0 0.0
    %v5340 = vand.u32 %v288, 4294901760
    %v5341 = vsub.f32 %v288, %v5340
    %v5342 = vand.u32 %v5341, 4294901760
    %5343 = vmatpush1.msra.mxu0 %v5342
    %5344 = vmatprep.subr.mxu0 0.0
    %5345 = vmatpush1.msra.mxu0 0.0
    %5346 = vmatprep.subr.mxu0 0.0
    %5347 = vmatpush1.msra.mxu0 0.0
    %5348 = vmatprep.subr.mxu0 0.0
    %5349 = vmatpush1.msra.mxu0 0.0
    %5350 = vmatprep.subr.mxu0 0.0
    %5351 = vmatpush1.msra.mxu0 0.0
    %5352 = vmatprep.subr.mxu0 0.0
    %5353 = vmatpush1.msra.mxu0 0.0
    %5354 = vmatprep.subr.mxu0 0.0
    %5355 = vmatpush1.msra.mxu0 0.0
    %5356 = vmatprep.subr.mxu0 0.0
    %5357 = vmatpush1.msra.mxu0 0.0
    %5358 = vmatprep.subr.mxu0 0.0
    %5359 = vmatpush1.msra.mxu0 0.0
    %5360 = vmatprep.subr.mxu0 0.0
    %5361 = vmatpush1.msra.mxu0 0.0
    %5362 = vmatprep.subr.mxu0 0.0
    %5363 = vmatpush1.msra.mxu0 0.0
    %5364 = vmatprep.subr.mxu0 0.0
    %5365 = vmatpush1.msra.mxu0 0.0
    %5366 = vmatprep.subr.mxu0 0.0
    %5367 = vmatpush1.msra.mxu0 0.0
    %5368 = vmatprep.subr.mxu0 0.0
    %5369 = vmatpush1.msra.mxu0 0.0
    %5370 = vmatprep.subr.mxu0 0.0
    %5371 = vmatpush1.msra.mxu0 0.0
    %5372 = vmatprep.subr.mxu0 0.0
    %5373 = vmatpush1.msra.mxu0 0.0
    %5374 = vmatprep.subr.mxu0 0.0
    %5375 = vmatpush1.msra.mxu0 0.0
    %5376 = vmatprep.mubr.f32.mxu0 0.0
    %v5377 = vand.u32 %v4124, 4294901760
    %5378 = vmatmul.mubr.f32.gmra.mrb[0].mxu0 %v5377
    %v5379 = vpop.f32.mrb[0].mxu0
    %v5380 = vadd.f32 %v5141, %v5379
    %v5381 = vpop.f32.mrb[0].mxu0
    %5382 = vmatprep.mubr.f32.mxu0 0.0
    %v5383 = vand.u32 %v4126, 4294901760
    %5384 = vmatmul.mubr.f32.gmra.mrb[0].mxu0 %v5383
    %v5385 = vpop.f32.mrb[0].mxu0
    %v5386 = vadd.f32 %v5149, %v5385
    %v5387 = vpop.f32.mrb[0].mxu0
    %5388 = vmatprep.mubr.f32.mxu0 0.0
    %v5389 = vand.u32 %v4128, 4294901760
    %5390 = vmatmul.mubr.f32.gmra.mrb[0].mxu0 %v5389
    %v5391 = vpop.f32.mrb[0].mxu0
    %v5392 = vadd.f32 %v5157, %v5391
    %v5393 = vpop.f32.mrb[0].mxu0
    %5394 = vmatprep.mubr.f32.mxu0 0.0
    %v5395 = vand.u32 %v4130, 4294901760
    %5396 = vmatmul.mubr.f32.gmra.mrb[0].mxu0 %v5395
    %v5397 = vpop.f32.mrb[0].mxu0
    %v5398 = vadd.f32 %v5165, %v5397
    %v5399 = vpop.f32.mrb[0].mxu0
    %5400 = vmatprep.mubr.f32.mxu0 0.0
    %v5401 = vand.u32 %v4132, 4294901760
    %5402 = vmatmul.mubr.f32.gmra.mrb[0].mxu0 %v5401
    %v5403 = vpop.f32.mrb[0].mxu0
    %v5404 = vadd.f32 %v5173, %v5403
    %v5405 = vpop.f32.mrb[0].mxu0
    %5406 = vmatprep.mubr.f32.mxu0 0.0
    %v5407 = vand.u32 %v4134, 4294901760
    %5408 = vmatmul.mubr.f32.gmra.mrb[0].mxu0 %v5407
    %v5409 = vpop.f32.mrb[0].mxu0
    %v5410 = vadd.f32 %v5181, %v5409
    %v5411 = vpop.f32.mrb[0].mxu0
    %5412 = vmatprep.mubr.f32.mxu0 0.0
    %v5413 = vand.u32 %v4136, 4294901760
    %5414 = vmatmul.mubr.f32.gmra.mrb[0].mxu0 %v5413
    %v5415 = vpop.f32.mrb[0].mxu0
    %v5416 = vadd.f32 %v5189, %v5415
    %v5417 = vpop.f32.mrb[0].mxu0
    %5418 = vmatprep.mubr.f32.mxu0 0.0
    %v5419 = vand.u32 %v4138, 4294901760
    %5420 = vmatmul.mubr.f32.gmra.mrb[0].mxu0 %v5419
    %v5421 = vpop.f32.mrb[0].mxu0
    %v5422 = vadd.f32 %v5197, %v5421
    %v5423 = vpop.f32.mrb[0].mxu0
    %5424 = vmatprep.mubr.f32.mxu0 0.0
    %v5425 = vand.u32 %v4140, 4294901760
    %5426 = vmatmul.mubr.f32.gmra.mrb[0].mxu0 %v5425
    %v5427 = vpop.f32.mrb[0].mxu0
    %v5428 = vadd.f32 %v5205, %v5427
    %v5429 = vpop.f32.mrb[0].mxu0
    %5430 = vmatprep.mubr.f32.mxu0 0.0
    %v5431 = vand.u32 %v4142, 4294901760
    %5432 = vmatmul.mubr.f32.gmra.mrb[0].mxu0 %v5431
    %v5433 = vpop.f32.mrb[0].mxu0
    %v5434 = vadd.f32 %v5213, %v5433
    %v5435 = vpop.f32.mrb[0].mxu0
    %5436 = vmatprep.mubr.f32.mxu0 0.0
    %v5437 = vand.u32 %v4144, 4294901760
    %5438 = vmatmul.mubr.f32.gmra.mrb[0].mxu0 %v5437
    %v5439 = vpop.f32.mrb[0].mxu0
    %v5440 = vadd.f32 %v5221, %v5439
    %v5441 = vpop.f32.mrb[0].mxu0
    %5442 = vmatprep.mubr.f32.mxu0 0.0
    %v5443 = vand.u32 %v4146, 4294901760
    %5444 = vmatmul.mubr.f32.gmra.mrb[0].mxu0 %v5443
    %v5445 = vpop.f32.mrb[0].mxu0
    %v5446 = vadd.f32 %v5229, %v5445
    %v5447 = vpop.f32.mrb[0].mxu0
    %5448 = vmatprep.mubr.f32.mxu0 0.0
    %v5449 = vand.u32 %v4148, 4294901760
    %5450 = vmatmul.mubr.f32.gmra.mrb[0].mxu0 %v5449
    %v5451 = vpop.f32.mrb[0].mxu0
    %v5452 = vadd.f32 %v5237, %v5451
    %v5453 = vpop.f32.mrb[0].mxu0
    %5454 = vmatprep.mubr.f32.mxu0 0.0
    %v5455 = vand.u32 %v4150, 4294901760
    %5456 = vmatmul.mubr.f32.gmra.mrb[0].mxu0 %v5455
    %v5457 = vpop.f32.mrb[0].mxu0
    %v5458 = vadd.f32 %v5245, %v5457
    %v5459 = vpop.f32.mrb[0].mxu0
    %5460 = vmatprep.mubr.f32.mxu0 0.0
    %v5461 = vand.u32 %v4152, 4294901760
    %5462 = vmatmul.mubr.f32.gmra.mrb[0].mxu0 %v5461
    %v5463 = vpop.f32.mrb[0].mxu0
    %v5464 = vadd.f32 %v5253, %v5463
    %v5465 = vpop.f32.mrb[0].mxu0
    %5466 = vmatprep.mubr.f32.mxu0 0.0
    %v5467 = vand.u32 %v4154, 4294901760
    %5468 = vmatmul.mubr.f32.gmra.mrb[0].mxu0 %v5467
    %v5469 = vpop.f32.mrb[0].mxu0
    %v5470 = vadd.f32 %v5261, %v5469
    %v5471 = vpop.f32.mrb[0].mxu0
    %5472 = vdwg.mxu0
    %5473 = vmatprep.subr.mxu0 0.0
    %v5474 = vand.u32 %v273, 4294901760
    %5475 = vmatpush1.msra.mxu0 %v5474
    %5476 = vmatprep.subr.mxu0 0.0
    %v5477 = vand.u32 %v274, 4294901760
    %5478 = vmatpush1.msra.mxu0 %v5477
    %5479 = vmatprep.subr.mxu0 0.0
    %v5480 = vand.u32 %v275, 4294901760
    %5481 = vmatpush1.msra.mxu0 %v5480
    %5482 = vmatprep.subr.mxu0 0.0
    %v5483 = vand.u32 %v276, 4294901760
    %5484 = vmatpush1.msra.mxu0 %v5483
    %5485 = vmatprep.subr.mxu0 0.0
    %v5486 = vand.u32 %v277, 4294901760
    %5487 = vmatpush1.msra.mxu0 %v5486
    %5488 = vmatprep.subr.mxu0 0.0
    %v5489 = vand.u32 %v278, 4294901760
    %5490 = vmatpush1.msra.mxu0 %v5489
    %5491 = vmatprep.subr.mxu0 0.0
    %v5492 = vand.u32 %v279, 4294901760
    %5493 = vmatpush1.msra.mxu0 %v5492
    %5494 = vmatprep.subr.mxu0 0.0
    %v5495 = vand.u32 %v280, 4294901760
    %5496 = vmatpush1.msra.mxu0 %v5495
    %5497 = vmatprep.subr.mxu0 0.0
    %v5498 = vand.u32 %v281, 4294901760
    %5499 = vmatpush1.msra.mxu0 %v5498
    %5500 = vmatprep.subr.mxu0 0.0
    %v5501 = vand.u32 %v282, 4294901760
    %5502 = vmatpush1.msra.mxu0 %v5501
    %5503 = vmatprep.subr.mxu0 0.0
    %v5504 = vand.u32 %v283, 4294901760
    %5505 = vmatpush1.msra.mxu0 %v5504
    %5506 = vmatprep.subr.mxu0 0.0
    %v5507 = vand.u32 %v284, 4294901760
    %5508 = vmatpush1.msra.mxu0 %v5507
    %5509 = vmatprep.subr.mxu0 0.0
    %v5510 = vand.u32 %v285, 4294901760
    %5511 = vmatpush1.msra.mxu0 %v5510
    %5512 = vmatprep.subr.mxu0 0.0
    %v5513 = vand.u32 %v286, 4294901760
    %5514 = vmatpush1.msra.mxu0 %v5513
    %5515 = vmatprep.subr.mxu0 0.0
    %v5516 = vand.u32 %v287, 4294901760
    %5517 = vmatpush1.msra.mxu0 %v5516
    %5518 = vmatprep.subr.mxu0 0.0
    %v5519 = vand.u32 %v288, 4294901760
    %5520 = vmatpush1.msra.mxu0 %v5519
    %5521 = vmatprep.subr.mxu0 0.0
    %5522 = vmatpush1.msra.mxu0 0.0
    %5523 = vmatprep.subr.mxu0 0.0
    %5524 = vmatpush1.msra.mxu0 0.0
    %5525 = vmatprep.subr.mxu0 0.0
    %5526 = vmatpush1.msra.mxu0 0.0
    %5527 = vmatprep.subr.mxu0 0.0
    %5528 = vmatpush1.msra.mxu0 0.0
    %5529 = vmatprep.subr.mxu0 0.0
    %5530 = vmatpush1.msra.mxu0 0.0
    %5531 = vmatprep.subr.mxu0 0.0
    %5532 = vmatpush1.msra.mxu0 0.0
    %5533 = vmatprep.subr.mxu0 0.0
    %5534 = vmatpush1.msra.mxu0 0.0
    %5535 = vmatprep.subr.mxu0 0.0
    %5536 = vmatpush1.msra.mxu0 0.0
    %5537 = vmatprep.subr.mxu0 0.0
    %5538 = vmatpush1.msra.mxu0 0.0
    %5539 = vmatprep.subr.mxu0 0.0
    %5540 = vmatpush1.msra.mxu0 0.0
    %5541 = vmatprep.subr.mxu0 0.0
    %5542 = vmatpush1.msra.mxu0 0.0
    %5543 = vmatprep.subr.mxu0 0.0
    %5544 = vmatpush1.msra.mxu0 0.0
    %5545 = vmatprep.subr.mxu0 0.0
    %5546 = vmatpush1.msra.mxu0 0.0
    %5547 = vmatprep.subr.mxu0 0.0
    %5548 = vmatpush1.msra.mxu0 0.0
    %5549 = vmatprep.subr.mxu0 0.0
    %5550 = vmatpush1.msra.mxu0 0.0
    %5551 = vmatprep.subr.mxu0 0.0
    %5552 = vmatpush1.msra.mxu0 0.0
    %5553 = vmatprep.mubr.f32.mxu0 0.0
    %v5554 = vand.u32 %v4124, 4294901760
    %5555 = vmatmul.mubr.f32.gmra.mrb[0].mxu0 %v5554
    %v5556 = vpop.f32.mrb[0].mxu0
    %v5557 = vadd.f32 %v5380, %v5556
    %v5558 = vpop.f32.mrb[0].mxu0
    %5559 = vmatprep.mubr.f32.mxu0 0.0
    %v5560 = vand.u32 %v4126, 4294901760
    %5561 = vmatmul.mubr.f32.gmra.mrb[0].mxu0 %v5560
    %v5562 = vpop.f32.mrb[0].mxu0
    %v5563 = vadd.f32 %v5386, %v5562
    %v5564 = vpop.f32.mrb[0].mxu0
    %5565 = vmatprep.mubr.f32.mxu0 0.0
    %v5566 = vand.u32 %v4128, 4294901760
    %5567 = vmatmul.mubr.f32.gmra.mrb[0].mxu0 %v5566
    %v5568 = vpop.f32.mrb[0].mxu0
    %v5569 = vadd.f32 %v5392, %v5568
    %v5570 = vpop.f32.mrb[0].mxu0
    %5571 = vmatprep.mubr.f32.mxu0 0.0
    %v5572 = vand.u32 %v4130, 4294901760
    %5573 = vmatmul.mubr.f32.gmra.mrb[0].mxu0 %v5572
    %v5574 = vpop.f32.mrb[0].mxu0
    %v5575 = vadd.f32 %v5398, %v5574
    %v5576 = vpop.f32.mrb[0].mxu0
    %5577 = vmatprep.mubr.f32.mxu0 0.0
    %v5578 = vand.u32 %v4132, 4294901760
    %5579 = vmatmul.mubr.f32.gmra.mrb[0].mxu0 %v5578
    %v5580 = vpop.f32.mrb[0].mxu0
    %v5581 = vadd.f32 %v5404, %v5580
    %v5582 = vpop.f32.mrb[0].mxu0
    %5583 = vmatprep.mubr.f32.mxu0 0.0
    %v5584 = vand.u32 %v4134, 4294901760
    %5585 = vmatmul.mubr.f32.gmra.mrb[0].mxu0 %v5584
    %v5586 = vpop.f32.mrb[0].mxu0
    %v5587 = vadd.f32 %v5410, %v5586
    %v5588 = vpop.f32.mrb[0].mxu0
    %5589 = vmatprep.mubr.f32.mxu0 0.0
    %v5590 = vand.u32 %v4136, 4294901760
    %5591 = vmatmul.mubr.f32.gmra.mrb[0].mxu0 %v5590
    %v5592 = vpop.f32.mrb[0].mxu0
    %v5593 = vadd.f32 %v5416, %v5592
    %v5594 = vpop.f32.mrb[0].mxu0
    %5595 = vmatprep.mubr.f32.mxu0 0.0
    %v5596 = vand.u32 %v4138, 4294901760
    %5597 = vmatmul.mubr.f32.gmra.mrb[0].mxu0 %v5596
    %v5598 = vpop.f32.mrb[0].mxu0
    %v5599 = vadd.f32 %v5422, %v5598
    %v5600 = vpop.f32.mrb[0].mxu0
    %5601 = vmatprep.mubr.f32.mxu0 0.0
    %v5602 = vand.u32 %v4140, 4294901760
    %5603 = vmatmul.mubr.f32.gmra.mrb[0].mxu0 %v5602
    %v5604 = vpop.f32.mrb[0].mxu0
    %v5605 = vadd.f32 %v5428, %v5604
    %v5606 = vpop.f32.mrb[0].mxu0
    %5607 = vmatprep.mubr.f32.mxu0 0.0
    %v5608 = vand.u32 %v4142, 4294901760
    %5609 = vmatmul.mubr.f32.gmra.mrb[0].mxu0 %v5608
    %v5610 = vpop.f32.mrb[0].mxu0
    %v5611 = vadd.f32 %v5434, %v5610
    %v5612 = vpop.f32.mrb[0].mxu0
    %5613 = vmatprep.mubr.f32.mxu0 0.0
    %v5614 = vand.u32 %v4144, 4294901760
    %5615 = vmatmul.mubr.f32.gmra.mrb[0].mxu0 %v5614
    %v5616 = vpop.f32.mrb[0].mxu0
    %v5617 = vadd.f32 %v5440, %v5616
    %v5618 = vpop.f32.mrb[0].mxu0
    %5619 = vmatprep.mubr.f32.mxu0 0.0
    %v5620 = vand.u32 %v4146, 4294901760
    %5621 = vmatmul.mubr.f32.gmra.mrb[0].mxu0 %v5620
    %v5622 = vpop.f32.mrb[0].mxu0
    %v5623 = vadd.f32 %v5446, %v5622
    %v5624 = vpop.f32.mrb[0].mxu0
    %5625 = vmatprep.mubr.f32.mxu0 0.0
    %v5626 = vand.u32 %v4148, 4294901760
    %5627 = vmatmul.mubr.f32.gmra.mrb[0].mxu0 %v5626
    %v5628 = vpop.f32.mrb[0].mxu0
    %v5629 = vadd.f32 %v5452, %v5628
    %v5630 = vpop.f32.mrb[0].mxu0
    %5631 = vmatprep.mubr.f32.mxu0 0.0
    %v5632 = vand.u32 %v4150, 4294901760
    %5633 = vmatmul.mubr.f32.gmra.mrb[0].mxu0 %v5632
    %v5634 = vpop.f32.mrb[0].mxu0
    %v5635 = vadd.f32 %v5458, %v5634
    %v5636 = vpop.f32.mrb[0].mxu0
    %5637 = vmatprep.mubr.f32.mxu0 0.0
    %v5638 = vand.u32 %v4152, 4294901760
    %5639 = vmatmul.mubr.f32.gmra.mrb[0].mxu0 %v5638
    %v5640 = vpop.f32.mrb[0].mxu0
    %v5641 = vadd.f32 %v5464, %v5640
    %v5642 = vpop.f32.mrb[0].mxu0
    %5643 = vmatprep.mubr.f32.mxu0 0.0
    %v5644 = vand.u32 %v4154, 4294901760
    %5645 = vmatmul.mubr.f32.gmra.mrb[0].mxu0 %v5644
    %v5646 = vpop.f32.mrb[0].mxu0
    %v5647 = vadd.f32 %v5470, %v5646
    %v5648 = vpop.f32.mrb[0].mxu0
    %5649 = vdwg.mxu0
    %v5650 = vadd.f32 %v4348, %v5557
    %v5651 = vadd.f32 %v4349, %v5563
    %v5652 = vadd.f32 %v4350, %v5569
    %v5653 = vadd.f32 %v4351, %v5575
    %v5654 = vadd.f32 %v4352, %v5581
    %v5655 = vadd.f32 %v4353, %v5587
    %v5656 = vadd.f32 %v4354, %v5593
    %v5657 = vadd.f32 %v4355, %v5599
    %v5658 = vadd.f32 %v4356, %v5605
    %v5659 = vadd.f32 %v4357, %v5611
    %v5660 = vadd.f32 %v4358, %v5617
    %v5661 = vadd.f32 %v4359, %v5623
    %v5662 = vadd.f32 %v4360, %v5629
    %v5663 = vadd.f32 %v4361, %v5635
    %v5664 = vadd.f32 %v4362, %v5641
    %v5665 = vadd.f32 %v4363, %v5647
    %5666 = vst [vmem:[#allocation4] sm:$0xff] %v5650
    %5667 = vst [vmem:[#allocation4 + $0x8] sm:$0xff] %v5651
    %5668 = vst [vmem:[#allocation4 + $0x10] sm:$0xff] %v5652
    %5669 = vst [vmem:[#allocation4 + $0x18] sm:$0xff] %v5653
    %5670 = vst [vmem:[#allocation4 + $0x20] sm:$0xff] %v5654
    %5671 = vst [vmem:[#allocation4 + $0x28] sm:$0xff] %v5655
    %5672 = vst [vmem:[#allocation4 + $0x30] sm:$0xff] %v5656
    %5673 = vst [vmem:[#allocation4 + $0x38] sm:$0xff] %v5657
    %5674 = vst [vmem:[#allocation4 + $0x40] sm:$0xff] %v5658
    %5675 = vst [vmem:[#allocation4 + $0x48] sm:$0xff] %v5659
    %5676 = vst [vmem:[#allocation4 + $0x50] sm:$0xff] %v5660
    %5677 = vst [vmem:[#allocation4 + $0x58] sm:$0xff] %v5661
    %5678 = vst [vmem:[#allocation4 + $0x60] sm:$0xff] %v5662
    %5679 = vst [vmem:[#allocation4 + $0x68] sm:$0xff] %v5663
    %5680 = vst [vmem:[#allocation4 + $0x70] sm:$0xff] %v5664
    %5681 = vst [vmem:[#allocation4 + $0x78] sm:$0xff] %v5665
    %5682 = vst.msk [vmem:[#allocation2] sm:$0xff] %vm4235, %v3963
    %5683 = vst.msk [vmem:[#allocation2 + $0x8] sm:$0xff] %vm4235, %v3964
    %5684 = vst.msk [vmem:[#allocation2 + $0x10] sm:$0xff] %vm4235, %v3965
    %5685 = vst.msk [vmem:[#allocation2 + $0x18] sm:$0xff] %vm4235, %v3966
    %5686 = vst.msk [vmem:[#allocation2 + $0x20] sm:$0xff] %vm4235, %v3967
    %5687 = vst.msk [vmem:[#allocation2 + $0x28] sm:$0xff] %vm4235, %v3968
    %5688 = vst.msk [vmem:[#allocation2 + $0x30] sm:$0xff] %vm4235, %v3969
    %5689 = vst.msk [vmem:[#allocation2 + $0x38] sm:$0xff] %vm4235, %v3970
    %5690 = vst.msk [vmem:[#allocation2 + $0x40] sm:$0xff] %vm4235, %v3971
    %5691 = vst.msk [vmem:[#allocation2 + $0x48] sm:$0xff] %vm4235, %v3972
    %5692 = vst.msk [vmem:[#allocation2 + $0x50] sm:$0xff] %vm4235, %v3973
    %5693 = vst.msk [vmem:[#allocation2 + $0x58] sm:$0xff] %vm4235, %v3974
    %5694 = vst.msk [vmem:[#allocation2 + $0x60] sm:$0xff] %vm4235, %v3975
    %5695 = vst.msk [vmem:[#allocation2 + $0x68] sm:$0xff] %vm4235, %v3976
    %5696 = vst.msk [vmem:[#allocation2 + $0x70] sm:$0xff] %vm4235, %v3977
    %5697 = vst.msk [vmem:[#allocation2 + $0x78] sm:$0xff] %vm4235, %v3978
    // Predicated region
    $region34: #{tpu_custom_call.1} parent=1 // pred_check
      %p5698 = pneg %p59
    $region35: #{tpu_custom_call.1} parent=1 // pred_check_branch
      %5700 = sbr.rel (%p5698) target = $region37
    $region36: #{tpu_custom_call.1} parent=1 // pred_region
      %v5701 = vld [vmem:[#allocation4] sm:$0xff]
      %v5702 = vld [vmem:[#allocation4 + $0x8] sm:$0xff]
      %v5703 = vld [vmem:[#allocation4 + $0x10] sm:$0xff]
      %v5704 = vld [vmem:[#allocation4 + $0x18] sm:$0xff]
      %v5705 = vld [vmem:[#allocation4 + $0x20] sm:$0xff]
      %v5706 = vld [vmem:[#allocation4 + $0x28] sm:$0xff]
      %v5707 = vld [vmem:[#allocation4 + $0x30] sm:$0xff]
      %v5708 = vld [vmem:[#allocation4 + $0x38] sm:$0xff]
      %v5709 = vld [vmem:[#allocation4 + $0x40] sm:$0xff]
      %v5710 = vld [vmem:[#allocation4 + $0x48] sm:$0xff]
      %v5711 = vld [vmem:[#allocation4 + $0x50] sm:$0xff]
      %v5712 = vld [vmem:[#allocation4 + $0x58] sm:$0xff]
      %v5713 = vld [vmem:[#allocation4 + $0x60] sm:$0xff]
      %v5714 = vld [vmem:[#allocation4 + $0x68] sm:$0xff]
      %v5715 = vld [vmem:[#allocation4 + $0x70] sm:$0xff]
      %v5716 = vld [vmem:[#allocation4 + $0x78] sm:$0xff]
      %v5717 = vld [vmem:[#allocation3] sm:$0xff]
      %v5718 = vld [vmem:[#allocation3 + $0x8] sm:$0xff]
      %v5719 = vld [vmem:[#allocation3 + $0x10] sm:$0xff]
      %v5720 = vld [vmem:[#allocation3 + $0x18] sm:$0xff]
      %v5721 = vld [vmem:[#allocation3 + $0x20] sm:$0xff]
      %v5722 = vld [vmem:[#allocation3 + $0x28] sm:$0xff]
      %v5723 = vld [vmem:[#allocation3 + $0x30] sm:$0xff]
      %v5724 = vld [vmem:[#allocation3 + $0x38] sm:$0xff]
      %v5725 = vld [vmem:[#allocation3 + $0x40] sm:$0xff]
      %v5726 = vld [vmem:[#allocation3 + $0x48] sm:$0xff]
      %v5727 = vld [vmem:[#allocation3 + $0x50] sm:$0xff]
      %v5728 = vld [vmem:[#allocation3 + $0x58] sm:$0xff]
      %v5729 = vld [vmem:[#allocation3 + $0x60] sm:$0xff]
      %v5730 = vld [vmem:[#allocation3 + $0x68] sm:$0xff]
      %v5731 = vld [vmem:[#allocation3 + $0x70] sm:$0xff]
      %v5732 = vld [vmem:[#allocation3 + $0x78] sm:$0xff]
      %5734 = vset.pattern.permute.xlu0 0
      %5735 = vperm.xlu0 %5734, %v5717
      %v5736 = vpop.permute.xlu0 %5735
      %5739 = vset.pattern.permute.xlu0 0
      %5740 = vperm.xlu0 %5739, %v5718
      %v5741 = vpop.permute.xlu0 %5740
      %5744 = vset.pattern.permute.xlu0 0
      %5745 = vperm.xlu0 %5744, %v5719
      %v5746 = vpop.permute.xlu0 %5745
      %5749 = vset.pattern.permute.xlu0 0
      %5750 = vperm.xlu0 %5749, %v5720
      %v5751 = vpop.permute.xlu0 %5750
      %5754 = vset.pattern.permute.xlu0 0
      %5755 = vperm.xlu0 %5754, %v5721
      %v5756 = vpop.permute.xlu0 %5755
      %5759 = vset.pattern.permute.xlu0 0
      %5760 = vperm.xlu0 %5759, %v5722
      %v5761 = vpop.permute.xlu0 %5760
      %5764 = vset.pattern.permute.xlu0 0
      %5765 = vperm.xlu0 %5764, %v5723
      %v5766 = vpop.permute.xlu0 %5765
      %5769 = vset.pattern.permute.xlu0 0
      %5770 = vperm.xlu0 %5769, %v5724
      %v5771 = vpop.permute.xlu0 %5770
      %5774 = vset.pattern.permute.xlu0 0
      %5775 = vperm.xlu0 %5774, %v5725
      %v5776 = vpop.permute.xlu0 %5775
      %5779 = vset.pattern.permute.xlu0 0
      %5780 = vperm.xlu0 %5779, %v5726
      %v5781 = vpop.permute.xlu0 %5780
      %5784 = vset.pattern.permute.xlu0 0
      %5785 = vperm.xlu0 %5784, %v5727
      %v5786 = vpop.permute.xlu0 %5785
      %5789 = vset.pattern.permute.xlu0 0
      %5790 = vperm.xlu0 %5789, %v5728
      %v5791 = vpop.permute.xlu0 %5790
      %5794 = vset.pattern.permute.xlu0 0
      %5795 = vperm.xlu0 %5794, %v5729
      %v5796 = vpop.permute.xlu0 %5795
      %5799 = vset.pattern.permute.xlu0 0
      %5800 = vperm.xlu0 %5799, %v5730
      %v5801 = vpop.permute.xlu0 %5800
      %5804 = vset.pattern.permute.xlu0 0
      %5805 = vperm.xlu0 %5804, %v5731
      %v5806 = vpop.permute.xlu0 %5805
      %5809 = vset.pattern.permute.xlu0 0
      %5810 = vperm.xlu0 %5809, %v5732
      %v5811 = vpop.permute.xlu0 %5810
      %v5813 = vrcp.pop %v5736
      %v5814 = vmul.f32 %v5701, %v5813
      %v5815 = vrcp.pop %v5741
      %v5816 = vmul.f32 %v5702, %v5815
      %v5817 = vrcp.pop %v5746
      %v5818 = vmul.f32 %v5703, %v5817
      %v5819 = vrcp.pop %v5751
      %v5820 = vmul.f32 %v5704, %v5819
      %v5821 = vrcp.pop %v5756
      %v5822 = vmul.f32 %v5705, %v5821
      %v5823 = vrcp.pop %v5761
      %v5824 = vmul.f32 %v5706, %v5823
      %v5825 = vrcp.pop %v5766
      %v5826 = vmul.f32 %v5707, %v5825
      %v5827 = vrcp.pop %v5771
      %v5828 = vmul.f32 %v5708, %v5827
      %v5829 = vrcp.pop %v5776
      %v5830 = vmul.f32 %v5709, %v5829
      %v5831 = vrcp.pop %v5781
      %v5832 = vmul.f32 %v5710, %v5831
      %v5833 = vrcp.pop %v5786
      %v5834 = vmul.f32 %v5711, %v5833
      %v5835 = vrcp.pop %v5791
      %v5836 = vmul.f32 %v5712, %v5835
      %v5837 = vrcp.pop %v5796
      %v5838 = vmul.f32 %v5713, %v5837
      %v5839 = vrcp.pop %v5801
      %v5840 = vmul.f32 %v5714, %v5839
      %v5841 = vrcp.pop %v5806
      %v5842 = vmul.f32 %v5715, %v5841
      %v5843 = vrcp.pop %v5811
      %v5844 = vmul.f32 %v5716, %v5843
      %5845 = vst [vmem:[#allocation12] sm:$0xff] %v5814
      %5846 = vst [vmem:[#allocation12 + $0x8] sm:$0xff] %v5816
      %5847 = vst [vmem:[#allocation12 + $0x10] sm:$0xff] %v5818
      %5848 = vst [vmem:[#allocation12 + $0x18] sm:$0xff] %v5820
      %5849 = vst [vmem:[#allocation12 + $0x20] sm:$0xff] %v5822
      %5850 = vst [vmem:[#allocation12 + $0x28] sm:$0xff] %v5824
      %5851 = vst [vmem:[#allocation12 + $0x30] sm:$0xff] %v5826
      %5852 = vst [vmem:[#allocation12 + $0x38] sm:$0xff] %v5828
      %5853 = vst [vmem:[#allocation12 + $0x40] sm:$0xff] %v5830
      %5854 = vst [vmem:[#allocation12 + $0x48] sm:$0xff] %v5832
      %5855 = vst [vmem:[#allocation12 + $0x50] sm:$0xff] %v5834
      %5856 = vst [vmem:[#allocation12 + $0x58] sm:$0xff] %v5836
      %5857 = vst [vmem:[#allocation12 + $0x60] sm:$0xff] %v5838
      %5858 = vst [vmem:[#allocation12 + $0x68] sm:$0xff] %v5840
      %5859 = vst [vmem:[#allocation12 + $0x70] sm:$0xff] %v5842
      %5860 = vst [vmem:[#allocation12 + $0x78] sm:$0xff] %v5844
    $region37: #{tpu_custom_call.1} parent=1 // pred_fallthru
      _
    // Predicated region
    $region38: #{tpu_custom_call.1} parent=1 // pred_check
      _
    $region39: #{tpu_custom_call.1} parent=1 // pred_check_branch
      %5862 = sbr.rel (0) target = $region41
    $region40: #{tpu_custom_call.1} parent=1 // pred_region
      %s5864 = ssub.s32 2048, 2048
      %5865 = vsyncadd [#allocation8], %s5864
      %s5866 = sshll.u32 [#allocation12], 4
      %s5867 = int_to_ptr.vmem [resolvable:$true] %s5866
      %5872 = dma.vmem_to_hbm [thread:$0]  %s5867, 2048, %s4, [#allocation8], 128, 128, 8
    $region41: #{tpu_custom_call.1} parent=1 // pred_fallthru
      _
    // Predicated region
    $region42: #{tpu_custom_call.1} parent=1 // pred_check
      _
    $region43: #{tpu_custom_call.1} parent=1 // pred_check_branch
      %5874 = sbr.rel (0) target = $region45
    $region44: #{tpu_custom_call.1} parent=1 // pred_region
      %5875 = dma.done [#allocation8], 2048
    $region45: #{tpu_custom_call.1} parent=1 // pred_fallthru
      _
    %5876 = vsyncpa [#allocation7], 1
    %5877 = vsyncpa [#allocation10], 1
    %5878 = vsyncpa [#allocation8], 1

</llo_original>
